<compile_context>
chip_gen: v7x
topology: tpu7x:2x2x1
jax: 0.10.0
libtpu: 0.0.40
codegen_flags: <defaults>
</compile_context>

<pallas_src>
import math

import jax
import jax.numpy as jnp
from jax import lax
from jax.experimental import pallas as pl
from jax.experimental.pallas import tpu as pltpu

# ------------------------------- config --------------------------------------
B, T = 2, 16
DIM_MODEL = 32                    # dim_model
DIM_EXPAND = 32                   # dim_expand (== dim_model -> conv_res Identity)
FF_RATIO = 4
DIM_FF = DIM_MODEL * FF_RATIO     # 128
NUM_HEADS = 4
DIM_HEAD = DIM_MODEL // NUM_HEADS
KERNEL_SIZE = 3                   # depthwise conv kernel size (odd, 'same' padding)
LN_EPS = 1e-5
BN_EPS = 1e-5

# MXU operand dtype (accumulation is always f32). bf16 = fast MXU path on v6e/v7x.
# Per-generation note: on v5e prefer jnp.float32 (MXU idle at these shapes; avoids
# VPU pack/cast work and matches the f32 PyTorch reference bit-for-bit closer).
MXU_DTYPE = jnp.bfloat16
ATT_DTYPE = jnp.bfloat16          # dtype of the emitted attention probabilities

# ---------------- packed per-channel parameter rows (width = DIM_MODEL) -------
_VEC_ROWS = (
    "ff1_ln_g", "ff1_ln_b", "ff1_b2",
    "att_ln_g", "att_ln_b", "att_bo",
    "conv_ln_g", "conv_ln_b", "bn_scale", "bn_shift", "conv_b_pw2",
    "dw_w0", "dw_w1", "dw_w2",
    "ff2_ln_g", "ff2_ln_b", "ff2_b2",
    "norm_g", "norm_b",
)
_RI = {name: i for i, name in enumerate(_VEC_ROWS)}
N_VEC = len(_VEC_ROWS)            # 19

# wide packed rows (width = WIDE_W = max(DIM_FF, 3*DIM_MODEL, 2*DIM_EXPAND))
_W_FF1_B1, _W_FF2_B1, _W_CONV_B_PW1, _W_QKV_B = 0, 1, 2, 3
WIDE_W = max(DIM_FF, 3 * DIM_MODEL, 2 * DIM_EXPAND)   # 128


# ---------------------------- in-kernel helpers --------------------------------

def _row(vecs, name):
    i = _RI[name]
    return vecs[i:i + 1, :]                                   # (1, D), static slice


def _mm(a, w):
    """2-D matmul on the MXU: activations cast to MXU_DTYPE, weights pre-cast."""
    return jnp.dot(a.astype(MXU_DTYPE), w, preferred_element_type=jnp.float32)


def _bmm(eq, a, b):
    """Batched matmul on the MXU (single leading batch dim), f32 accumulation."""
    return jnp.einsum(eq, a.astype(MXU_DTYPE), b.astype(MXU_DTYPE),
                      preferred_element_type=jnp.float32)


def _layernorm(x, g, b):
    mu = jnp.mean(x, axis=-1, keepdims=True)
    var = jnp.mean(jnp.square(x - mu), axis=-1, keepdims=True)
    return (x - mu) * lax.rsqrt(var + LN_EPS) * g + b


def _ff(x, g, b, w1, b1, w2, b2):
    """FeedForwardModule fused with the half-residual: x + 1/2 * ff(x)."""
    xn = _layernorm(x, g, b)
    h = _mm(xn, w1) + b1
    h = h * jax.nn.sigmoid(h)                                 # Swish
    return x + 0.5 * (_mm(h, w2) + b2)


# ------------------------------ fused kernel -----------------------------------

def _make_kernel(bc: int, t: int, emit_att: bool):
    """Build the fused kernel for a (bc, t, D) batch chunk processed as (bc*t, D)."""
    bct = bc * t
    D, E, H, dh = DIM_MODEL, DIM_EXPAND, NUM_HEADS, DIM_HEAD

    def kernel(x_ref, vecs_ref, wide_ref,
               ff1_w1_ref, ff1_w2_ref, wqkv_ref, wo_ref,
               cv_w1_ref, cv_w2_ref, ff2_w1_ref, ff2_w2_ref,
               *out_refs):
        o_ref = out_refs[0]
        V = vecs_ref[...]                                     # (N_VEC, D) f32
        W = wide_ref[...]                                     # (4, WIDE_W) f32

        x = x_ref[...]                                        # (bct, D) f32

        # ---- ff_module1: x = x + 1/2 * ff(x) ---------------------------------
        x = _ff(x, _row(V, "ff1_ln_g"), _row(V, "ff1_ln_b"),
                ff1_w1_ref[...], W[_W_FF1_B1:_W_FF1_B1 + 1, :DIM_FF],
                ff1_w2_ref[...], _row(V, "ff1_b2"))

        # ---- self-attention module (plain MHA; rel-pos-enc is a TODO) --------
        xn = _layernorm(x, _row(V, "att_ln_g"), _row(V, "att_ln_b"))
        # one wide (bct, D) x (D, 3D) matmul; 1/sqrt(dh) already folded into wq/bq
        qkv = _mm(xn, wqkv_ref[...]) + W[_W_QKV_B:_W_QKV_B + 1, :3 * D]

        def split_heads(col0):
            # (bct, 3D) -> (bc*H, t, dh); heads split exactly once.
            return jnp.stack(
                [qkv[b * t:(b + 1) * t, col0 + h * dh: col0 + (h + 1) * dh]
                 for b in range(bc) for h in range(H)], axis=0)

        qg = split_heads(0)                                   # (G, t, dh)
        kg = split_heads(D)
        vg = split_heads(2 * D)

        s = _bmm("gqd,gkd->gqk", qg, kg)                      # (G, t, t) f32
        s = s - jnp.max(s, axis=-1, keepdims=True)
        e = jnp.exp(s)
        p = e * pl.reciprocal(jnp.sum(e, axis=-1, keepdims=True), approx=True)

        if emit_att:
            out_refs[1][...] = p.reshape(bc, H, t, t).astype(ATT_DTYPE)

        o = _bmm("gqk,gkd->gqd", p, vg)                       # (G, t, dh) f32
        # merge heads exactly once -> (bct, D), then one K=D out-projection
        y = jnp.concatenate(
            [jnp.concatenate([o[b * H + h] for h in range(H)], axis=-1)
             for b in range(bc)], axis=0)
        x = x + _mm(y, wo_ref[...]) + _row(V, "att_bo")       # att_res(x) = x

        # ---- convolution module ----------------------------------------------
        xn = _layernorm(x, _row(V, "conv_ln_g"), _row(V, "conv_ln_b"))
        h = _mm(xn, cv_w1_ref[...]) + W[_W_CONV_B_PW1:_W_CONV_B_PW1 + 1, :2 * E]
        h = h[:, :E] * jax.nn.sigmoid(h[:, E:])               # GLU(dim=-1)

        # depthwise conv1d (k=3, stride=1, zero 'same' padding) on the flat
        # (bc*t, E) buffer: row-rotate (XLU) + batch-boundary masks.
        row_t = lax.broadcasted_iota(jnp.int32, (bct, E), 0) % t
        prev = jnp.where(row_t == 0, 0.0, pltpu.roll(h, 1, 0))          # h[r-1]
        nxt = jnp.where(row_t == t - 1, 0.0, pltpu.roll(h, bct - 1, 0))  # h[r+1]
        h = (prev * _row(V, "dw_w0")
             + h * _row(V, "dw_w1")
             + nxt * _row(V, "dw_w2"))

        # BatchNorm1d (eval) folded to scale/shift (depthwise bias folded in)
        h = h * _row(V, "bn_scale") + _row(V, "bn_shift")
        h = h * jax.nn.sigmoid(h)                             # Swish
        x = x + _mm(h, cv_w2_ref[...]) + _row(V, "conv_b_pw2")  # conv_res(x) = x

        # ---- ff_module2 + final LayerNorm -------------------------------------
        x = _ff(x, _row(V, "ff2_ln_g"), _row(V, "ff2_ln_b"),
                ff2_w1_ref[...], W[_W_FF2_B1:_W_FF2_B1 + 1, :DIM_FF],
                ff2_w2_ref[...], _row(V, "ff2_b2"))
        o_ref[...] = _layernorm(x, _row(V, "norm_g"), _row(V, "norm_b"))

    return kernel


# ------------------------------ wrapper ----------------------------------------

def _rep_spec(a):
    nd = a.ndim
    return pl.BlockSpec(a.shape, lambda i, _nd=nd: (0,) * _nd)


def conformer_block(x, packed, mask=None, hidden=None, *,
                    return_attention=True, batch_chunk=None):
    """ConformerBlock.forward (eval mode), one fused pallas_call.

    batch_chunk=None folds the whole batch into a single grid step (best at small
    B/T on v5e/v6e); set batch_chunk=B//2 on v7x with larger B to use both TCs.
    """
    # TODO(synk): mask / streaming hidden / relative positional encoding not implemented.
    b, t, d = x.shape
    assert d == DIM_MODEL
    bc = b if batch_chunk is None else batch_chunk
    assert b % bc == 0
    nsteps = b // bc
    bct = bc * t

    x2 = x.reshape(b * t, d)                                  # lane-dense (B*T, D) view
    weights = (packed["vecs"], packed["wide"],
               packed["ff1_w1"], packed["ff1_w2"], packed["wqkv"], packed["wo"],
               packed["cv_w1"], packed["cv_w2"], packed["ff2_w1"], packed["ff2_w2"])

    out_shapes = [jax.ShapeDtypeStruct((b * t, DIM_EXPAND), jnp.float32)]
    out_specs = [pl.BlockSpec((bct, DIM_EXPAND), lambda i: (i, 0))]
    if return_attention:
        out_shapes.append(jax.ShapeDtypeStruct((b, NUM_HEADS, t, t), ATT_DTYPE))
        out_specs.append(pl.BlockSpec((bc, NUM_HEADS, t, t), lambda i: (i, 0, 0, 0)))

    results = pl.pallas_call(
        _make_kernel(bc, t, return_attention),
        out_shape=tuple(out_shapes),
        grid=(nsteps,),
        in_specs=[pl.BlockSpec((bct, d), lambda i: (i, 0))]
                 + [_rep_spec(w) for w in weights],
        out_specs=tuple(out_specs),
        compiler_params=pltpu.CompilerParams(
            dimension_semantics=("parallel",)),   # batch chunks shard across TCs on v7x
    )(x2, *weights)

    out = results[0].reshape(b, t, DIM_EXPAND)
    att = results[1] if return_attention else None
    return out, att, hidden                       # hidden stays None (no streaming)


# ------------------------------ parameters -------------------------------------

def _dense(key, fan_in, fan_out):
    return jax.random.normal(key, (fan_in, fan_out), jnp.float32) / math.sqrt(fan_in)


def init_params(key):
    """'Natural' PyTorch-like parameters (eval mode)."""
    D, E, F = DIM_MODEL, DIM_EXPAND, DIM_FF
    ks = jax.random.split(key, 12)
    ones = lambda n: jnp.ones((n,), jnp.float32)
    zeros = lambda n: jnp.zeros((n,), jnp.float32)
    return {
        "ff1": dict(ln_g=ones(D), ln_b=zeros(D),
                    w1=_dense(ks[0], D, F), b1=zeros(F),
                    w2=_dense(ks[1], F, D), b2=zeros(D)),
        "att": dict(ln_g=ones(D), ln_b=zeros(D),
                    wq=_dense(ks[2], D, D), bq=zeros(D),
                    wk=_dense(ks[3], D, D), bk=zeros(D),
                    wv=_dense(ks[4], D, D), bv=zeros(D),
                    wo=_dense(ks[5], D, D), bo=zeros(D)),
        "conv": dict(ln_g=ones(D), ln_b=zeros(D),
                     w_pw1=_dense(ks[6], D, 2 * E), b_pw1=zeros(2 * E),
                     # depthwise weight stored as (K, E): w_dw[k, c] == torch_w[c, 0, k]
                     w_dw=jax.random.normal(ks[7], (KERNEL_SIZE, E), jnp.float32)
                          / math.sqrt(KERNEL_SIZE),
                     b_dw=zeros(E),
                     bn_g=ones(E), bn_b=zeros(E), bn_m=zeros(E), bn_v=ones(E),
                     w_pw2=_dense(ks[8], E, E), b_pw2=zeros(E)),
        "ff2": dict(ln_g=ones(E), ln_b=zeros(E),
                    w1=_dense(ks[9], E, F), b1=zeros(F),
                    w2=_dense(ks[10], F, E), b2=zeros(E)),
        "norm": dict(g=ones(E), b=zeros(E)),
    }


def pack_params(p):
    """Pack / pre-fold / pre-cast parameters for the fused kernel (plain JAX)."""
    D, E, F = DIM_MODEL, DIM_EXPAND, DIM_FF
    c = p["conv"]
    # fold BatchNorm (eval) + depthwise bias into a single scale/shift pair
    bn_scale = c["bn_g"] * lax.rsqrt(c["bn_v"] + BN_EPS)
    bn_shift = (c["b_dw"] - c["bn_m"]) * bn_scale + c["bn_b"]
    rows = {
        "ff1_ln_g": p["ff1"]["ln_g"], "ff1_ln_b": p["ff1"]["ln_b"], "ff1_b2": p["ff1"]["b2"],
        "att_ln_g": p["att"]["ln_g"], "att_ln_b": p["att"]["ln_b"], "att_bo": p["att"]["bo"],
        "conv_ln_g": c["ln_g"], "conv_ln_b": c["ln_b"],
        "bn_scale": bn_scale, "bn_shift": bn_shift, "conv_b_pw2": c["b_pw2"],
        "dw_w0": c["w_dw"][0], "dw_w1": c["w_dw"][1], "dw_w2": c["w_dw"][2],
        "ff2_ln_g": p["ff2"]["ln_g"], "ff2_ln_b": p["ff2"]["ln_b"], "ff2_b2": p["ff2"]["b2"],
        "norm_g": p["norm"]["g"], "norm_b": p["norm"]["b"],
    }
    vecs = jnp.stack([rows[name] for name in _VEC_ROWS], axis=0)          # (19, D)

    inv = 1.0 / math.sqrt(DIM_HEAD)
    # fold the attention score scale into wq / bq at pack time
    qkv_bias = jnp.concatenate([p["att"]["bq"] * inv, p["att"]["bk"], p["att"]["bv"]])
    wqkv = jnp.concatenate([p["att"]["wq"] * inv, p["att"]["wk"], p["att"]["wv"]], axis=1)

    def wrow(v):
        pad = WIDE_W - v.shape[0]
        return jnp.concatenate([v, jnp.zeros((pad,), jnp.float32)]) if pad else v

    wide = jnp.stack([wrow(p["ff1"]["b1"]), wrow(p["ff2"]["b1"]),
                      wrow(c["b_pw1"]), wrow(qkv_bias)], axis=0)          # (4, WIDE_W)

    cast = lambda w: w.astype(MXU_DTYPE)   # pre-cast weights once (halves weight DMA)
    return dict(vecs=vecs, wide=wide,
                ff1_w1=cast(p["ff1"]["w1"]), ff1_w2=cast(p["ff1"]["w2"]),
                wqkv=cast(wqkv), wo=cast(p["att"]["wo"]),
                cv_w1=cast(c["w_pw1"]), cv_w2=cast(c["w_pw2"]),
                ff2_w1=cast(p["ff2"]["w1"]), ff2_w2=cast(p["ff2"]["w2"]))


# ----------------------------------- main --------------------------------------

if __name__ == "__main__":
    key = jax.random.PRNGKey(0)
    kx, kp = jax.random.split(key)
    x = jax.random.normal(kx, (B, T, DIM_MODEL), dtype=jnp.float32)
    packed = pack_params(init_params(kp))

    y, attention, hidden = conformer_block(x, packed)
    jax.block_until_ready((y, attention))

    assert y.shape == (B, T, DIM_EXPAND), y.shape
    assert attention.shape == (B, NUM_HEADS, T, T), attention.shape
    assert hidden is None
    assert bool(jnp.all(jnp.isfinite(y)))
    assert bool(jnp.all(jnp.isfinite(attention.astype(jnp.float32))))
    print("KERNEL_OK")
</pallas_src>

<mosaic_0001>
module attributes {stable_mosaic.version = 11 : i64} {
  func.func @kernel(%arg0: i32, %arg1: memref<32x32xf32, #tpu.memory_space<vmem>>, %arg2: memref<19x32xf32, #tpu.memory_space<vmem>>, %arg3: memref<4x128xf32, #tpu.memory_space<vmem>>, %arg4: memref<32x128xbf16, #tpu.memory_space<vmem>>, %arg5: memref<128x32xbf16, #tpu.memory_space<vmem>>, %arg6: memref<32x96xbf16, #tpu.memory_space<vmem>>, %arg7: memref<32x32xbf16, #tpu.memory_space<vmem>>, %arg8: memref<32x64xbf16, #tpu.memory_space<vmem>>, %arg9: memref<32x32xbf16, #tpu.memory_space<vmem>>, %arg10: memref<32x128xbf16, #tpu.memory_space<vmem>>, %arg11: memref<128x32xbf16, #tpu.memory_space<vmem>>, %arg12: memref<32x32xf32, #tpu.memory_space<vmem>>, %arg13: memref<2x4x16x16xbf16, #tpu.memory_space<vmem>>) attributes {dimension_semantics = [#tpu.dimension_semantics<parallel>], iteration_bounds = array<i64: 1>, scalar_prefetch = 0 : i64, scratch_operands = 0 : i64, tpu.core_type = #tpu.core_type<tc>, window_params = [{transform_indices = @transform_0, window_bounds = array<i64: 32, 32>}, {pipeline_mode = #tpu.pipeline_mode<synchronous>, transform_indices = @transform_1, window_bounds = array<i64: 19, 32>}, {pipeline_mode = #tpu.pipeline_mode<synchronous>, transform_indices = @transform_2, window_bounds = array<i64: 4, 128>}, {pipeline_mode = #tpu.pipeline_mode<synchronous>, transform_indices = @transform_3, window_bounds = array<i64: 32, 128>}, {pipeline_mode = #tpu.pipeline_mode<synchronous>, transform_indices = @transform_4, window_bounds = array<i64: 128, 32>}, {pipeline_mode = #tpu.pipeline_mode<synchronous>, transform_indices = @transform_5, window_bounds = array<i64: 32, 96>}, {pipeline_mode = #tpu.pipeline_mode<synchronous>, transform_indices = @transform_6, window_bounds = array<i64: 32, 32>}, {pipeline_mode = #tpu.pipeline_mode<synchronous>, transform_indices = @transform_7, window_bounds = array<i64: 32, 64>}, {pipeline_mode = #tpu.pipeline_mode<synchronous>, transform_indices = @transform_8, window_bounds = array<i64: 32, 32>}, {pipeline_mode = #tpu.pipeline_mode<synchronous>, transform_indices = @transform_9, window_bounds = array<i64: 32, 128>}, {pipeline_mode = #tpu.pipeline_mode<synchronous>, transform_indices = @transform_10, window_bounds = array<i64: 128, 32>}, {transform_indices = @transform_11, window_bounds = array<i64: 32, 32>}, {transform_indices = @transform_12, window_bounds = array<i64: 2, 4, 16, 16>}]} {
    %c0 = arith.constant 0 : index
    %c0_0 = arith.constant 0 : index
    %0 = vector.load %arg2[%c0, %c0_0] : memref<19x32xf32, #tpu.memory_space<vmem>>, vector<19x32xf32>
    %c0_1 = arith.constant 0 : index
    %c0_2 = arith.constant 0 : index
    %1 = vector.load %arg3[%c0_1, %c0_2] : memref<4x128xf32, #tpu.memory_space<vmem>>, vector<4x128xf32>
    %c0_3 = arith.constant 0 : index
    %c0_4 = arith.constant 0 : index
    %2 = vector.load %arg1[%c0_3, %c0_4] : memref<32x32xf32, #tpu.memory_space<vmem>>, vector<32x32xf32>
    %3 = vector.extract_strided_slice %0 {offsets = [0, 0], sizes = [1, 32], strides = [1, 1]} : vector<19x32xf32> to vector<1x32xf32>
    %4 = vector.extract_strided_slice %0 {offsets = [1, 0], sizes = [1, 32], strides = [1, 1]} : vector<19x32xf32> to vector<1x32xf32>
    %c0_5 = arith.constant 0 : index
    %c0_6 = arith.constant 0 : index
    %5 = vector.load %arg4[%c0_5, %c0_6] : memref<32x128xbf16, #tpu.memory_space<vmem>>, vector<32x128xbf16>
    %6 = vector.extract_strided_slice %1 {offsets = [0, 0], sizes = [1, 128], strides = [1, 1]} : vector<4x128xf32> to vector<1x128xf32>
    %c0_7 = arith.constant 0 : index
    %c0_8 = arith.constant 0 : index
    %7 = vector.load %arg5[%c0_7, %c0_8] : memref<128x32xbf16, #tpu.memory_space<vmem>>, vector<128x32xbf16>
    %8 = vector.extract_strided_slice %0 {offsets = [2, 0], sizes = [1, 32], strides = [1, 1]} : vector<19x32xf32> to vector<1x32xf32>
    %cst = arith.constant dense<0.000000e+00> : vector<32xf32>
    %9 = vector.multi_reduction <add>, %2, %cst [1] : vector<32x32xf32> to vector<32xf32>
    %10 = vector.shape_cast %9 : vector<32xf32> to vector<32x1xf32>
    %cst_9 = arith.constant 3.200000e+01 : f32
    %11 = vector.broadcast %cst_9 : f32 to vector<32x1xf32>
    %12 = arith.divf %10, %11 : vector<32x1xf32>
    %13 = vector.broadcast %12 : vector<32x1xf32> to vector<32x32xf32>
    %14 = arith.subf %2, %13 : vector<32x32xf32>
    %15 = arith.mulf %14, %14 : vector<32x32xf32>
    %cst_10 = arith.constant dense<0.000000e+00> : vector<32xf32>
    %16 = vector.multi_reduction <add>, %15, %cst_10 [1] : vector<32x32xf32> to vector<32xf32>
    %17 = vector.shape_cast %16 : vector<32xf32> to vector<32x1xf32>
    %cst_11 = arith.constant 3.200000e+01 : f32
    %18 = vector.broadcast %cst_11 : f32 to vector<32x1xf32>
    %19 = arith.divf %17, %18 : vector<32x1xf32>
    %20 = vector.broadcast %12 : vector<32x1xf32> to vector<32x32xf32>
    %21 = arith.subf %2, %20 : vector<32x32xf32>
    %cst_12 = arith.constant 9.99999974E-6 : f32
    %22 = vector.broadcast %cst_12 : f32 to vector<32x1xf32>
    %23 = arith.addf %19, %22 : vector<32x1xf32>
    %24 = math.rsqrt %23 : vector<32x1xf32>
    %25 = vector.broadcast %24 : vector<32x1xf32> to vector<32x32xf32>
    %26 = arith.mulf %21, %25 : vector<32x32xf32>
    %27 = vector.broadcast %3 : vector<1x32xf32> to vector<32x32xf32>
    %28 = arith.mulf %26, %27 : vector<32x32xf32>
    %29 = vector.broadcast %4 : vector<1x32xf32> to vector<32x32xf32>
    %30 = arith.addf %28, %29 : vector<32x32xf32>
    %31 = arith.truncf %30 : vector<32x32xf32> to vector<32x32xbf16>
    %cst_13 = arith.constant dense<0.000000e+00> : vector<32x128xf32>
    %32 = tpu.matmul %31, %5, %cst_13 {dimension_numbers = #tpu.dot_dimension_numbers<[1], [0], [0], [1], [0, 0, 1, 1], [], []>} : vector<32x32xbf16>, vector<32x128xbf16>, vector<32x128xf32> -> vector<32x128xf32>
    %33 = vector.broadcast %6 : vector<1x128xf32> to vector<32x128xf32>
    %34 = arith.addf %32, %33 : vector<32x128xf32>
    %35 = arith.negf %34 : vector<32x128xf32>
    %36 = math.exp %35 : vector<32x128xf32>
    %cst_14 = arith.constant 1.000000e+00 : f32
    %37 = vector.broadcast %cst_14 : f32 to vector<32x128xf32>
    %38 = arith.addf %37, %36 : vector<32x128xf32>
    %39 = arith.divf %37, %38 : vector<32x128xf32>
    %40 = arith.mulf %34, %39 : vector<32x128xf32>
    %41 = arith.truncf %40 : vector<32x128xf32> to vector<32x128xbf16>
    %cst_15 = arith.constant dense<0.000000e+00> : vector<32x32xf32>
    %42 = tpu.matmul %41, %7, %cst_15 {dimension_numbers = #tpu.dot_dimension_numbers<[1], [0], [0], [1], [0, 0, 1, 1], [], []>} : vector<32x128xbf16>, vector<128x32xbf16>, vector<32x32xf32> -> vector<32x32xf32>
    %43 = vector.broadcast %8 : vector<1x32xf32> to vector<32x32xf32>
    %44 = arith.addf %42, %43 : vector<32x32xf32>
    %cst_16 = arith.constant 5.000000e-01 : f32
    %45 = vector.broadcast %cst_16 : f32 to vector<32x32xf32>
    %46 = arith.mulf %45, %44 : vector<32x32xf32>
    %47 = arith.addf %2, %46 : vector<32x32xf32>
    %48 = vector.extract_strided_slice %0 {offsets = [3, 0], sizes = [1, 32], strides = [1, 1]} : vector<19x32xf32> to vector<1x32xf32>
    %49 = vector.extract_strided_slice %0 {offsets = [4, 0], sizes = [1, 32], strides = [1, 1]} : vector<19x32xf32> to vector<1x32xf32>
    %cst_17 = arith.constant dense<0.000000e+00> : vector<32xf32>
    %50 = vector.multi_reduction <add>, %47, %cst_17 [1] : vector<32x32xf32> to vector<32xf32>
    %51 = vector.shape_cast %50 : vector<32xf32> to vector<32x1xf32>
    %cst_18 = arith.constant 3.200000e+01 : f32
    %52 = vector.broadcast %cst_18 : f32 to vector<32x1xf32>
    %53 = arith.divf %51, %52 : vector<32x1xf32>
    %54 = vector.broadcast %53 : vector<32x1xf32> to vector<32x32xf32>
    %55 = arith.subf %47, %54 : vector<32x32xf32>
    %56 = arith.mulf %55, %55 : vector<32x32xf32>
    %cst_19 = arith.constant dense<0.000000e+00> : vector<32xf32>
    %57 = vector.multi_reduction <add>, %56, %cst_19 [1] : vector<32x32xf32> to vector<32xf32>
    %58 = vector.shape_cast %57 : vector<32xf32> to vector<32x1xf32>
    %cst_20 = arith.constant 3.200000e+01 : f32
    %59 = vector.broadcast %cst_20 : f32 to vector<32x1xf32>
    %60 = arith.divf %58, %59 : vector<32x1xf32>
    %61 = vector.broadcast %53 : vector<32x1xf32> to vector<32x32xf32>
    %62 = arith.subf %47, %61 : vector<32x32xf32>
    %cst_21 = arith.constant 9.99999974E-6 : f32
    %63 = vector.broadcast %cst_21 : f32 to vector<32x1xf32>
    %64 = arith.addf %60, %63 : vector<32x1xf32>
    %65 = math.rsqrt %64 : vector<32x1xf32>
    %66 = vector.broadcast %65 : vector<32x1xf32> to vector<32x32xf32>
    %67 = arith.mulf %62, %66 : vector<32x32xf32>
    %68 = vector.broadcast %48 : vector<1x32xf32> to vector<32x32xf32>
    %69 = arith.mulf %67, %68 : vector<32x32xf32>
    %70 = vector.broadcast %49 : vector<1x32xf32> to vector<32x32xf32>
    %71 = arith.addf %69, %70 : vector<32x32xf32>
    %c0_22 = arith.constant 0 : index
    %c0_23 = arith.constant 0 : index
    %72 = vector.load %arg6[%c0_22, %c0_23] : memref<32x96xbf16, #tpu.memory_space<vmem>>, vector<32x96xbf16>
    %73 = arith.truncf %71 : vector<32x32xf32> to vector<32x32xbf16>
    %cst_24 = arith.constant dense<0.000000e+00> : vector<32x96xf32>
    %74 = tpu.matmul %73, %72, %cst_24 {dimension_numbers = #tpu.dot_dimension_numbers<[1], [0], [0], [1], [0, 0, 1, 1], [], []>} : vector<32x32xbf16>, vector<32x96xbf16>, vector<32x96xf32> -> vector<32x96xf32>
    %75 = vector.extract_strided_slice %1 {offsets = [3, 0], sizes = [1, 96], strides = [1, 1]} : vector<4x128xf32> to vector<1x96xf32>
    %76 = vector.broadcast %75 : vector<1x96xf32> to vector<32x96xf32>
    %77 = arith.addf %74, %76 : vector<32x96xf32>
    %78 = vector.extract_strided_slice %77 {offsets = [0, 0], sizes = [16, 8], strides = [1, 1]} : vector<32x96xf32> to vector<16x8xf32>
    %79 = vector.extract_strided_slice %77 {offsets = [0, 8], sizes = [16, 8], strides = [1, 1]} : vector<32x96xf32> to vector<16x8xf32>
    %80 = vector.extract_strided_slice %77 {offsets = [0, 16], sizes = [16, 8], strides = [1, 1]} : vector<32x96xf32> to vector<16x8xf32>
    %81 = vector.extract_strided_slice %77 {offsets = [0, 24], sizes = [16, 8], strides = [1, 1]} : vector<32x96xf32> to vector<16x8xf32>
    %82 = vector.extract_strided_slice %77 {offsets = [16, 0], sizes = [16, 8], strides = [1, 1]} : vector<32x96xf32> to vector<16x8xf32>
    %83 = vector.extract_strided_slice %77 {offsets = [16, 8], sizes = [16, 8], strides = [1, 1]} : vector<32x96xf32> to vector<16x8xf32>
    %84 = vector.extract_strided_slice %77 {offsets = [16, 16], sizes = [16, 8], strides = [1, 1]} : vector<32x96xf32> to vector<16x8xf32>
    %85 = vector.extract_strided_slice %77 {offsets = [16, 24], sizes = [16, 8], strides = [1, 1]} : vector<32x96xf32> to vector<16x8xf32>
    %86 = vector.shape_cast %78 : vector<16x8xf32> to vector<1x16x8xf32>
    %87 = vector.shape_cast %79 : vector<16x8xf32> to vector<1x16x8xf32>
    %88 = vector.shape_cast %80 : vector<16x8xf32> to vector<1x16x8xf32>
    %89 = vector.shape_cast %81 : vector<16x8xf32> to vector<1x16x8xf32>
    %90 = vector.shape_cast %82 : vector<16x8xf32> to vector<1x16x8xf32>
    %91 = vector.shape_cast %83 : vector<16x8xf32> to vector<1x16x8xf32>
    %92 = vector.shape_cast %84 : vector<16x8xf32> to vector<1x16x8xf32>
    %93 = vector.shape_cast %85 : vector<16x8xf32> to vector<1x16x8xf32>
    %94 = tpu.concatenate %86, %87, %88, %89, %90, %91, %92, %93 in 0 : vector<1x16x8xf32>, vector<1x16x8xf32>, vector<1x16x8xf32>, vector<1x16x8xf32>, vector<1x16x8xf32>, vector<1x16x8xf32>, vector<1x16x8xf32>, vector<1x16x8xf32> -> vector<8x16x8xf32>
    %95 = vector.extract_strided_slice %77 {offsets = [0, 32], sizes = [16, 8], strides = [1, 1]} : vector<32x96xf32> to vector<16x8xf32>
    %96 = vector.extract_strided_slice %77 {offsets = [0, 40], sizes = [16, 8], strides = [1, 1]} : vector<32x96xf32> to vector<16x8xf32>
    %97 = vector.extract_strided_slice %77 {offsets = [0, 48], sizes = [16, 8], strides = [1, 1]} : vector<32x96xf32> to vector<16x8xf32>
    %98 = vector.extract_strided_slice %77 {offsets = [0, 56], sizes = [16, 8], strides = [1, 1]} : vector<32x96xf32> to vector<16x8xf32>
    %99 = vector.extract_strided_slice %77 {offsets = [16, 32], sizes = [16, 8], strides = [1, 1]} : vector<32x96xf32> to vector<16x8xf32>
    %100 = vector.extract_strided_slice %77 {offsets = [16, 40], sizes = [16, 8], strides = [1, 1]} : vector<32x96xf32> to vector<16x8xf32>
    %101 = vector.extract_strided_slice %77 {offsets = [16, 48], sizes = [16, 8], strides = [1, 1]} : vector<32x96xf32> to vector<16x8xf32>
    %102 = vector.extract_strided_slice %77 {offsets = [16, 56], sizes = [16, 8], strides = [1, 1]} : vector<32x96xf32> to vector<16x8xf32>
    %103 = vector.shape_cast %95 : vector<16x8xf32> to vector<1x16x8xf32>
    %104 = vector.shape_cast %96 : vector<16x8xf32> to vector<1x16x8xf32>
    %105 = vector.shape_cast %97 : vector<16x8xf32> to vector<1x16x8xf32>
    %106 = vector.shape_cast %98 : vector<16x8xf32> to vector<1x16x8xf32>
    %107 = vector.shape_cast %99 : vector<16x8xf32> to vector<1x16x8xf32>
    %108 = vector.shape_cast %100 : vector<16x8xf32> to vector<1x16x8xf32>
    %109 = vector.shape_cast %101 : vector<16x8xf32> to vector<1x16x8xf32>
    %110 = vector.shape_cast %102 : vector<16x8xf32> to vector<1x16x8xf32>
    %111 = tpu.concatenate %103, %104, %105, %106, %107, %108, %109, %110 in 0 : vector<1x16x8xf32>, vector<1x16x8xf32>, vector<1x16x8xf32>, vector<1x16x8xf32>, vector<1x16x8xf32>, vector<1x16x8xf32>, vector<1x16x8xf32>, vector<1x16x8xf32> -> vector<8x16x8xf32>
    %112 = vector.extract_strided_slice %77 {offsets = [0, 64], sizes = [16, 8], strides = [1, 1]} : vector<32x96xf32> to vector<16x8xf32>
    %113 = vector.extract_strided_slice %77 {offsets = [0, 72], sizes = [16, 8], strides = [1, 1]} : vector<32x96xf32> to vector<16x8xf32>
    %114 = vector.extract_strided_slice %77 {offsets = [0, 80], sizes = [16, 8], strides = [1, 1]} : vector<32x96xf32> to vector<16x8xf32>
    %115 = vector.extract_strided_slice %77 {offsets = [0, 88], sizes = [16, 8], strides = [1, 1]} : vector<32x96xf32> to vector<16x8xf32>
    %116 = vector.extract_strided_slice %77 {offsets = [16, 64], sizes = [16, 8], strides = [1, 1]} : vector<32x96xf32> to vector<16x8xf32>
    %117 = vector.extract_strided_slice %77 {offsets = [16, 72], sizes = [16, 8], strides = [1, 1]} : vector<32x96xf32> to vector<16x8xf32>
    %118 = vector.extract_strided_slice %77 {offsets = [16, 80], sizes = [16, 8], strides = [1, 1]} : vector<32x96xf32> to vector<16x8xf32>
    %119 = vector.extract_strided_slice %77 {offsets = [16, 88], sizes = [16, 8], strides = [1, 1]} : vector<32x96xf32> to vector<16x8xf32>
    %120 = vector.shape_cast %112 : vector<16x8xf32> to vector<1x16x8xf32>
    %121 = vector.shape_cast %113 : vector<16x8xf32> to vector<1x16x8xf32>
    %122 = vector.shape_cast %114 : vector<16x8xf32> to vector<1x16x8xf32>
    %123 = vector.shape_cast %115 : vector<16x8xf32> to vector<1x16x8xf32>
    %124 = vector.shape_cast %116 : vector<16x8xf32> to vector<1x16x8xf32>
    %125 = vector.shape_cast %117 : vector<16x8xf32> to vector<1x16x8xf32>
    %126 = vector.shape_cast %118 : vector<16x8xf32> to vector<1x16x8xf32>
    %127 = vector.shape_cast %119 : vector<16x8xf32> to vector<1x16x8xf32>
    %128 = tpu.concatenate %120, %121, %122, %123, %124, %125, %126, %127 in 0 : vector<1x16x8xf32>, vector<1x16x8xf32>, vector<1x16x8xf32>, vector<1x16x8xf32>, vector<1x16x8xf32>, vector<1x16x8xf32>, vector<1x16x8xf32>, vector<1x16x8xf32> -> vector<8x16x8xf32>
    %129 = arith.truncf %94 : vector<8x16x8xf32> to vector<8x16x8xbf16>
    %130 = arith.truncf %111 : vector<8x16x8xf32> to vector<8x16x8xbf16>
    "tpu.trace_start"() <{level = 10 : i32, message = "gqd,gkd->gqk"}> : () -> ()
    %cst_25 = arith.constant dense<0.000000e+00> : vector<8x16x16xf32>
    %131 = tpu.matmul %129, %130, %cst_25 {dimension_numbers = #tpu.dot_dimension_numbers<[2], [2], [1], [1], [0, 0, 0, 1, 1, 1], [0], [0]>} : vector<8x16x8xbf16>, vector<8x16x8xbf16>, vector<8x16x16xf32> -> vector<8x16x16xf32>
    "tpu.trace_stop"() : () -> ()
    %cst_26 = arith.constant dense<0xFF800000> : vector<8x16xf32>
    %132 = vector.multi_reduction <maximumf>, %131, %cst_26 [2] : vector<8x16x16xf32> to vector<8x16xf32>
    %133 = vector.shape_cast %132 : vector<8x16xf32> to vector<8x16x1xf32>
    %134 = vector.broadcast %133 : vector<8x16x1xf32> to vector<8x16x16xf32>
    %135 = arith.subf %131, %134 : vector<8x16x16xf32>
    %136 = math.exp %135 : vector<8x16x16xf32>
    %cst_27 = arith.constant dense<0.000000e+00> : vector<8x16xf32>
    %137 = vector.multi_reduction <add>, %136, %cst_27 [2] : vector<8x16x16xf32> to vector<8x16xf32>
    %138 = vector.shape_cast %137 : vector<8x16xf32> to vector<8x16x1xf32>
    %139 = tpu.reciprocal %138 {approx = true} : vector<8x16x1xf32> -> vector<8x16x1xf32>
    %140 = vector.broadcast %139 : vector<8x16x1xf32> to vector<8x16x16xf32>
    %141 = arith.mulf %136, %140 : vector<8x16x16xf32>
    %142 = vector.shape_cast %141 : vector<8x16x16xf32> to vector<2x4x16x16xf32>
    %143 = arith.truncf %142 : vector<2x4x16x16xf32> to vector<2x4x16x16xbf16>
    %c0_28 = arith.constant 0 : index
    %c0_29 = arith.constant 0 : index
    %c0_30 = arith.constant 0 : index
    %c0_31 = arith.constant 0 : index
    %144 = vector.load %arg13[%c0_28, %c0_29, %c0_30, %c0_31] : memref<2x4x16x16xbf16, #tpu.memory_space<vmem>>, vector<2x4x16x16xbf16>
    tpu.vector_store %arg13[%c0_28, %c0_29, %c0_30, %c0_31], %143 {strides = array<i32>} : memref<2x4x16x16xbf16, #tpu.memory_space<vmem>>, vector<2x4x16x16xbf16>,
    %145 = arith.truncf %141 : vector<8x16x16xf32> to vector<8x16x16xbf16>
    %146 = arith.truncf %128 : vector<8x16x8xf32> to vector<8x16x8xbf16>
    "tpu.trace_start"() <{level = 10 : i32, message = "gqk,gkd->gqd"}> : () -> ()
    %cst_32 = arith.constant dense<0.000000e+00> : vector<8x16x8xf32>
    %147 = tpu.matmul %145, %146, %cst_32 {dimension_numbers = #tpu.dot_dimension_numbers<[2], [1], [1], [2], [0, 0, 0, 1, 1, 2], [0], [0]>} : vector<8x16x16xbf16>, vector<8x16x8xbf16>, vector<8x16x8xf32> -> vector<8x16x8xf32>
    "tpu.trace_stop"() : () -> ()
    %148 = vector.extract_strided_slice %147 {offsets = [0, 0, 0], sizes = [1, 16, 8], strides = [1, 1, 1]} : vector<8x16x8xf32> to vector<1x16x8xf32>
    %149 = vector.shape_cast %148 : vector<1x16x8xf32> to vector<16x8xf32>
    %150 = vector.extract_strided_slice %147 {offsets = [1, 0, 0], sizes = [1, 16, 8], strides = [1, 1, 1]} : vector<8x16x8xf32> to vector<1x16x8xf32>
    %151 = vector.shape_cast %150 : vector<1x16x8xf32> to vector<16x8xf32>
    %152 = vector.extract_strided_slice %147 {offsets = [2, 0, 0], sizes = [1, 16, 8], strides = [1, 1, 1]} : vector<8x16x8xf32> to vector<1x16x8xf32>
    %153 = vector.shape_cast %152 : vector<1x16x8xf32> to vector<16x8xf32>
    %154 = vector.extract_strided_slice %147 {offsets = [3, 0, 0], sizes = [1, 16, 8], strides = [1, 1, 1]} : vector<8x16x8xf32> to vector<1x16x8xf32>
    %155 = vector.shape_cast %154 : vector<1x16x8xf32> to vector<16x8xf32>
    %156 = tpu.concatenate %149, %151, %153, %155 in 1 : vector<16x8xf32>, vector<16x8xf32>, vector<16x8xf32>, vector<16x8xf32> -> vector<16x32xf32>
    %157 = vector.extract_strided_slice %147 {offsets = [4, 0, 0], sizes = [1, 16, 8], strides = [1, 1, 1]} : vector<8x16x8xf32> to vector<1x16x8xf32>
    %158 = vector.shape_cast %157 : vector<1x16x8xf32> to vector<16x8xf32>
    %159 = vector.extract_strided_slice %147 {offsets = [5, 0, 0], sizes = [1, 16, 8], strides = [1, 1, 1]} : vector<8x16x8xf32> to vector<1x16x8xf32>
    %160 = vector.shape_cast %159 : vector<1x16x8xf32> to vector<16x8xf32>
    %161 = vector.extract_strided_slice %147 {offsets = [6, 0, 0], sizes = [1, 16, 8], strides = [1, 1, 1]} : vector<8x16x8xf32> to vector<1x16x8xf32>
    %162 = vector.shape_cast %161 : vector<1x16x8xf32> to vector<16x8xf32>
    %163 = vector.extract_strided_slice %147 {offsets = [7, 0, 0], sizes = [1, 16, 8], strides = [1, 1, 1]} : vector<8x16x8xf32> to vector<1x16x8xf32>
    %164 = vector.shape_cast %163 : vector<1x16x8xf32> to vector<16x8xf32>
    %165 = tpu.concatenate %158, %160, %162, %164 in 1 : vector<16x8xf32>, vector<16x8xf32>, vector<16x8xf32>, vector<16x8xf32> -> vector<16x32xf32>
    %166 = tpu.concatenate %156, %165 in 0 : vector<16x32xf32>, vector<16x32xf32> -> vector<32x32xf32>
    %c0_33 = arith.constant 0 : index
    %c0_34 = arith.constant 0 : index
    %167 = vector.load %arg7[%c0_33, %c0_34] : memref<32x32xbf16, #tpu.memory_space<vmem>>, vector<32x32xbf16>
    %168 = arith.truncf %166 : vector<32x32xf32> to vector<32x32xbf16>
    %cst_35 = arith.constant dense<0.000000e+00> : vector<32x32xf32>
    %169 = tpu.matmul %168, %167, %cst_35 {dimension_numbers = #tpu.dot_dimension_numbers<[1], [0], [0], [1], [0, 0, 1, 1], [], []>} : vector<32x32xbf16>, vector<32x32xbf16>, vector<32x32xf32> -> vector<32x32xf32>
    %170 = arith.addf %47, %169 : vector<32x32xf32>
    %171 = vector.extract_strided_slice %0 {offsets = [5, 0], sizes = [1, 32], strides = [1, 1]} : vector<19x32xf32> to vector<1x32xf32>
    %172 = vector.broadcast %171 : vector<1x32xf32> to vector<32x32xf32>
    %173 = arith.addf %170, %172 : vector<32x32xf32>
    %174 = vector.extract_strided_slice %0 {offsets = [6, 0], sizes = [1, 32], strides = [1, 1]} : vector<19x32xf32> to vector<1x32xf32>
    %175 = vector.extract_strided_slice %0 {offsets = [7, 0], sizes = [1, 32], strides = [1, 1]} : vector<19x32xf32> to vector<1x32xf32>
    %cst_36 = arith.constant dense<0.000000e+00> : vector<32xf32>
    %176 = vector.multi_reduction <add>, %173, %cst_36 [1] : vector<32x32xf32> to vector<32xf32>
    %177 = vector.shape_cast %176 : vector<32xf32> to vector<32x1xf32>
    %cst_37 = arith.constant 3.200000e+01 : f32
    %178 = vector.broadcast %cst_37 : f32 to vector<32x1xf32>
    %179 = arith.divf %177, %178 : vector<32x1xf32>
    %180 = vector.broadcast %179 : vector<32x1xf32> to vector<32x32xf32>
    %181 = arith.subf %173, %180 : vector<32x32xf32>
    %182 = arith.mulf %181, %181 : vector<32x32xf32>
    %cst_38 = arith.constant dense<0.000000e+00> : vector<32xf32>
    %183 = vector.multi_reduction <add>, %182, %cst_38 [1] : vector<32x32xf32> to vector<32xf32>
    %184 = vector.shape_cast %183 : vector<32xf32> to vector<32x1xf32>
    %cst_39 = arith.constant 3.200000e+01 : f32
    %185 = vector.broadcast %cst_39 : f32 to vector<32x1xf32>
    %186 = arith.divf %184, %185 : vector<32x1xf32>
    %187 = vector.broadcast %179 : vector<32x1xf32> to vector<32x32xf32>
    %188 = arith.subf %173, %187 : vector<32x32xf32>
    %cst_40 = arith.constant 9.99999974E-6 : f32
    %189 = vector.broadcast %cst_40 : f32 to vector<32x1xf32>
    %190 = arith.addf %186, %189 : vector<32x1xf32>
    %191 = math.rsqrt %190 : vector<32x1xf32>
    %192 = vector.broadcast %191 : vector<32x1xf32> to vector<32x32xf32>
    %193 = arith.mulf %188, %192 : vector<32x32xf32>
    %194 = vector.broadcast %174 : vector<1x32xf32> to vector<32x32xf32>
    %195 = arith.mulf %193, %194 : vector<32x32xf32>
    %196 = vector.broadcast %175 : vector<1x32xf32> to vector<32x32xf32>
    %197 = arith.addf %195, %196 : vector<32x32xf32>
    %c0_41 = arith.constant 0 : index
    %c0_42 = arith.constant 0 : index
    %198 = vector.load %arg8[%c0_41, %c0_42] : memref<32x64xbf16, #tpu.memory_space<vmem>>, vector<32x64xbf16>
    %199 = arith.truncf %197 : vector<32x32xf32> to vector<32x32xbf16>
    %cst_43 = arith.constant dense<0.000000e+00> : vector<32x64xf32>
    %200 = tpu.matmul %199, %198, %cst_43 {dimension_numbers = #tpu.dot_dimension_numbers<[1], [0], [0], [1], [0, 0, 1, 1], [], []>} : vector<32x32xbf16>, vector<32x64xbf16>, vector<32x64xf32> -> vector<32x64xf32>
    %201 = vector.extract_strided_slice %1 {offsets = [2, 0], sizes = [1, 64], strides = [1, 1]} : vector<4x128xf32> to vector<1x64xf32>
    %202 = vector.broadcast %201 : vector<1x64xf32> to vector<32x64xf32>
    %203 = arith.addf %200, %202 : vector<32x64xf32>
    %204 = vector.extract_strided_slice %203 {offsets = [0, 0], sizes = [32, 32], strides = [1, 1]} : vector<32x64xf32> to vector<32x32xf32>
    %205 = vector.extract_strided_slice %203 {offsets = [0, 32], sizes = [32, 32], strides = [1, 1]} : vector<32x64xf32> to vector<32x32xf32>
    %206 = arith.negf %205 : vector<32x32xf32>
    %207 = math.exp %206 : vector<32x32xf32>
    %cst_44 = arith.constant 1.000000e+00 : f32
    %208 = vector.broadcast %cst_44 : f32 to vector<32x32xf32>
    %209 = arith.addf %208, %207 : vector<32x32xf32>
    %210 = arith.divf %208, %209 : vector<32x32xf32>
    %211 = arith.mulf %204, %210 : vector<32x32xf32>
    %212 = tpu.iota {dimensions = array<i32: 0>} : vector<32x32xi32>
    %c16_i32 = arith.constant 16 : i32
    %c0_i32 = arith.constant 0 : i32
    %213 = arith.cmpi eq, %c16_i32, %c0_i32 : i32
    %c1_i32 = arith.constant 1 : i32
    %214 = arith.select %213, %c1_i32, %c16_i32 : i32
    %215 = vector.broadcast %214 : i32 to vector<32x32xi32>
    %216 = arith.remsi %212, %215 : vector<32x32xi32>
    %c0_i32_45 = arith.constant 0 : i32
    %217 = vector.broadcast %c0_i32_45 : i32 to vector<32x32xi32>
    %218 = arith.cmpi ne, %216, %217 : vector<32x32xi32>
    %c0_i32_46 = arith.constant 0 : i32
    %219 = vector.broadcast %c0_i32_46 : i32 to vector<32x32xi32>
    %220 = arith.cmpi slt, %216, %219 : vector<32x32xi32>
    %c0_i32_47 = arith.constant 0 : i32
    %221 = arith.cmpi slt, %214, %c0_i32_47 : i32
    %222 = vector.broadcast %221 : i1 to vector<32x32xi1>
    %223 = vector.broadcast %222 : vector<32x32xi1> to vector<32x32xi1>
    %224 = arith.xori %220, %223 : vector<32x32xi1>
    %225 = arith.andi %224, %218 : vector<32x32xi1>
    %226 = vector.broadcast %214 : i32 to vector<32x32xi32>
    %227 = arith.addi %216, %226 : vector<32x32xi32>
    %228 = arith.select %225, %227, %216 : vector<32x32xi1>, vector<32x32xi32>
    %c0_i32_48 = arith.constant 0 : i32
    %229 = vector.broadcast %c0_i32_48 : i32 to vector<32x32xi32>
    %230 = arith.cmpi eq, %228, %229 : vector<32x32xi32>
    %c1_i32_49 = arith.constant 1 : i32
    %231 = tpu.dynamic_rotate %211 by %c1_i32_49 dim 0 : vector<32x32xf32>, i32 -> vector<32x32xf32>
    %cst_50 = arith.constant 0.000000e+00 : f32
    %232 = vector.broadcast %cst_50 : f32 to vector<32x32xf32>
    %233 = arith.select %230, %232, %231 : vector<32x32xi1>, vector<32x32xf32>
    %c15_i32 = arith.constant 15 : i32
    %234 = vector.broadcast %c15_i32 : i32 to vector<32x32xi32>
    %235 = arith.cmpi eq, %228, %234 : vector<32x32xi32>
    %c31_i32 = arith.constant 31 : i32
    %236 = tpu.dynamic_rotate %211 by %c31_i32 dim 0 : vector<32x32xf32>, i32 -> vector<32x32xf32>
    %cst_51 = arith.constant 0.000000e+00 : f32
    %237 = vector.broadcast %cst_51 : f32 to vector<32x32xf32>
    %238 = arith.select %235, %237, %236 : vector<32x32xi1>, vector<32x32xf32>
    %239 = vector.extract_strided_slice %0 {offsets = [11, 0], sizes = [1, 32], strides = [1, 1]} : vector<19x32xf32> to vector<1x32xf32>
    %240 = vector.broadcast %239 : vector<1x32xf32> to vector<32x32xf32>
    %241 = arith.mulf %233, %240 : vector<32x32xf32>
    %242 = vector.extract_strided_slice %0 {offsets = [12, 0], sizes = [1, 32], strides = [1, 1]} : vector<19x32xf32> to vector<1x32xf32>
    %243 = vector.broadcast %242 : vector<1x32xf32> to vector<32x32xf32>
    %244 = arith.mulf %211, %243 : vector<32x32xf32>
    %245 = arith.addf %241, %244 : vector<32x32xf32>
    %246 = vector.extract_strided_slice %0 {offsets = [13, 0], sizes = [1, 32], strides = [1, 1]} : vector<19x32xf32> to vector<1x32xf32>
    %247 = vector.broadcast %246 : vector<1x32xf32> to vector<32x32xf32>
    %248 = arith.mulf %238, %247 : vector<32x32xf32>
    %249 = arith.addf %245, %248 : vector<32x32xf32>
    %250 = vector.extract_strided_slice %0 {offsets = [8, 0], sizes = [1, 32], strides = [1, 1]} : vector<19x32xf32> to vector<1x32xf32>
    %251 = vector.broadcast %250 : vector<1x32xf32> to vector<32x32xf32>
    %252 = arith.mulf %249, %251 : vector<32x32xf32>
    %253 = vector.extract_strided_slice %0 {offsets = [9, 0], sizes = [1, 32], strides = [1, 1]} : vector<19x32xf32> to vector<1x32xf32>
    %254 = vector.broadcast %253 : vector<1x32xf32> to vector<32x32xf32>
    %255 = arith.addf %252, %254 : vector<32x32xf32>
    %256 = arith.negf %255 : vector<32x32xf32>
    %257 = math.exp %256 : vector<32x32xf32>
    %cst_52 = arith.constant 1.000000e+00 : f32
    %258 = vector.broadcast %cst_52 : f32 to vector<32x32xf32>
    %259 = arith.addf %258, %257 : vector<32x32xf32>
    %260 = arith.divf %258, %259 : vector<32x32xf32>
    %261 = arith.mulf %255, %260 : vector<32x32xf32>
    %c0_53 = arith.constant 0 : index
    %c0_54 = arith.constant 0 : index
    %262 = vector.load %arg9[%c0_53, %c0_54] : memref<32x32xbf16, #tpu.memory_space<vmem>>, vector<32x32xbf16>
    %263 = arith.truncf %261 : vector<32x32xf32> to vector<32x32xbf16>
    %cst_55 = arith.constant dense<0.000000e+00> : vector<32x32xf32>
    %264 = tpu.matmul %263, %262, %cst_55 {dimension_numbers = #tpu.dot_dimension_numbers<[1], [0], [0], [1], [0, 0, 1, 1], [], []>} : vector<32x32xbf16>, vector<32x32xbf16>, vector<32x32xf32> -> vector<32x32xf32>
    %265 = arith.addf %173, %264 : vector<32x32xf32>
    %266 = vector.extract_strided_slice %0 {offsets = [10, 0], sizes = [1, 32], strides = [1, 1]} : vector<19x32xf32> to vector<1x32xf32>
    %267 = vector.broadcast %266 : vector<1x32xf32> to vector<32x32xf32>
    %268 = arith.addf %265, %267 : vector<32x32xf32>
    %269 = vector.extract_strided_slice %0 {offsets = [14, 0], sizes = [1, 32], strides = [1, 1]} : vector<19x32xf32> to vector<1x32xf32>
    %270 = vector.extract_strided_slice %0 {offsets = [15, 0], sizes = [1, 32], strides = [1, 1]} : vector<19x32xf32> to vector<1x32xf32>
    %c0_56 = arith.constant 0 : index
    %c0_57 = arith.constant 0 : index
    %271 = vector.load %arg10[%c0_56, %c0_57] : memref<32x128xbf16, #tpu.memory_space<vmem>>, vector<32x128xbf16>
    %272 = vector.extract_strided_slice %1 {offsets = [1, 0], sizes = [1, 128], strides = [1, 1]} : vector<4x128xf32> to vector<1x128xf32>
    %c0_58 = arith.constant 0 : index
    %c0_59 = arith.constant 0 : index
    %273 = vector.load %arg11[%c0_58, %c0_59] : memref<128x32xbf16, #tpu.memory_space<vmem>>, vector<128x32xbf16>
    %274 = vector.extract_strided_slice %0 {offsets = [16, 0], sizes = [1, 32], strides = [1, 1]} : vector<19x32xf32> to vector<1x32xf32>
    %cst_60 = arith.constant dense<0.000000e+00> : vector<32xf32>
    %275 = vector.multi_reduction <add>, %268, %cst_60 [1] : vector<32x32xf32> to vector<32xf32>
    %276 = vector.shape_cast %275 : vector<32xf32> to vector<32x1xf32>
    %cst_61 = arith.constant 3.200000e+01 : f32
    %277 = vector.broadcast %cst_61 : f32 to vector<32x1xf32>
    %278 = arith.divf %276, %277 : vector<32x1xf32>
    %279 = vector.broadcast %278 : vector<32x1xf32> to vector<32x32xf32>
    %280 = arith.subf %268, %279 : vector<32x32xf32>
    %281 = arith.mulf %280, %280 : vector<32x32xf32>
    %cst_62 = arith.constant dense<0.000000e+00> : vector<32xf32>
    %282 = vector.multi_reduction <add>, %281, %cst_62 [1] : vector<32x32xf32> to vector<32xf32>
    %283 = vector.shape_cast %282 : vector<32xf32> to vector<32x1xf32>
    %cst_63 = arith.constant 3.200000e+01 : f32
    %284 = vector.broadcast %cst_63 : f32 to vector<32x1xf32>
    %285 = arith.divf %283, %284 : vector<32x1xf32>
    %286 = vector.broadcast %278 : vector<32x1xf32> to vector<32x32xf32>
    %287 = arith.subf %268, %286 : vector<32x32xf32>
    %cst_64 = arith.constant 9.99999974E-6 : f32
    %288 = vector.broadcast %cst_64 : f32 to vector<32x1xf32>
    %289 = arith.addf %285, %288 : vector<32x1xf32>
    %290 = math.rsqrt %289 : vector<32x1xf32>
    %291 = vector.broadcast %290 : vector<32x1xf32> to vector<32x32xf32>
    %292 = arith.mulf %287, %291 : vector<32x32xf32>
    %293 = vector.broadcast %269 : vector<1x32xf32> to vector<32x32xf32>
    %294 = arith.mulf %292, %293 : vector<32x32xf32>
    %295 = vector.broadcast %270 : vector<1x32xf32> to vector<32x32xf32>
    %296 = arith.addf %294, %295 : vector<32x32xf32>
    %297 = arith.truncf %296 : vector<32x32xf32> to vector<32x32xbf16>
    %cst_65 = arith.constant dense<0.000000e+00> : vector<32x128xf32>
    %298 = tpu.matmul %297, %271, %cst_65 {dimension_numbers = #tpu.dot_dimension_numbers<[1], [0], [0], [1], [0, 0, 1, 1], [], []>} : vector<32x32xbf16>, vector<32x128xbf16>, vector<32x128xf32> -> vector<32x128xf32>
    %299 = vector.broadcast %272 : vector<1x128xf32> to vector<32x128xf32>
    %300 = arith.addf %298, %299 : vector<32x128xf32>
    %301 = arith.negf %300 : vector<32x128xf32>
    %302 = math.exp %301 : vector<32x128xf32>
    %cst_66 = arith.constant 1.000000e+00 : f32
    %303 = vector.broadcast %cst_66 : f32 to vector<32x128xf32>
    %304 = arith.addf %303, %302 : vector<32x128xf32>
    %305 = arith.divf %303, %304 : vector<32x128xf32>
    %306 = arith.mulf %300, %305 : vector<32x128xf32>
    %307 = arith.truncf %306 : vector<32x128xf32> to vector<32x128xbf16>
    %cst_67 = arith.constant dense<0.000000e+00> : vector<32x32xf32>
    %308 = tpu.matmul %307, %273, %cst_67 {dimension_numbers = #tpu.dot_dimension_numbers<[1], [0], [0], [1], [0, 0, 1, 1], [], []>} : vector<32x128xbf16>, vector<128x32xbf16>, vector<32x32xf32> -> vector<32x32xf32>
    %309 = vector.broadcast %274 : vector<1x32xf32> to vector<32x32xf32>
    %310 = arith.addf %308, %309 : vector<32x32xf32>
    %cst_68 = arith.constant 5.000000e-01 : f32
    %311 = vector.broadcast %cst_68 : f32 to vector<32x32xf32>
    %312 = arith.mulf %311, %310 : vector<32x32xf32>
    %313 = arith.addf %268, %312 : vector<32x32xf32>
    %314 = vector.extract_strided_slice %0 {offsets = [17, 0], sizes = [1, 32], strides = [1, 1]} : vector<19x32xf32> to vector<1x32xf32>
    %315 = vector.extract_strided_slice %0 {offsets = [18, 0], sizes = [1, 32], strides = [1, 1]} : vector<19x32xf32> to vector<1x32xf32>
    %cst_69 = arith.constant dense<0.000000e+00> : vector<32xf32>
    %316 = vector.multi_reduction <add>, %313, %cst_69 [1] : vector<32x32xf32> to vector<32xf32>
    %317 = vector.shape_cast %316 : vector<32xf32> to vector<32x1xf32>
    %cst_70 = arith.constant 3.200000e+01 : f32
    %318 = vector.broadcast %cst_70 : f32 to vector<32x1xf32>
    %319 = arith.divf %317, %318 : vector<32x1xf32>
    %320 = vector.broadcast %319 : vector<32x1xf32> to vector<32x32xf32>
    %321 = arith.subf %313, %320 : vector<32x32xf32>
    %322 = arith.mulf %321, %321 : vector<32x32xf32>
    %cst_71 = arith.constant dense<0.000000e+00> : vector<32xf32>
    %323 = vector.multi_reduction <add>, %322, %cst_71 [1] : vector<32x32xf32> to vector<32xf32>
    %324 = vector.shape_cast %323 : vector<32xf32> to vector<32x1xf32>
    %cst_72 = arith.constant 3.200000e+01 : f32
    %325 = vector.broadcast %cst_72 : f32 to vector<32x1xf32>
    %326 = arith.divf %324, %325 : vector<32x1xf32>
    %327 = vector.broadcast %319 : vector<32x1xf32> to vector<32x32xf32>
    %328 = arith.subf %313, %327 : vector<32x32xf32>
    %cst_73 = arith.constant 9.99999974E-6 : f32
    %329 = vector.broadcast %cst_73 : f32 to vector<32x1xf32>
    %330 = arith.addf %326, %329 : vector<32x1xf32>
    %331 = math.rsqrt %330 : vector<32x1xf32>
    %332 = vector.broadcast %331 : vector<32x1xf32> to vector<32x32xf32>
    %333 = arith.mulf %328, %332 : vector<32x32xf32>
    %334 = vector.broadcast %314 : vector<1x32xf32> to vector<32x32xf32>
    %335 = arith.mulf %333, %334 : vector<32x32xf32>
    %336 = vector.broadcast %315 : vector<1x32xf32> to vector<32x32xf32>
    %337 = arith.addf %335, %336 : vector<32x32xf32>
    %c0_74 = arith.constant 0 : index
    %c0_75 = arith.constant 0 : index
    %338 = vector.load %arg12[%c0_74, %c0_75] : memref<32x32xf32, #tpu.memory_space<vmem>>, vector<32x32xf32>
    tpu.vector_store %arg12[%c0_74, %c0_75], %337 {strides = array<i32>} : memref<32x32xf32, #tpu.memory_space<vmem>>, vector<32x32xf32>,
    return
  }
  func.func @transform_0(%arg0: i32) -> (i32, i32) {
    %c0_i32 = arith.constant 0 : i32
    %c0_i32_0 = arith.constant 0 : i32
    return %arg0, %c0_i32 : i32, i32
  }
  func.func @transform_1(%arg0: i32) -> (i32, i32) {
    %c0_i32 = arith.constant 0 : i32
    %c0_i32_0 = arith.constant 0 : i32
    %c0_i32_1 = arith.constant 0 : i32
    return %c0_i32, %c0_i32_0 : i32, i32
  }
  func.func @transform_2(%arg0: i32) -> (i32, i32) {
    %c0_i32 = arith.constant 0 : i32
    %c0_i32_0 = arith.constant 0 : i32
    %c0_i32_1 = arith.constant 0 : i32
    return %c0_i32, %c0_i32_0 : i32, i32
  }
  func.func @transform_3(%arg0: i32) -> (i32, i32) {
    %c0_i32 = arith.constant 0 : i32
    %c0_i32_0 = arith.constant 0 : i32
    %c0_i32_1 = arith.constant 0 : i32
    return %c0_i32, %c0_i32_0 : i32, i32
  }
  func.func @transform_4(%arg0: i32) -> (i32, i32) {
    %c0_i32 = arith.constant 0 : i32
    %c0_i32_0 = arith.constant 0 : i32
    %c0_i32_1 = arith.constant 0 : i32
    return %c0_i32, %c0_i32_0 : i32, i32
  }
  func.func @transform_5(%arg0: i32) -> (i32, i32) {
    %c0_i32 = arith.constant 0 : i32
    %c0_i32_0 = arith.constant 0 : i32
    %c0_i32_1 = arith.constant 0 : i32
    return %c0_i32, %c0_i32_0 : i32, i32
  }
  func.func @transform_6(%arg0: i32) -> (i32, i32) {
    %c0_i32 = arith.constant 0 : i32
    %c0_i32_0 = arith.constant 0 : i32
    %c0_i32_1 = arith.constant 0 : i32
    return %c0_i32, %c0_i32_0 : i32, i32
  }
  func.func @transform_7(%arg0: i32) -> (i32, i32) {
    %c0_i32 = arith.constant 0 : i32
    %c0_i32_0 = arith.constant 0 : i32
    %c0_i32_1 = arith.constant 0 : i32
    return %c0_i32, %c0_i32_0 : i32, i32
  }
  func.func @transform_8(%arg0: i32) -> (i32, i32) {
    %c0_i32 = arith.constant 0 : i32
    %c0_i32_0 = arith.constant 0 : i32
    %c0_i32_1 = arith.constant 0 : i32
    return %c0_i32, %c0_i32_0 : i32, i32
  }
  func.func @transform_9(%arg0: i32) -> (i32, i32) {
    %c0_i32 = arith.constant 0 : i32
    %c0_i32_0 = arith.constant 0 : i32
    %c0_i32_1 = arith.constant 0 : i32
    return %c0_i32, %c0_i32_0 : i32, i32
  }
  func.func @transform_10(%arg0: i32) -> (i32, i32) {
    %c0_i32 = arith.constant 0 : i32
    %c0_i32_0 = arith.constant 0 : i32
    %c0_i32_1 = arith.constant 0 : i32
    return %c0_i32, %c0_i32_0 : i32, i32
  }
  func.func @transform_11(%arg0: i32) -> (i32, i32) {
    %c0_i32 = arith.constant 0 : i32
    %c0_i32_0 = arith.constant 0 : i32
    return %arg0, %c0_i32 : i32, i32
  }
  func.func @transform_12(%arg0: i32) -> (i32, i32, i32, i32) {
    %c0_i32 = arith.constant 0 : i32
    %c0_i32_0 = arith.constant 0 : i32
    %c0_i32_1 = arith.constant 0 : i32
    %c0_i32_2 = arith.constant 0 : i32
    return %arg0, %c0_i32, %c0_i32_0, %c0_i32_1 : i32, i32, i32, i32
  }
}

</mosaic_0001>

<llo_original>
// kernel: tpu_custom_call.1
$region0: #{tpu_custom_call.1}
  #allocation0 [shape = 'u32[]', space=smem, size = 0x4, offset = 0x4, fixed_abs, tag = 'smem constant byte address 0x4 - core index']
  #allocation1 [shape = 'u32[144,128]{1,0:T(1,128)}', space=vmem, size = 0x12000, scoped, tag = 'internal scratch']
  %s0 = inlined_call_operand.vmem [shape: f32[32,32], index: 0, kind: input, shape index: {}]
  %s1 = inlined_call_operand.vmem [shape: f32[19,32], index: 1, kind: input, shape index: {}]
  %s2 = inlined_call_operand.hbm [shape: f32[4,128], index: 2, kind: input, shape index: {}]
  %s3 = inlined_call_operand.vmem [shape: bf16[32,128], index: 3, kind: input, shape index: {}]
  %s4 = inlined_call_operand.vmem [shape: bf16[128,32], index: 4, kind: input, shape index: {}]
  %s5 = inlined_call_operand.vmem [shape: bf16[32,96], index: 5, kind: input, shape index: {}]
  %s6 = inlined_call_operand.vmem [shape: bf16[32,32], index: 6, kind: input, shape index: {}]
  %s7 = inlined_call_operand.vmem [shape: bf16[32,64], index: 7, kind: input, shape index: {}]
  %s8 = inlined_call_operand.vmem [shape: bf16[32,32], index: 8, kind: input, shape index: {}]
  %s9 = inlined_call_operand.vmem [shape: bf16[32,128], index: 9, kind: input, shape index: {}]
  %s10 = inlined_call_operand.vmem [shape: bf16[128,32], index: 10, kind: input, shape index: {}]
  %s11 = inlined_call_operand.hbm [shape: f32[32,32], index: 11, kind: output, shape index: {0}]
  %s12 = inlined_call_operand.hbm [shape: bf16[2,4,16,16], index: 12, kind: output, shape index: {1}]
  %13 = xla_tuple %s11, %s12
  %s14 = sld [smem:[#allocation0]]
  $region66: #{tpu_custom_call.1} parent=0
    _
  %s16 = ssub.s32 1, %s14
  %s17 = scalar_select 0, %s16, %s14
  $region1: #{tpu_custom_call.1} parent=0
    #allocation2 [shape = 'u8[2048]{0}', space=vmem, size = 0x800, scoped, tag = 'input window, operand 2, single buffered']
    #allocation3 [shape = 's32[1]{0}', space=sflag, size = 0x4, scoped, tag = 'scoped memory for tpu_custom_call.1']
    #allocation4 [shape = 's32[1]{0}', space=sflag, size = 0x4, scoped, tag = 'scoped memory for tpu_custom_call.1']
    #allocation5 [shape = 'u8[16384]{0}', space=vmem, size = 0x4000, scoped, tag = 'output window, operand 0, single buffered']
    #allocation6 [shape = 'u8[32768]{0}', space=vmem, size = 0x8000, scoped, tag = 'output window, operand 1, single buffered']
    #allocation7 [shape = 's32[1]{0}', space=sflag, size = 0x4, scoped, tag = 'scoped memory for tpu_custom_call.1']
    %18 = vsyncpa [#allocation3], 0
    %19 = vsyncpa [#allocation4], 0
    %20 = vsyncpa [#allocation7], 0
    // Predicated region
    $region2: #{tpu_custom_call.1} parent=1 // pred_check
      _
    $region3: #{tpu_custom_call.1} parent=1 // pred_check_branch
      %22 = sbr.rel (0) target = $region5
    $region4: #{tpu_custom_call.1} parent=1 // pred_region
      _
    $region5: #{tpu_custom_call.1} parent=1 // pred_fallthru
      _
    // Predicated region
    $region6: #{tpu_custom_call.1} parent=1 // pred_check
      _
    $region7: #{tpu_custom_call.1} parent=1 // pred_check_branch
      %24 = sbr.rel (0) target = $region9
    $region8: #{tpu_custom_call.1} parent=1 // pred_region
      _
    $region9: #{tpu_custom_call.1} parent=1 // pred_fallthru
      _
    // Predicated region
    $region10: #{tpu_custom_call.1} parent=1 // pred_check
      _
    $region11: #{tpu_custom_call.1} parent=1 // pred_check_branch
      %26 = sbr.rel (0) target = $region13
    $region12: #{tpu_custom_call.1} parent=1 // pred_region
      %s28 = ssub.s32 64, 64
      %29 = vsyncadd [#allocation3], %s28
      %s31 = sshll.u32 [#allocation2], 4
      %s32 = int_to_ptr.vmem [resolvable:$true] %s31
      %34 = dma.hbm_to_vmem [thread:$0]  %s2, 64, %s32, [#allocation3]
    $region13: #{tpu_custom_call.1} parent=1 // pred_fallthru
      _
    // Predicated region
    $region14: #{tpu_custom_call.1} parent=1 // pred_check
      _
    $region15: #{tpu_custom_call.1} parent=1 // pred_check_branch
      %36 = sbr.rel (0) target = $region17
    $region16: #{tpu_custom_call.1} parent=1 // pred_region
      _
    $region17: #{tpu_custom_call.1} parent=1 // pred_fallthru
      _
    // Predicated region
    $region18: #{tpu_custom_call.1} parent=1 // pred_check
      _
    $region19: #{tpu_custom_call.1} parent=1 // pred_check_branch
      %38 = sbr.rel (0) target = $region21
    $region20: #{tpu_custom_call.1} parent=1 // pred_region
      _
    $region21: #{tpu_custom_call.1} parent=1 // pred_fallthru
      _
    // Predicated region
    $region22: #{tpu_custom_call.1} parent=1 // pred_check
      _
    $region23: #{tpu_custom_call.1} parent=1 // pred_check_branch
      %40 = sbr.rel (0) target = $region25
    $region24: #{tpu_custom_call.1} parent=1 // pred_region
      _
    $region25: #{tpu_custom_call.1} parent=1 // pred_fallthru
      _
    // Predicated region
    $region26: #{tpu_custom_call.1} parent=1 // pred_check
      _
    $region27: #{tpu_custom_call.1} parent=1 // pred_check_branch
      %42 = sbr.rel (0) target = $region29
    $region28: #{tpu_custom_call.1} parent=1 // pred_region
      _
    $region29: #{tpu_custom_call.1} parent=1 // pred_fallthru
      _
    // Predicated region
    $region30: #{tpu_custom_call.1} parent=1 // pred_check
      _
    $region31: #{tpu_custom_call.1} parent=1 // pred_check_branch
      %44 = sbr.rel (0) target = $region33
    $region32: #{tpu_custom_call.1} parent=1 // pred_region
      _
    $region33: #{tpu_custom_call.1} parent=1 // pred_fallthru
      _
    // Predicated region
    $region34: #{tpu_custom_call.1} parent=1 // pred_check
      _
    $region35: #{tpu_custom_call.1} parent=1 // pred_check_branch
      %46 = sbr.rel (0) target = $region37
    $region36: #{tpu_custom_call.1} parent=1 // pred_region
      _
    $region37: #{tpu_custom_call.1} parent=1 // pred_fallthru
      _
    // Predicated region
    $region38: #{tpu_custom_call.1} parent=1 // pred_check
      _
    $region39: #{tpu_custom_call.1} parent=1 // pred_check_branch
      %48 = sbr.rel (0) target = $region41
    $region40: #{tpu_custom_call.1} parent=1 // pred_region
      _
    $region41: #{tpu_custom_call.1} parent=1 // pred_fallthru
      _
    // Predicated region
    $region42: #{tpu_custom_call.1} parent=1 // pred_check
      _
    $region43: #{tpu_custom_call.1} parent=1 // pred_check_branch
      %50 = sbr.rel (0) target = $region45
    $region44: #{tpu_custom_call.1} parent=1 // pred_region
      _
    $region45: #{tpu_custom_call.1} parent=1 // pred_fallthru
      _
    // Predicated region
    $region46: #{tpu_custom_call.1} parent=1 // pred_check
      _
    $region47: #{tpu_custom_call.1} parent=1 // pred_check_branch
      %52 = sbr.rel (0) target = $region49
    $region48: #{tpu_custom_call.1} parent=1 // pred_region
      %53 = dma.done [#allocation3], 64
    $region49: #{tpu_custom_call.1} parent=1 // pred_fallthru
      _
    %v55 = vld [vmem:[%s1] sm:$0xff]
    %v56 = vld [vmem:[%s1 + $0x8] sm:$0xff]
    %v57 = vld [vmem:[%s1 + $0x10] sm:$0x7]
    %v58 = vld [vmem:[#allocation2] sm:$0xf]
    %v59 = vld [vmem:[%s0] sm:$0xff]
    %v60 = vld [vmem:[%s0 + $0x8] sm:$0xff]
    %v61 = vld [vmem:[%s0 + $0x10] sm:$0xff]
    %v62 = vld [vmem:[%s0 + $0x18] sm:$0xff]
    %v63 = vld [vmem:[%s3] sm:$0xf]
    %v64 = vld [vmem:[%s3 + $0x4] sm:$0xf]
    %v65 = vld [vmem:[%s3 + $0x8] sm:$0xf]
    %v66 = vld [vmem:[%s3 + $0xc] sm:$0xf]
    %v67 = vld [vmem:[%s4] sm:$0xf]
    %v68 = vld [vmem:[%s4 + $0x4] sm:$0xf]
    %v69 = vld [vmem:[%s4 + $0x8] sm:$0xf]
    %v70 = vld [vmem:[%s4 + $0xc] sm:$0xf]
    %v71 = vld [vmem:[%s4 + $0x10] sm:$0xf]
    %v72 = vld [vmem:[%s4 + $0x14] sm:$0xf]
    %v73 = vld [vmem:[%s4 + $0x18] sm:$0xf]
    %v74 = vld [vmem:[%s4 + $0x1c] sm:$0xf]
    %v75 = vld [vmem:[%s4 + $0x20] sm:$0xf]
    %v76 = vld [vmem:[%s4 + $0x24] sm:$0xf]
    %v77 = vld [vmem:[%s4 + $0x28] sm:$0xf]
    %v78 = vld [vmem:[%s4 + $0x2c] sm:$0xf]
    %v79 = vld [vmem:[%s4 + $0x30] sm:$0xf]
    %v80 = vld [vmem:[%s4 + $0x34] sm:$0xf]
    %v81 = vld [vmem:[%s4 + $0x38] sm:$0xf]
    %v82 = vld [vmem:[%s4 + $0x3c] sm:$0xf]
    %vm83 = vcmask 261120
    %v84 = vsel %vm83, %v59, 0.0
    %85 = vadd.xlane.f32.xlu0 %v84
    %v86 = vpop.xlane.xlu0 %85
    %v87 = vsel %vm83, %v60, 0.0
    %88 = vadd.xlane.f32.xlu0 %v87
    %v89 = vpop.xlane.xlu0 %88
    %v90 = vsel %vm83, %v61, 0.0
    %91 = vadd.xlane.f32.xlu0 %v90
    %v92 = vpop.xlane.xlu0 %91
    %v93 = vsel %vm83, %v62, 0.0
    %94 = vadd.xlane.f32.xlu0 %v93
    %v95 = vpop.xlane.xlu0 %94
    %v96 = vrcp.pop 32.0
    %v97 = vmul.f32 %v86, %v96
    %v98 = vmul.f32 %v89, %v96
    %v99 = vmul.f32 %v92, %v96
    %v100 = vmul.f32 %v95, %v96
    %v101 = vsub.f32 %v59, %v97
    %v102 = vsub.f32 %v60, %v98
    %v103 = vsub.f32 %v61, %v99
    %v104 = vsub.f32 %v62, %v100
    %v105 = vmul.f32 %v101, %v101
    %v106 = vmul.f32 %v102, %v102
    %v107 = vmul.f32 %v103, %v103
    %v108 = vmul.f32 %v104, %v104
    %v109 = vsel %vm83, %v105, 0.0
    %110 = vadd.xlane.f32.xlu0 %v109
    %v111 = vpop.xlane.xlu0 %110
    %v112 = vsel %vm83, %v106, 0.0
    %113 = vadd.xlane.f32.xlu0 %v112
    %v114 = vpop.xlane.xlu0 %113
    %v115 = vsel %vm83, %v107, 0.0
    %116 = vadd.xlane.f32.xlu0 %v115
    %v117 = vpop.xlane.xlu0 %116
    %v118 = vsel %vm83, %v108, 0.0
    %119 = vadd.xlane.f32.xlu0 %v118
    %v120 = vpop.xlane.xlu0 %119
    %v121 = vmul.f32 %v111, %v96
    %v122 = vmul.f32 %v114, %v96
    %v123 = vmul.f32 %v117, %v96
    %v124 = vmul.f32 %v120, %v96
    %v125 = vadd.f32 %v121, 1e-05
    %v126 = vadd.f32 %v122, 1e-05
    %v127 = vadd.f32 %v123, 1e-05
    %v128 = vadd.f32 %v124, 1e-05
    %v129 = vrsqrt.pop %v125
    %v130 = vrsqrt.pop %v126
    %v131 = vrsqrt.pop %v127
    %v132 = vrsqrt.pop %v128
    %v133 = vmul.f32 %v101, %v129
    %v134 = vmul.f32 %v102, %v130
    %v135 = vmul.f32 %v103, %v131
    %v136 = vmul.f32 %v104, %v132
    %v137 = vlaneseq
    %v138 = vshrl.u32 %v137, 7
    %v139 = vsub.s32 0, %v138
    %v140 = vrot.slane %v55, %v139
    %v141 = vmul.f32 %v133, %v140
    %v142 = vmul.f32 %v134, %v140
    %v143 = vmul.f32 %v135, %v140
    %v144 = vmul.f32 %v136, %v140
    %v145 = vlaneseq
    %v146 = vshrl.u32 %v145, 7
    %v147 = vsub.s32 1, %v146
    %v148 = vrot.slane %v55, %v147
    %v149 = vadd.f32 %v141, %v148
    %v150 = vadd.f32 %v142, %v148
    %v151 = vadd.f32 %v143, %v148
    %v152 = vadd.f32 %v144, %v148
    %v153 = vpack.c.bf16 %v150, %v149
    %v154 = vpack.c.bf16 %v152, %v151
    %v155 = vlaneseq
    %v156 = vshrl.u32 %v155, 7
    %v157 = vsub.s32 0, %v156
    %v158 = vrot.slane %v58, %v157
    %v163 = vunpack.c.l.b16 %v63
    %v164 = vunpack.c.l.b16 %v64
    %v165 = vunpack.c.l.b16 %v65
    %v166 = vunpack.c.l.b16 %v66
    %v167 = vpack.c.b16 %v164, %v163
    %v168 = vpack.c.b16 %v166, %v165
    %v172 = vsel %vm83, %v153, 0
    %v175 = vsel %vm83, %v154, 0
    %177 = vmatprep.subr.bf16.mxu0 0
    %178 = vmatpush1.bf16.msra.mxu0 %v167
    %179 = vmatprep.subr.bf16.mxu0 0
    %180 = vmatpush1.bf16.msra.mxu0 %v168
    %181 = vmatprep.subr.bf16.mxu0 0
    %182 = vmatpush1.bf16.msra.mxu0 0
    %183 = vmatprep.subr.bf16.mxu0 0
    %184 = vmatpush1.bf16.msra.mxu0 0
    %185 = vmatprep.subr.bf16.mxu0 0
    %186 = vmatpush1.bf16.msra.mxu0 0
    %187 = vmatprep.subr.bf16.mxu0 0
    %188 = vmatpush1.bf16.msra.mxu0 0
    %189 = vmatprep.subr.bf16.mxu0 0
    %190 = vmatpush1.bf16.msra.mxu0 0
    %191 = vmatprep.subr.bf16.mxu0 0
    %192 = vmatpush1.bf16.msra.mxu0 0
    %193 = vmatprep.subr.bf16.mxu0 0
    %194 = vmatpush1.bf16.msra.mxu0 0
    %195 = vmatprep.subr.bf16.mxu0 0
    %196 = vmatpush1.bf16.msra.mxu0 0
    %197 = vmatprep.subr.bf16.mxu0 0
    %198 = vmatpush1.bf16.msra.mxu0 0
    %199 = vmatprep.subr.bf16.mxu0 0
    %200 = vmatpush1.bf16.msra.mxu0 0
    %201 = vmatprep.subr.bf16.mxu0 0
    %202 = vmatpush1.bf16.msra.mxu0 0
    %203 = vmatprep.subr.bf16.mxu0 0
    %204 = vmatpush1.bf16.msra.mxu0 0
    %205 = vmatprep.subr.bf16.mxu0 0
    %206 = vmatpush1.bf16.msra.mxu0 0
    %207 = vmatprep.subr.bf16.mxu0 0
    %208 = vmatpush1.bf16.msra.mxu0 0
    %209 = vmatprep.mubr.bf16.mxu0 0
    %210 = vmatmul.mubr.bf16.gmra.mrb[0].mxu0 %v172
    %v211 = vpop.f32.mrb[0].mxu0
    %v212 = vadd.f32 %v158, %v211
    %v213 = vpop.f32.mrb[0].mxu0
    %v214 = vpop.f32.mrb[0].mxu0
    %v215 = vadd.f32 %v158, %v214
    %v216 = vpop.f32.mrb[0].mxu0
    %217 = vmatprep.mubr.bf16.mxu0 0
    %218 = vmatmul.mubr.bf16.gmra.mrb[0].mxu0 %v175
    %v219 = vpop.f32.mrb[0].mxu0
    %v220 = vadd.f32 %v158, %v219
    %v221 = vpop.f32.mrb[0].mxu0
    %v222 = vpop.f32.mrb[0].mxu0
    %v223 = vadd.f32 %v158, %v222
    %v224 = vpop.f32.mrb[0].mxu0
    %225 = vdwg.mxu0
    %v226 = vxor.u32 %v212, 2147483648
    %v227 = vxor.u32 %v215, 2147483648
    %v228 = vxor.u32 %v220, 2147483648
    %v229 = vxor.u32 %v223, 2147483648
    %v230 = vmul.f32 %v226, 1.442695
    %v231 = vpow.pop %v230
    %v232 = vmul.f32 %v227, 1.442695
    %v233 = vpow.pop %v232
    %v234 = vmul.f32 %v228, 1.442695
    %v235 = vpow.pop %v234
    %v236 = vmul.f32 %v229, 1.442695
    %v237 = vpow.pop %v236
    %v238 = vadd.f32 %v231, 1.0
    %v239 = vadd.f32 %v233, 1.0
    %v240 = vadd.f32 %v235, 1.0
    %v241 = vadd.f32 %v237, 1.0
    %v242 = vrcp.pop %v238
    %v243 = vmul.f32 1.0, %v242
    %v244 = vrcp.pop %v239
    %v245 = vmul.f32 1.0, %v244
    %v246 = vrcp.pop %v240
    %v247 = vmul.f32 1.0, %v246
    %v248 = vrcp.pop %v241
    %v249 = vmul.f32 1.0, %v248
    %v250 = vmul.f32 %v212, %v243
    %v251 = vmul.f32 %v215, %v245
    %v252 = vmul.f32 %v220, %v247
    %v253 = vmul.f32 %v223, %v249
    %v254 = vpack.c.bf16 %v251, %v250
    %v255 = vpack.c.bf16 %v253, %v252
    %v256 = vlaneseq
    %v257 = vshrl.u32 %v256, 7
    %v258 = vsub.s32 2, %v257
    %v259 = vrot.slane %v55, %v258
    %v276 = vunpack.c.l.b16 %v67
    %v277 = vunpack.c.l.b16 %v68
    %v278 = vunpack.c.l.b16 %v69
    %v279 = vunpack.c.l.b16 %v70
    %v280 = vunpack.c.l.b16 %v71
    %v281 = vunpack.c.l.b16 %v72
    %v282 = vunpack.c.l.b16 %v73
    %v283 = vunpack.c.l.b16 %v74
    %v284 = vunpack.c.l.b16 %v75
    %v285 = vunpack.c.l.b16 %v76
    %v286 = vunpack.c.l.b16 %v77
    %v287 = vunpack.c.l.b16 %v78
    %v288 = vunpack.c.l.b16 %v79
    %v289 = vunpack.c.l.b16 %v80
    %v290 = vunpack.c.l.b16 %v81
    %v291 = vunpack.c.l.b16 %v82
    %v292 = vpack.c.b16 %v277, %v276
    %v293 = vpack.c.b16 %v279, %v278
    %v294 = vpack.c.b16 %v281, %v280
    %v295 = vpack.c.b16 %v283, %v282
    %v296 = vpack.c.b16 %v285, %v284
    %v297 = vpack.c.b16 %v287, %v286
    %v298 = vpack.c.b16 %v289, %v288
    %v299 = vpack.c.b16 %v291, %v290
    %308 = vmatprep.subr.bf16.mxu0 0
    %309 = vmatpush1.bf16.msra.mxu0 %v292
    %310 = vmatprep.subr.bf16.mxu0 0
    %311 = vmatpush1.bf16.msra.mxu0 %v293
    %312 = vmatprep.subr.bf16.mxu0 0
    %313 = vmatpush1.bf16.msra.mxu0 %v294
    %314 = vmatprep.subr.bf16.mxu0 0
    %315 = vmatpush1.bf16.msra.mxu0 %v295
    %316 = vmatprep.subr.bf16.mxu0 0
    %317 = vmatpush1.bf16.msra.mxu0 %v296
    %318 = vmatprep.subr.bf16.mxu0 0
    %319 = vmatpush1.bf16.msra.mxu0 %v297
    %320 = vmatprep.subr.bf16.mxu0 0
    %321 = vmatpush1.bf16.msra.mxu0 %v298
    %322 = vmatprep.subr.bf16.mxu0 0
    %323 = vmatpush1.bf16.msra.mxu0 %v299
    %324 = vmatprep.subr.bf16.mxu0 0
    %325 = vmatpush1.bf16.msra.mxu0 0
    %326 = vmatprep.subr.bf16.mxu0 0
    %327 = vmatpush1.bf16.msra.mxu0 0
    %328 = vmatprep.subr.bf16.mxu0 0
    %329 = vmatpush1.bf16.msra.mxu0 0
    %330 = vmatprep.subr.bf16.mxu0 0
    %331 = vmatpush1.bf16.msra.mxu0 0
    %332 = vmatprep.subr.bf16.mxu0 0
    %333 = vmatpush1.bf16.msra.mxu0 0
    %334 = vmatprep.subr.bf16.mxu0 0
    %335 = vmatpush1.bf16.msra.mxu0 0
    %336 = vmatprep.subr.bf16.mxu0 0
    %337 = vmatpush1.bf16.msra.mxu0 0
    %338 = vmatprep.subr.bf16.mxu0 0
    %339 = vmatpush1.bf16.msra.mxu0 0
    %340 = vmatprep.mubr.bf16.mxu0 0
    %341 = vmatmul.mubr.bf16.gmra.mrb[0].mxu0 %v254
    %v342 = vpop.f32.mrb[0].mxu0
    %v343 = vadd.f32 %v259, %v342
    %v344 = vpop.f32.mrb[0].mxu0
    %v345 = vpop.f32.mrb[0].mxu0
    %v346 = vadd.f32 %v259, %v345
    %v347 = vpop.f32.mrb[0].mxu0
    %348 = vmatprep.mubr.bf16.mxu0 0
    %349 = vmatmul.mubr.bf16.gmra.mrb[0].mxu0 %v255
    %v350 = vpop.f32.mrb[0].mxu0
    %v351 = vadd.f32 %v259, %v350
    %v352 = vpop.f32.mrb[0].mxu0
    %v353 = vpop.f32.mrb[0].mxu0
    %v354 = vadd.f32 %v259, %v353
    %v355 = vpop.f32.mrb[0].mxu0
    %356 = vdwg.mxu0
    %v357 = vmul.f32 %v343, 0.5
    %v358 = vmul.f32 %v346, 0.5
    %v359 = vmul.f32 %v351, 0.5
    %v360 = vmul.f32 %v354, 0.5
    %v361 = vadd.f32 %v59, %v357
    %v362 = vadd.f32 %v60, %v358
    %v363 = vadd.f32 %v61, %v359
    %v364 = vadd.f32 %v62, %v360
    %v365 = vsel %vm83, %v361, 0.0
    %366 = vadd.xlane.f32.xlu0 %v365
    %v367 = vpop.xlane.xlu0 %366
    %v368 = vsel %vm83, %v362, 0.0
    %369 = vadd.xlane.f32.xlu0 %v368
    %v370 = vpop.xlane.xlu0 %369
    %v371 = vsel %vm83, %v363, 0.0
    %372 = vadd.xlane.f32.xlu0 %v371
    %v373 = vpop.xlane.xlu0 %372
    %v374 = vsel %vm83, %v364, 0.0
    %375 = vadd.xlane.f32.xlu0 %v374
    %v376 = vpop.xlane.xlu0 %375
    %v377 = vmul.f32 %v367, %v96
    %v378 = vmul.f32 %v370, %v96
    %v379 = vmul.f32 %v373, %v96
    %v380 = vmul.f32 %v376, %v96
    %v381 = vsub.f32 %v361, %v377
    %v382 = vsub.f32 %v362, %v378
    %v383 = vsub.f32 %v363, %v379
    %v384 = vsub.f32 %v364, %v380
    %v385 = vmul.f32 %v381, %v381
    %v386 = vmul.f32 %v382, %v382
    %v387 = vmul.f32 %v383, %v383
    %v388 = vmul.f32 %v384, %v384
    %v389 = vsel %vm83, %v385, 0.0
    %390 = vadd.xlane.f32.xlu0 %v389
    %v391 = vpop.xlane.xlu0 %390
    %v392 = vsel %vm83, %v386, 0.0
    %393 = vadd.xlane.f32.xlu0 %v392
    %v394 = vpop.xlane.xlu0 %393
    %v395 = vsel %vm83, %v387, 0.0
    %396 = vadd.xlane.f32.xlu0 %v395
    %v397 = vpop.xlane.xlu0 %396
    %v398 = vsel %vm83, %v388, 0.0
    %399 = vadd.xlane.f32.xlu0 %v398
    %v400 = vpop.xlane.xlu0 %399
    %v401 = vmul.f32 %v391, %v96
    %v402 = vmul.f32 %v394, %v96
    %v403 = vmul.f32 %v397, %v96
    %v404 = vmul.f32 %v400, %v96
    %v405 = vadd.f32 %v401, 1e-05
    %v406 = vadd.f32 %v402, 1e-05
    %v407 = vadd.f32 %v403, 1e-05
    %v408 = vadd.f32 %v404, 1e-05
    %v409 = vrsqrt.pop %v405
    %v410 = vrsqrt.pop %v406
    %v411 = vrsqrt.pop %v407
    %v412 = vrsqrt.pop %v408
    %v413 = vmul.f32 %v381, %v409
    %v414 = vmul.f32 %v382, %v410
    %v415 = vmul.f32 %v383, %v411
    %v416 = vmul.f32 %v384, %v412
    %v417 = vlaneseq
    %v418 = vshrl.u32 %v417, 7
    %v419 = vsub.s32 3, %v418
    %v420 = vrot.slane %v55, %v419
    %v421 = vmul.f32 %v413, %v420
    %v422 = vmul.f32 %v414, %v420
    %v423 = vmul.f32 %v415, %v420
    %v424 = vmul.f32 %v416, %v420
    %v425 = vlaneseq
    %v426 = vshrl.u32 %v425, 7
    %v427 = vsub.s32 4, %v426
    %v428 = vrot.slane %v55, %v427
    %v429 = vadd.f32 %v421, %v428
    %v430 = vadd.f32 %v422, %v428
    %v431 = vadd.f32 %v423, %v428
    %v432 = vadd.f32 %v424, %v428
    %v433 = vld [vmem:[%s5] sm:$0xf]
    %v434 = vld [vmem:[%s5 + $0x4] sm:$0xf]
    %v435 = vld [vmem:[%s5 + $0x8] sm:$0xf]
    %v436 = vld [vmem:[%s5 + $0xc] sm:$0xf]
    %v437 = vpack.c.bf16 %v430, %v429
    %v438 = vpack.c.bf16 %v432, %v431
    %v439 = vlaneseq
    %v440 = vshrl.u32 %v439, 7
    %v441 = vsub.s32 3, %v440
    %v442 = vrot.slane %v58, %v441
    %v447 = vunpack.c.l.b16 %v433
    %v448 = vunpack.c.l.b16 %v434
    %v449 = vunpack.c.l.b16 %v435
    %v450 = vunpack.c.l.b16 %v436
    %v451 = vpack.c.b16 %v448, %v447
    %v452 = vpack.c.b16 %v450, %v449
    %v456 = vsel %vm83, %v437, 0
    %v459 = vsel %vm83, %v438, 0
    %461 = vmatprep.subr.bf16.mxu0 0
    %462 = vmatpush1.bf16.msra.mxu0 %v451
    %463 = vmatprep.subr.bf16.mxu0 0
    %464 = vmatpush1.bf16.msra.mxu0 %v452
    %465 = vmatprep.subr.bf16.mxu0 0
    %466 = vmatpush1.bf16.msra.mxu0 0
    %467 = vmatprep.subr.bf16.mxu0 0
    %468 = vmatpush1.bf16.msra.mxu0 0
    %469 = vmatprep.subr.bf16.mxu0 0
    %470 = vmatpush1.bf16.msra.mxu0 0
    %471 = vmatprep.subr.bf16.mxu0 0
    %472 = vmatpush1.bf16.msra.mxu0 0
    %473 = vmatprep.subr.bf16.mxu0 0
    %474 = vmatpush1.bf16.msra.mxu0 0
    %475 = vmatprep.subr.bf16.mxu0 0
    %476 = vmatpush1.bf16.msra.mxu0 0
    %477 = vmatprep.subr.bf16.mxu0 0
    %478 = vmatpush1.bf16.msra.mxu0 0
    %479 = vmatprep.subr.bf16.mxu0 0
    %480 = vmatpush1.bf16.msra.mxu0 0
    %481 = vmatprep.subr.bf16.mxu0 0
    %482 = vmatpush1.bf16.msra.mxu0 0
    %483 = vmatprep.subr.bf16.mxu0 0
    %484 = vmatpush1.bf16.msra.mxu0 0
    %485 = vmatprep.subr.bf16.mxu0 0
    %486 = vmatpush1.bf16.msra.mxu0 0
    %487 = vmatprep.subr.bf16.mxu0 0
    %488 = vmatpush1.bf16.msra.mxu0 0
    %489 = vmatprep.subr.bf16.mxu0 0
    %490 = vmatpush1.bf16.msra.mxu0 0
    %491 = vmatprep.subr.bf16.mxu0 0
    %492 = vmatpush1.bf16.msra.mxu0 0
    %493 = vmatprep.mubr.bf16.mxu0 0
    %494 = vmatmul.mubr.bf16.gmra.mrb[0].mxu0 %v456
    %v495 = vpop.f32.mrb[0].mxu0
    %v496 = vadd.f32 %v442, %v495
    %v497 = vpop.f32.mrb[0].mxu0
    %v498 = vpop.f32.mrb[0].mxu0
    %v499 = vadd.f32 %v442, %v498
    %v500 = vpop.f32.mrb[0].mxu0
    %501 = vmatprep.mubr.bf16.mxu0 0
    %502 = vmatmul.mubr.bf16.gmra.mrb[0].mxu0 %v459
    %v503 = vpop.f32.mrb[0].mxu0
    %v504 = vadd.f32 %v442, %v503
    %v505 = vpop.f32.mrb[0].mxu0
    %v506 = vpop.f32.mrb[0].mxu0
    %v507 = vadd.f32 %v442, %v506
    %v508 = vpop.f32.mrb[0].mxu0
    %509 = vdwg.mxu0
    %512 = vrot.lane.b32.xlu0 %v496, 120
    %v513 = vpop.permute.xlu0 %512
    %514 = vrot.lane.b32.xlu0 %v499, 120
    %v515 = vpop.permute.xlu0 %514
    %518 = vrot.lane.b32.xlu0 %v496, 112
    %v519 = vpop.permute.xlu0 %518
    %520 = vrot.lane.b32.xlu0 %v499, 112
    %v521 = vpop.permute.xlu0 %520
    %524 = vrot.lane.b32.xlu0 %v496, 104
    %v525 = vpop.permute.xlu0 %524
    %526 = vrot.lane.b32.xlu0 %v499, 104
    %v527 = vpop.permute.xlu0 %526
    %532 = vrot.lane.b32.xlu0 %v504, 120
    %v533 = vpop.permute.xlu0 %532
    %534 = vrot.lane.b32.xlu0 %v507, 120
    %v535 = vpop.permute.xlu0 %534
    %538 = vrot.lane.b32.xlu0 %v504, 112
    %v539 = vpop.permute.xlu0 %538
    %540 = vrot.lane.b32.xlu0 %v507, 112
    %v541 = vpop.permute.xlu0 %540
    %544 = vrot.lane.b32.xlu0 %v504, 104
    %v545 = vpop.permute.xlu0 %544
    %546 = vrot.lane.b32.xlu0 %v507, 104
    %v547 = vpop.permute.xlu0 %546
    %v550 = vpack.c.bf16 %v499, %v496
    %v551 = vpack.c.bf16 %v515, %v513
    %v552 = vpack.c.bf16 %v521, %v519
    %v553 = vpack.c.bf16 %v527, %v525
    %v554 = vpack.c.bf16 %v507, %v504
    %v555 = vpack.c.bf16 %v535, %v533
    %v556 = vpack.c.bf16 %v541, %v539
    %v557 = vpack.c.bf16 %v547, %v545
    %559 = vrot.lane.b32.xlu0 %v550, 96
    %v560 = vpop.permute.xlu0 %559
    %vm561 = vcmask 64512
    %v563 = vsel %vm561, %v550, 0
    %v566 = vsel %vm561, %v560, 0
    %568 = vmatprep.subr.bf16.mxu0 0
    %569 = vmatpush1.bf16.xpose.msra.mxu0 %v566
    %570 = vmatprep.subr.bf16.mxu0 0
    %571 = vmatpush1.bf16.xpose.msra.mxu0 0
    %572 = vmatprep.subr.bf16.mxu0 0
    %573 = vmatpush1.bf16.xpose.msra.mxu0 0
    %574 = vmatprep.subr.bf16.mxu0 0
    %575 = vmatpush1.bf16.xpose.msra.mxu0 0
    %576 = vmatprep.subr.bf16.mxu0 0
    %577 = vmatpush1.bf16.xpose.msra.mxu0 0
    %578 = vmatprep.subr.bf16.mxu0 0
    %579 = vmatpush1.bf16.xpose.msra.mxu0 0
    %580 = vmatprep.subr.bf16.mxu0 0
    %581 = vmatpush1.bf16.xpose.msra.mxu0 0
    %582 = vmatprep.subr.bf16.mxu0 0
    %583 = vmatpush1.bf16.xpose.msra.mxu0 0
    %584 = vmatprep.subr.bf16.mxu0 0
    %585 = vmatpush1.bf16.xpose.msra.mxu0 0
    %586 = vmatprep.subr.bf16.mxu0 0
    %587 = vmatpush1.bf16.xpose.msra.mxu0 0
    %588 = vmatprep.subr.bf16.mxu0 0
    %589 = vmatpush1.bf16.xpose.msra.mxu0 0
    %590 = vmatprep.subr.bf16.mxu0 0
    %591 = vmatpush1.bf16.xpose.msra.mxu0 0
    %592 = vmatprep.subr.bf16.mxu0 0
    %593 = vmatpush1.bf16.xpose.msra.mxu0 0
    %594 = vmatprep.subr.bf16.mxu0 0
    %595 = vmatpush1.bf16.xpose.msra.mxu0 0
    %596 = vmatprep.subr.bf16.mxu0 0
    %597 = vmatpush1.bf16.xpose.msra.mxu0 0
    %598 = vmatprep.subr.bf16.mxu0 0
    %599 = vmatpush1.bf16.xpose.msra.mxu0 0
    %600 = vmatprep.mubr.bf16.mxu0 0
    %601 = vmatmul.mubr.bf16.gmra.mrb[0].mxu0 %v563
    %v602 = vpop.f32.mrb[0].mxu0
    %v603 = vadd.f32 0.0, %v602
    %v604 = vpop.f32.mrb[0].mxu0
    %v605 = vpop.f32.mrb[0].mxu0
    %v606 = vadd.f32 0.0, %v605
    %v607 = vpop.f32.mrb[0].mxu0
    %608 = vdwg.mxu0
    %610 = vrot.lane.b32.xlu0 %v551, 96
    %v611 = vpop.permute.xlu0 %610
    %v613 = vsel %vm561, %v551, 0
    %v616 = vsel %vm561, %v611, 0
    %618 = vmatprep.subr.bf16.mxu0 0
    %619 = vmatpush1.bf16.xpose.msra.mxu0 %v616
    %620 = vmatprep.subr.bf16.mxu0 0
    %621 = vmatpush1.bf16.xpose.msra.mxu0 0
    %622 = vmatprep.subr.bf16.mxu0 0
    %623 = vmatpush1.bf16.xpose.msra.mxu0 0
    %624 = vmatprep.subr.bf16.mxu0 0
    %625 = vmatpush1.bf16.xpose.msra.mxu0 0
    %626 = vmatprep.subr.bf16.mxu0 0
    %627 = vmatpush1.bf16.xpose.msra.mxu0 0
    %628 = vmatprep.subr.bf16.mxu0 0
    %629 = vmatpush1.bf16.xpose.msra.mxu0 0
    %630 = vmatprep.subr.bf16.mxu0 0
    %631 = vmatpush1.bf16.xpose.msra.mxu0 0
    %632 = vmatprep.subr.bf16.mxu0 0
    %633 = vmatpush1.bf16.xpose.msra.mxu0 0
    %634 = vmatprep.subr.bf16.mxu0 0
    %635 = vmatpush1.bf16.xpose.msra.mxu0 0
    %636 = vmatprep.subr.bf16.mxu0 0
    %637 = vmatpush1.bf16.xpose.msra.mxu0 0
    %638 = vmatprep.subr.bf16.mxu0 0
    %639 = vmatpush1.bf16.xpose.msra.mxu0 0
    %640 = vmatprep.subr.bf16.mxu0 0
    %641 = vmatpush1.bf16.xpose.msra.mxu0 0
    %642 = vmatprep.subr.bf16.mxu0 0
    %643 = vmatpush1.bf16.xpose.msra.mxu0 0
    %644 = vmatprep.subr.bf16.mxu0 0
    %645 = vmatpush1.bf16.xpose.msra.mxu0 0
    %646 = vmatprep.subr.bf16.mxu0 0
    %647 = vmatpush1.bf16.xpose.msra.mxu0 0
    %648 = vmatprep.subr.bf16.mxu0 0
    %649 = vmatpush1.bf16.xpose.msra.mxu0 0
    %650 = vmatprep.mubr.bf16.mxu0 0
    %651 = vmatmul.mubr.bf16.gmra.mrb[0].mxu0 %v613
    %v652 = vpop.f32.mrb[0].mxu0
    %v653 = vadd.f32 0.0, %v652
    %v654 = vpop.f32.mrb[0].mxu0
    %v655 = vpop.f32.mrb[0].mxu0
    %v656 = vadd.f32 0.0, %v655
    %v657 = vpop.f32.mrb[0].mxu0
    %658 = vdwg.mxu0
    %660 = vrot.lane.b32.xlu0 %v552, 96
    %v661 = vpop.permute.xlu0 %660
    %v663 = vsel %vm561, %v552, 0
    %v666 = vsel %vm561, %v661, 0
    %668 = vmatprep.subr.bf16.mxu0 0
    %669 = vmatpush1.bf16.xpose.msra.mxu0 %v666
    %670 = vmatprep.subr.bf16.mxu0 0
    %671 = vmatpush1.bf16.xpose.msra.mxu0 0
    %672 = vmatprep.subr.bf16.mxu0 0
    %673 = vmatpush1.bf16.xpose.msra.mxu0 0
    %674 = vmatprep.subr.bf16.mxu0 0
    %675 = vmatpush1.bf16.xpose.msra.mxu0 0
    %676 = vmatprep.subr.bf16.mxu0 0
    %677 = vmatpush1.bf16.xpose.msra.mxu0 0
    %678 = vmatprep.subr.bf16.mxu0 0
    %679 = vmatpush1.bf16.xpose.msra.mxu0 0
    %680 = vmatprep.subr.bf16.mxu0 0
    %681 = vmatpush1.bf16.xpose.msra.mxu0 0
    %682 = vmatprep.subr.bf16.mxu0 0
    %683 = vmatpush1.bf16.xpose.msra.mxu0 0
    %684 = vmatprep.subr.bf16.mxu0 0
    %685 = vmatpush1.bf16.xpose.msra.mxu0 0
    %686 = vmatprep.subr.bf16.mxu0 0
    %687 = vmatpush1.bf16.xpose.msra.mxu0 0
    %688 = vmatprep.subr.bf16.mxu0 0
    %689 = vmatpush1.bf16.xpose.msra.mxu0 0
    %690 = vmatprep.subr.bf16.mxu0 0
    %691 = vmatpush1.bf16.xpose.msra.mxu0 0
    %692 = vmatprep.subr.bf16.mxu0 0
    %693 = vmatpush1.bf16.xpose.msra.mxu0 0
    %694 = vmatprep.subr.bf16.mxu0 0
    %695 = vmatpush1.bf16.xpose.msra.mxu0 0
    %696 = vmatprep.subr.bf16.mxu0 0
    %697 = vmatpush1.bf16.xpose.msra.mxu0 0
    %698 = vmatprep.subr.bf16.mxu0 0
    %699 = vmatpush1.bf16.xpose.msra.mxu0 0
    %700 = vmatprep.mubr.bf16.mxu0 0
    %701 = vmatmul.mubr.bf16.gmra.mrb[0].mxu0 %v663
    %v702 = vpop.f32.mrb[0].mxu0
    %v703 = vadd.f32 0.0, %v702
    %v704 = vpop.f32.mrb[0].mxu0
    %v705 = vpop.f32.mrb[0].mxu0
    %v706 = vadd.f32 0.0, %v705
    %v707 = vpop.f32.mrb[0].mxu0
    %708 = vdwg.mxu0
    %710 = vrot.lane.b32.xlu0 %v553, 96
    %v711 = vpop.permute.xlu0 %710
    %v713 = vsel %vm561, %v553, 0
    %v716 = vsel %vm561, %v711, 0
    %718 = vmatprep.subr.bf16.mxu0 0
    %719 = vmatpush1.bf16.xpose.msra.mxu0 %v716
    %720 = vmatprep.subr.bf16.mxu0 0
    %721 = vmatpush1.bf16.xpose.msra.mxu0 0
    %722 = vmatprep.subr.bf16.mxu0 0
    %723 = vmatpush1.bf16.xpose.msra.mxu0 0
    %724 = vmatprep.subr.bf16.mxu0 0
    %725 = vmatpush1.bf16.xpose.msra.mxu0 0
    %726 = vmatprep.subr.bf16.mxu0 0
    %727 = vmatpush1.bf16.xpose.msra.mxu0 0
    %728 = vmatprep.subr.bf16.mxu0 0
    %729 = vmatpush1.bf16.xpose.msra.mxu0 0
    %730 = vmatprep.subr.bf16.mxu0 0
    %731 = vmatpush1.bf16.xpose.msra.mxu0 0
    %732 = vmatprep.subr.bf16.mxu0 0
    %733 = vmatpush1.bf16.xpose.msra.mxu0 0
    %734 = vmatprep.subr.bf16.mxu0 0
    %735 = vmatpush1.bf16.xpose.msra.mxu0 0
    %736 = vmatprep.subr.bf16.mxu0 0
    %737 = vmatpush1.bf16.xpose.msra.mxu0 0
    %738 = vmatprep.subr.bf16.mxu0 0
    %739 = vmatpush1.bf16.xpose.msra.mxu0 0
    %740 = vmatprep.subr.bf16.mxu0 0
    %741 = vmatpush1.bf16.xpose.msra.mxu0 0
    %742 = vmatprep.subr.bf16.mxu0 0
    %743 = vmatpush1.bf16.xpose.msra.mxu0 0
    %744 = vmatprep.subr.bf16.mxu0 0
    %745 = vmatpush1.bf16.xpose.msra.mxu0 0
    %746 = vmatprep.subr.bf16.mxu0 0
    %747 = vmatpush1.bf16.xpose.msra.mxu0 0
    %748 = vmatprep.subr.bf16.mxu0 0
    %749 = vmatpush1.bf16.xpose.msra.mxu0 0
    %750 = vmatprep.mubr.bf16.mxu0 0
    %751 = vmatmul.mubr.bf16.gmra.mrb[0].mxu0 %v713
    %v752 = vpop.f32.mrb[0].mxu0
    %v753 = vadd.f32 0.0, %v752
    %v754 = vpop.f32.mrb[0].mxu0
    %v755 = vpop.f32.mrb[0].mxu0
    %v756 = vadd.f32 0.0, %v755
    %v757 = vpop.f32.mrb[0].mxu0
    %758 = vdwg.mxu0
    %760 = vrot.lane.b32.xlu0 %v554, 96
    %v761 = vpop.permute.xlu0 %760
    %v763 = vsel %vm561, %v554, 0
    %v766 = vsel %vm561, %v761, 0
    %768 = vmatprep.subr.bf16.mxu0 0
    %769 = vmatpush1.bf16.xpose.msra.mxu0 %v766
    %770 = vmatprep.subr.bf16.mxu0 0
    %771 = vmatpush1.bf16.xpose.msra.mxu0 0
    %772 = vmatprep.subr.bf16.mxu0 0
    %773 = vmatpush1.bf16.xpose.msra.mxu0 0
    %774 = vmatprep.subr.bf16.mxu0 0
    %775 = vmatpush1.bf16.xpose.msra.mxu0 0
    %776 = vmatprep.subr.bf16.mxu0 0
    %777 = vmatpush1.bf16.xpose.msra.mxu0 0
    %778 = vmatprep.subr.bf16.mxu0 0
    %779 = vmatpush1.bf16.xpose.msra.mxu0 0
    %780 = vmatprep.subr.bf16.mxu0 0
    %781 = vmatpush1.bf16.xpose.msra.mxu0 0
    %782 = vmatprep.subr.bf16.mxu0 0
    %783 = vmatpush1.bf16.xpose.msra.mxu0 0
    %784 = vmatprep.subr.bf16.mxu0 0
    %785 = vmatpush1.bf16.xpose.msra.mxu0 0
    %786 = vmatprep.subr.bf16.mxu0 0
    %787 = vmatpush1.bf16.xpose.msra.mxu0 0
    %788 = vmatprep.subr.bf16.mxu0 0
    %789 = vmatpush1.bf16.xpose.msra.mxu0 0
    %790 = vmatprep.subr.bf16.mxu0 0
    %791 = vmatpush1.bf16.xpose.msra.mxu0 0
    %792 = vmatprep.subr.bf16.mxu0 0
    %793 = vmatpush1.bf16.xpose.msra.mxu0 0
    %794 = vmatprep.subr.bf16.mxu0 0
    %795 = vmatpush1.bf16.xpose.msra.mxu0 0
    %796 = vmatprep.subr.bf16.mxu0 0
    %797 = vmatpush1.bf16.xpose.msra.mxu0 0
    %798 = vmatprep.subr.bf16.mxu0 0
    %799 = vmatpush1.bf16.xpose.msra.mxu0 0
    %800 = vmatprep.mubr.bf16.mxu0 0
    %801 = vmatmul.mubr.bf16.gmra.mrb[0].mxu0 %v763
    %v802 = vpop.f32.mrb[0].mxu0
    %v803 = vadd.f32 0.0, %v802
    %v804 = vpop.f32.mrb[0].mxu0
    %v805 = vpop.f32.mrb[0].mxu0
    %v806 = vadd.f32 0.0, %v805
    %v807 = vpop.f32.mrb[0].mxu0
    %808 = vdwg.mxu0
    %810 = vrot.lane.b32.xlu0 %v555, 96
    %v811 = vpop.permute.xlu0 %810
    %v813 = vsel %vm561, %v555, 0
    %v816 = vsel %vm561, %v811, 0
    %818 = vmatprep.subr.bf16.mxu0 0
    %819 = vmatpush1.bf16.xpose.msra.mxu0 %v816
    %820 = vmatprep.subr.bf16.mxu0 0
    %821 = vmatpush1.bf16.xpose.msra.mxu0 0
    %822 = vmatprep.subr.bf16.mxu0 0
    %823 = vmatpush1.bf16.xpose.msra.mxu0 0
    %824 = vmatprep.subr.bf16.mxu0 0
    %825 = vmatpush1.bf16.xpose.msra.mxu0 0
    %826 = vmatprep.subr.bf16.mxu0 0
    %827 = vmatpush1.bf16.xpose.msra.mxu0 0
    %828 = vmatprep.subr.bf16.mxu0 0
    %829 = vmatpush1.bf16.xpose.msra.mxu0 0
    %830 = vmatprep.subr.bf16.mxu0 0
    %831 = vmatpush1.bf16.xpose.msra.mxu0 0
    %832 = vmatprep.subr.bf16.mxu0 0
    %833 = vmatpush1.bf16.xpose.msra.mxu0 0
    %834 = vmatprep.subr.bf16.mxu0 0
    %835 = vmatpush1.bf16.xpose.msra.mxu0 0
    %836 = vmatprep.subr.bf16.mxu0 0
    %837 = vmatpush1.bf16.xpose.msra.mxu0 0
    %838 = vmatprep.subr.bf16.mxu0 0
    %839 = vmatpush1.bf16.xpose.msra.mxu0 0
    %840 = vmatprep.subr.bf16.mxu0 0
    %841 = vmatpush1.bf16.xpose.msra.mxu0 0
    %842 = vmatprep.subr.bf16.mxu0 0
    %843 = vmatpush1.bf16.xpose.msra.mxu0 0
    %844 = vmatprep.subr.bf16.mxu0 0
    %845 = vmatpush1.bf16.xpose.msra.mxu0 0
    %846 = vmatprep.subr.bf16.mxu0 0
    %847 = vmatpush1.bf16.xpose.msra.mxu0 0
    %848 = vmatprep.subr.bf16.mxu0 0
    %849 = vmatpush1.bf16.xpose.msra.mxu0 0
    %850 = vmatprep.mubr.bf16.mxu0 0
    %851 = vmatmul.mubr.bf16.gmra.mrb[0].mxu0 %v813
    %v852 = vpop.f32.mrb[0].mxu0
    %v853 = vadd.f32 0.0, %v852
    %v854 = vpop.f32.mrb[0].mxu0
    %v855 = vpop.f32.mrb[0].mxu0
    %v856 = vadd.f32 0.0, %v855
    %v857 = vpop.f32.mrb[0].mxu0
    %858 = vdwg.mxu0
    %860 = vrot.lane.b32.xlu0 %v556, 96
    %v861 = vpop.permute.xlu0 %860
    %v863 = vsel %vm561, %v556, 0
    %v866 = vsel %vm561, %v861, 0
    %868 = vmatprep.subr.bf16.mxu0 0
    %869 = vmatpush1.bf16.xpose.msra.mxu0 %v866
    %870 = vmatprep.subr.bf16.mxu0 0
    %871 = vmatpush1.bf16.xpose.msra.mxu0 0
    %872 = vmatprep.subr.bf16.mxu0 0
    %873 = vmatpush1.bf16.xpose.msra.mxu0 0
    %874 = vmatprep.subr.bf16.mxu0 0
    %875 = vmatpush1.bf16.xpose.msra.mxu0 0
    %876 = vmatprep.subr.bf16.mxu0 0
    %877 = vmatpush1.bf16.xpose.msra.mxu0 0
    %878 = vmatprep.subr.bf16.mxu0 0
    %879 = vmatpush1.bf16.xpose.msra.mxu0 0
    %880 = vmatprep.subr.bf16.mxu0 0
    %881 = vmatpush1.bf16.xpose.msra.mxu0 0
    %882 = vmatprep.subr.bf16.mxu0 0
    %883 = vmatpush1.bf16.xpose.msra.mxu0 0
    %884 = vmatprep.subr.bf16.mxu0 0
    %885 = vmatpush1.bf16.xpose.msra.mxu0 0
    %886 = vmatprep.subr.bf16.mxu0 0
    %887 = vmatpush1.bf16.xpose.msra.mxu0 0
    %888 = vmatprep.subr.bf16.mxu0 0
    %889 = vmatpush1.bf16.xpose.msra.mxu0 0
    %890 = vmatprep.subr.bf16.mxu0 0
    %891 = vmatpush1.bf16.xpose.msra.mxu0 0
    %892 = vmatprep.subr.bf16.mxu0 0
    %893 = vmatpush1.bf16.xpose.msra.mxu0 0
    %894 = vmatprep.subr.bf16.mxu0 0
    %895 = vmatpush1.bf16.xpose.msra.mxu0 0
    %896 = vmatprep.subr.bf16.mxu0 0
    %897 = vmatpush1.bf16.xpose.msra.mxu0 0
    %898 = vmatprep.subr.bf16.mxu0 0
    %899 = vmatpush1.bf16.xpose.msra.mxu0 0
    %900 = vmatprep.mubr.bf16.mxu0 0
    %901 = vmatmul.mubr.bf16.gmra.mrb[0].mxu0 %v863
    %v902 = vpop.f32.mrb[0].mxu0
    %v903 = vadd.f32 0.0, %v902
    %v904 = vpop.f32.mrb[0].mxu0
    %v905 = vpop.f32.mrb[0].mxu0
    %v906 = vadd.f32 0.0, %v905
    %v907 = vpop.f32.mrb[0].mxu0
    %908 = vdwg.mxu0
    %910 = vrot.lane.b32.xlu0 %v557, 96
    %v911 = vpop.permute.xlu0 %910
    %v913 = vsel %vm561, %v557, 0
    %v916 = vsel %vm561, %v911, 0
    %918 = vmatprep.subr.bf16.mxu0 0
    %919 = vmatpush1.bf16.xpose.msra.mxu0 %v916
    %920 = vmatprep.subr.bf16.mxu0 0
    %921 = vmatpush1.bf16.xpose.msra.mxu0 0
    %922 = vmatprep.subr.bf16.mxu0 0
    %923 = vmatpush1.bf16.xpose.msra.mxu0 0
    %924 = vmatprep.subr.bf16.mxu0 0
    %925 = vmatpush1.bf16.xpose.msra.mxu0 0
    %926 = vmatprep.subr.bf16.mxu0 0
    %927 = vmatpush1.bf16.xpose.msra.mxu0 0
    %928 = vmatprep.subr.bf16.mxu0 0
    %929 = vmatpush1.bf16.xpose.msra.mxu0 0
    %930 = vmatprep.subr.bf16.mxu0 0
    %931 = vmatpush1.bf16.xpose.msra.mxu0 0
    %932 = vmatprep.subr.bf16.mxu0 0
    %933 = vmatpush1.bf16.xpose.msra.mxu0 0
    %934 = vmatprep.subr.bf16.mxu0 0
    %935 = vmatpush1.bf16.xpose.msra.mxu0 0
    %936 = vmatprep.subr.bf16.mxu0 0
    %937 = vmatpush1.bf16.xpose.msra.mxu0 0
    %938 = vmatprep.subr.bf16.mxu0 0
    %939 = vmatpush1.bf16.xpose.msra.mxu0 0
    %940 = vmatprep.subr.bf16.mxu0 0
    %941 = vmatpush1.bf16.xpose.msra.mxu0 0
    %942 = vmatprep.subr.bf16.mxu0 0
    %943 = vmatpush1.bf16.xpose.msra.mxu0 0
    %944 = vmatprep.subr.bf16.mxu0 0
    %945 = vmatpush1.bf16.xpose.msra.mxu0 0
    %946 = vmatprep.subr.bf16.mxu0 0
    %947 = vmatpush1.bf16.xpose.msra.mxu0 0
    %948 = vmatprep.subr.bf16.mxu0 0
    %949 = vmatpush1.bf16.xpose.msra.mxu0 0
    %950 = vmatprep.mubr.bf16.mxu0 0
    %951 = vmatmul.mubr.bf16.gmra.mrb[0].mxu0 %v913
    %v952 = vpop.f32.mrb[0].mxu0
    %v953 = vadd.f32 0.0, %v952
    %v954 = vpop.f32.mrb[0].mxu0
    %v955 = vpop.f32.mrb[0].mxu0
    %v956 = vadd.f32 0.0, %v955
    %v957 = vpop.f32.mrb[0].mxu0
    %958 = vdwg.mxu0
    %vm959 = vcmask 130048
    %v960 = vsel %vm959, %v603, -inf
    %961 = vmax.xlane.f32.xlu0 %v960
    %v962 = vpop.xlane.xlu0 %961
    %v963 = vsel %vm959, %v606, -inf
    %964 = vmax.xlane.f32.xlu0 %v963
    %v965 = vpop.xlane.xlu0 %964
    %v966 = vsel %vm959, %v653, -inf
    %967 = vmax.xlane.f32.xlu0 %v966
    %v968 = vpop.xlane.xlu0 %967
    %v969 = vsel %vm959, %v656, -inf
    %970 = vmax.xlane.f32.xlu0 %v969
    %v971 = vpop.xlane.xlu0 %970
    %v972 = vsel %vm959, %v703, -inf
    %973 = vmax.xlane.f32.xlu0 %v972
    %v974 = vpop.xlane.xlu0 %973
    %v975 = vsel %vm959, %v706, -inf
    %976 = vmax.xlane.f32.xlu0 %v975
    %v977 = vpop.xlane.xlu0 %976
    %v978 = vsel %vm959, %v753, -inf
    %979 = vmax.xlane.f32.xlu0 %v978
    %v980 = vpop.xlane.xlu0 %979
    %v981 = vsel %vm959, %v756, -inf
    %982 = vmax.xlane.f32.xlu0 %v981
    %v983 = vpop.xlane.xlu0 %982
    %v984 = vsel %vm959, %v803, -inf
    %985 = vmax.xlane.f32.xlu0 %v984
    %v986 = vpop.xlane.xlu0 %985
    %v987 = vsel %vm959, %v806, -inf
    %988 = vmax.xlane.f32.xlu0 %v987
    %v989 = vpop.xlane.xlu0 %988
    %v990 = vsel %vm959, %v853, -inf
    %991 = vmax.xlane.f32.xlu0 %v990
    %v992 = vpop.xlane.xlu0 %991
    %v993 = vsel %vm959, %v856, -inf
    %994 = vmax.xlane.f32.xlu0 %v993
    %v995 = vpop.xlane.xlu0 %994
    %v996 = vsel %vm959, %v903, -inf
    %997 = vmax.xlane.f32.xlu0 %v996
    %v998 = vpop.xlane.xlu0 %997
    %v999 = vsel %vm959, %v906, -inf
    %1000 = vmax.xlane.f32.xlu0 %v999
    %v1001 = vpop.xlane.xlu0 %1000
    %v1002 = vsel %vm959, %v953, -inf
    %1003 = vmax.xlane.f32.xlu0 %v1002
    %v1004 = vpop.xlane.xlu0 %1003
    %v1005 = vsel %vm959, %v956, -inf
    %1006 = vmax.xlane.f32.xlu0 %v1005
    %v1007 = vpop.xlane.xlu0 %1006
    %v1008 = vsub.f32 %v603, %v962
    %v1009 = vsub.f32 %v606, %v965
    %v1010 = vsub.f32 %v653, %v968
    %v1011 = vsub.f32 %v656, %v971
    %v1012 = vsub.f32 %v703, %v974
    %v1013 = vsub.f32 %v706, %v977
    %v1014 = vsub.f32 %v753, %v980
    %v1015 = vsub.f32 %v756, %v983
    %v1016 = vsub.f32 %v803, %v986
    %v1017 = vsub.f32 %v806, %v989
    %v1018 = vsub.f32 %v853, %v992
    %v1019 = vsub.f32 %v856, %v995
    %v1020 = vsub.f32 %v903, %v998
    %v1021 = vsub.f32 %v906, %v1001
    %v1022 = vsub.f32 %v953, %v1004
    %v1023 = vsub.f32 %v956, %v1007
    %v1024 = vmul.f32 %v1008, 1.442695
    %v1025 = vpow.pop %v1024
    %v1026 = vmul.f32 %v1009, 1.442695
    %v1027 = vpow.pop %v1026
    %v1028 = vmul.f32 %v1010, 1.442695
    %v1029 = vpow.pop %v1028
    %v1030 = vmul.f32 %v1011, 1.442695
    %v1031 = vpow.pop %v1030
    %v1032 = vmul.f32 %v1012, 1.442695
    %v1033 = vpow.pop %v1032
    %v1034 = vmul.f32 %v1013, 1.442695
    %v1035 = vpow.pop %v1034
    %v1036 = vmul.f32 %v1014, 1.442695
    %v1037 = vpow.pop %v1036
    %v1038 = vmul.f32 %v1015, 1.442695
    %v1039 = vpow.pop %v1038
    %v1040 = vmul.f32 %v1016, 1.442695
    %v1041 = vpow.pop %v1040
    %v1042 = vmul.f32 %v1017, 1.442695
    %v1043 = vpow.pop %v1042
    %v1044 = vmul.f32 %v1018, 1.442695
    %v1045 = vpow.pop %v1044
    %v1046 = vmul.f32 %v1019, 1.442695
    %v1047 = vpow.pop %v1046
    %v1048 = vmul.f32 %v1020, 1.442695
    %v1049 = vpow.pop %v1048
    %v1050 = vmul.f32 %v1021, 1.442695
    %v1051 = vpow.pop %v1050
    %v1052 = vmul.f32 %v1022, 1.442695
    %v1053 = vpow.pop %v1052
    %v1054 = vmul.f32 %v1023, 1.442695
    %v1055 = vpow.pop %v1054
    %v1056 = vsel %vm959, %v1025, 0.0
    %1057 = vadd.xlane.f32.xlu0 %v1056
    %v1058 = vpop.xlane.xlu0 %1057
    %v1059 = vsel %vm959, %v1027, 0.0
    %1060 = vadd.xlane.f32.xlu0 %v1059
    %v1061 = vpop.xlane.xlu0 %1060
    %v1062 = vsel %vm959, %v1029, 0.0
    %1063 = vadd.xlane.f32.xlu0 %v1062
    %v1064 = vpop.xlane.xlu0 %1063
    %v1065 = vsel %vm959, %v1031, 0.0
    %1066 = vadd.xlane.f32.xlu0 %v1065
    %v1067 = vpop.xlane.xlu0 %1066
    %v1068 = vsel %vm959, %v1033, 0.0
    %1069 = vadd.xlane.f32.xlu0 %v1068
    %v1070 = vpop.xlane.xlu0 %1069
    %v1071 = vsel %vm959, %v1035, 0.0
    %1072 = vadd.xlane.f32.xlu0 %v1071
    %v1073 = vpop.xlane.xlu0 %1072
    %v1074 = vsel %vm959, %v1037, 0.0
    %1075 = vadd.xlane.f32.xlu0 %v1074
    %v1076 = vpop.xlane.xlu0 %1075
    %v1077 = vsel %vm959, %v1039, 0.0
    %1078 = vadd.xlane.f32.xlu0 %v1077
    %v1079 = vpop.xlane.xlu0 %1078
    %v1080 = vsel %vm959, %v1041, 0.0
    %1081 = vadd.xlane.f32.xlu0 %v1080
    %v1082 = vpop.xlane.xlu0 %1081
    %v1083 = vsel %vm959, %v1043, 0.0
    %1084 = vadd.xlane.f32.xlu0 %v1083
    %v1085 = vpop.xlane.xlu0 %1084
    %v1086 = vsel %vm959, %v1045, 0.0
    %1087 = vadd.xlane.f32.xlu0 %v1086
    %v1088 = vpop.xlane.xlu0 %1087
    %v1089 = vsel %vm959, %v1047, 0.0
    %1090 = vadd.xlane.f32.xlu0 %v1089
    %v1091 = vpop.xlane.xlu0 %1090
    %v1092 = vsel %vm959, %v1049, 0.0
    %1093 = vadd.xlane.f32.xlu0 %v1092
    %v1094 = vpop.xlane.xlu0 %1093
    %v1095 = vsel %vm959, %v1051, 0.0
    %1096 = vadd.xlane.f32.xlu0 %v1095
    %v1097 = vpop.xlane.xlu0 %1096
    %v1098 = vsel %vm959, %v1053, 0.0
    %1099 = vadd.xlane.f32.xlu0 %v1098
    %v1100 = vpop.xlane.xlu0 %1099
    %v1101 = vsel %vm959, %v1055, 0.0
    %1102 = vadd.xlane.f32.xlu0 %v1101
    %v1103 = vpop.xlane.xlu0 %1102
    %v1104 = vrcp.pop %v1058
    %v1105 = vrcp.pop %v1061
    %v1106 = vrcp.pop %v1064
    %v1107 = vrcp.pop %v1067
    %v1108 = vrcp.pop %v1070
    %v1109 = vrcp.pop %v1073
    %v1110 = vrcp.pop %v1076
    %v1111 = vrcp.pop %v1079
    %v1112 = vrcp.pop %v1082
    %v1113 = vrcp.pop %v1085
    %v1114 = vrcp.pop %v1088
    %v1115 = vrcp.pop %v1091
    %v1116 = vrcp.pop %v1094
    %v1117 = vrcp.pop %v1097
    %v1118 = vrcp.pop %v1100
    %v1119 = vrcp.pop %v1103
    %v1120 = vmul.f32 %v1025, %v1104
    %v1121 = vmul.f32 %v1027, %v1105
    %v1122 = vmul.f32 %v1029, %v1106
    %v1123 = vmul.f32 %v1031, %v1107
    %v1124 = vmul.f32 %v1033, %v1108
    %v1125 = vmul.f32 %v1035, %v1109
    %v1126 = vmul.f32 %v1037, %v1110
    %v1127 = vmul.f32 %v1039, %v1111
    %v1128 = vmul.f32 %v1041, %v1112
    %v1129 = vmul.f32 %v1043, %v1113
    %v1130 = vmul.f32 %v1045, %v1114
    %v1131 = vmul.f32 %v1047, %v1115
    %v1132 = vmul.f32 %v1049, %v1116
    %v1133 = vmul.f32 %v1051, %v1117
    %v1134 = vmul.f32 %v1053, %v1118
    %v1135 = vmul.f32 %v1055, %v1119
    %v1136 = vpack.c.bf16 %v1121, %v1120
    %v1137 = vpack.c.bf16 %v1123, %v1122
    %v1138 = vpack.c.bf16 %v1125, %v1124
    %v1139 = vpack.c.bf16 %v1127, %v1126
    %v1140 = vpack.c.bf16 %v1129, %v1128
    %v1141 = vpack.c.bf16 %v1131, %v1130
    %v1142 = vpack.c.bf16 %v1133, %v1132
    %v1143 = vpack.c.bf16 %v1135, %v1134
    %v1152 = vunpack.c.l.b16 %v1136
    %v1153 = vunpack.c.h.b16 %v1136
    %v1154 = vunpack.c.l.b16 %v1137
    %v1155 = vunpack.c.h.b16 %v1137
    %v1156 = vunpack.c.l.b16 %v1138
    %v1157 = vunpack.c.h.b16 %v1138
    %v1158 = vunpack.c.l.b16 %v1139
    %v1159 = vunpack.c.h.b16 %v1139
    %v1160 = vunpack.c.l.b16 %v1140
    %v1161 = vunpack.c.h.b16 %v1140
    %v1162 = vunpack.c.l.b16 %v1141
    %v1163 = vunpack.c.h.b16 %v1141
    %v1164 = vunpack.c.l.b16 %v1142
    %v1165 = vunpack.c.h.b16 %v1142
    %v1166 = vunpack.c.l.b16 %v1143
    %v1167 = vunpack.c.h.b16 %v1143
    %v1168 = vpack.c.b16 %v1152, %v1152
    %v1169 = vpack.c.b16 %v1153, %v1153
    %v1170 = vpack.c.b16 %v1154, %v1154
    %v1171 = vpack.c.b16 %v1155, %v1155
    %v1172 = vpack.c.b16 %v1156, %v1156
    %v1173 = vpack.c.b16 %v1157, %v1157
    %v1174 = vpack.c.b16 %v1158, %v1158
    %v1175 = vpack.c.b16 %v1159, %v1159
    %v1176 = vpack.c.b16 %v1160, %v1160
    %v1177 = vpack.c.b16 %v1161, %v1161
    %v1178 = vpack.c.b16 %v1162, %v1162
    %v1179 = vpack.c.b16 %v1163, %v1163
    %v1180 = vpack.c.b16 %v1164, %v1164
    %v1181 = vpack.c.b16 %v1165, %v1165
    %v1182 = vpack.c.b16 %v1166, %v1166
    %v1183 = vpack.c.b16 %v1167, %v1167
    %vm1200 = vcmask 125952
    %1201 = vst.msk [vmem:[#allocation6] sm:$0xf] %vm1200, %v1168
    %1202 = vst.msk [vmem:[#allocation6 + $0x4] sm:$0xf] %vm1200, %v1169
    %1203 = vst.msk [vmem:[#allocation6 + $0x8] sm:$0xf] %vm1200, %v1170
    %1204 = vst.msk [vmem:[#allocation6 + $0xc] sm:$0xf] %vm1200, %v1171
    %1205 = vst.msk [vmem:[#allocation6 + $0x10] sm:$0xf] %vm1200, %v1172
    %1206 = vst.msk [vmem:[#allocation6 + $0x14] sm:$0xf] %vm1200, %v1173
    %1207 = vst.msk [vmem:[#allocation6 + $0x18] sm:$0xf] %vm1200, %v1174
    %1208 = vst.msk [vmem:[#allocation6 + $0x1c] sm:$0xf] %vm1200, %v1175
    %1209 = vst.msk [vmem:[#allocation6 + $0x20] sm:$0xf] %vm1200, %v1176
    %1210 = vst.msk [vmem:[#allocation6 + $0x24] sm:$0xf] %vm1200, %v1177
    %1211 = vst.msk [vmem:[#allocation6 + $0x28] sm:$0xf] %vm1200, %v1178
    %1212 = vst.msk [vmem:[#allocation6 + $0x2c] sm:$0xf] %vm1200, %v1179
    %1213 = vst.msk [vmem:[#allocation6 + $0x30] sm:$0xf] %vm1200, %v1180
    %1214 = vst.msk [vmem:[#allocation6 + $0x34] sm:$0xf] %vm1200, %v1181
    %1215 = vst.msk [vmem:[#allocation6 + $0x38] sm:$0xf] %vm1200, %v1182
    %1216 = vst.msk [vmem:[#allocation6 + $0x3c] sm:$0xf] %vm1200, %v1183
    %1217 = vrot.lane.b32.xlu0 %v550, 64
    %v1218 = vpop.permute.xlu0 %1217
    %v1221 = vsel %vm959, %v1136, 0
    %1223 = vmatprep.subr.bf16.mxu0 0
    %1224 = vmatpush1.bf16.msra.mxu0 %v1218
    %1225 = vmatprep.subr.bf16.mxu0 0
    %1226 = vmatpush1.bf16.msra.mxu0 0
    %1227 = vmatprep.subr.bf16.mxu0 0
    %1228 = vmatpush1.bf16.msra.mxu0 0
    %1229 = vmatprep.subr.bf16.mxu0 0
    %1230 = vmatpush1.bf16.msra.mxu0 0
    %1231 = vmatprep.subr.bf16.mxu0 0
    %1232 = vmatpush1.bf16.msra.mxu0 0
    %1233 = vmatprep.subr.bf16.mxu0 0
    %1234 = vmatpush1.bf16.msra.mxu0 0
    %1235 = vmatprep.subr.bf16.mxu0 0
    %1236 = vmatpush1.bf16.msra.mxu0 0
    %1237 = vmatprep.subr.bf16.mxu0 0
    %1238 = vmatpush1.bf16.msra.mxu0 0
    %1239 = vmatprep.subr.bf16.mxu0 0
    %1240 = vmatpush1.bf16.msra.mxu0 0
    %1241 = vmatprep.subr.bf16.mxu0 0
    %1242 = vmatpush1.bf16.msra.mxu0 0
    %1243 = vmatprep.subr.bf16.mxu0 0
    %1244 = vmatpush1.bf16.msra.mxu0 0
    %1245 = vmatprep.subr.bf16.mxu0 0
    %1246 = vmatpush1.bf16.msra.mxu0 0
    %1247 = vmatprep.subr.bf16.mxu0 0
    %1248 = vmatpush1.bf16.msra.mxu0 0
    %1249 = vmatprep.subr.bf16.mxu0 0
    %1250 = vmatpush1.bf16.msra.mxu0 0
    %1251 = vmatprep.subr.bf16.mxu0 0
    %1252 = vmatpush1.bf16.msra.mxu0 0
    %1253 = vmatprep.subr.bf16.mxu0 0
    %1254 = vmatpush1.bf16.msra.mxu0 0
    %1255 = vmatprep.mubr.bf16.mxu0 0
    %1256 = vmatmul.mubr.bf16.gmra.mrb[0].mxu0 %v1221
    %v1257 = vpop.f32.mrb[0].mxu0
    %v1258 = vadd.f32 0.0, %v1257
    %v1259 = vpop.f32.mrb[0].mxu0
    %v1260 = vpop.f32.mrb[0].mxu0
    %v1261 = vadd.f32 0.0, %v1260
    %v1262 = vpop.f32.mrb[0].mxu0
    %1263 = vdwg.mxu0
    %1264 = vrot.lane.b32.xlu0 %v551, 64
    %v1265 = vpop.permute.xlu0 %1264
    %v1268 = vsel %vm959, %v1137, 0
    %1270 = vmatprep.subr.bf16.mxu0 0
    %1271 = vmatpush1.bf16.msra.mxu0 %v1265
    %1272 = vmatprep.subr.bf16.mxu0 0
    %1273 = vmatpush1.bf16.msra.mxu0 0
    %1274 = vmatprep.subr.bf16.mxu0 0
    %1275 = vmatpush1.bf16.msra.mxu0 0
    %1276 = vmatprep.subr.bf16.mxu0 0
    %1277 = vmatpush1.bf16.msra.mxu0 0
    %1278 = vmatprep.subr.bf16.mxu0 0
    %1279 = vmatpush1.bf16.msra.mxu0 0
    %1280 = vmatprep.subr.bf16.mxu0 0
    %1281 = vmatpush1.bf16.msra.mxu0 0
    %1282 = vmatprep.subr.bf16.mxu0 0
    %1283 = vmatpush1.bf16.msra.mxu0 0
    %1284 = vmatprep.subr.bf16.mxu0 0
    %1285 = vmatpush1.bf16.msra.mxu0 0
    %1286 = vmatprep.subr.bf16.mxu0 0
    %1287 = vmatpush1.bf16.msra.mxu0 0
    %1288 = vmatprep.subr.bf16.mxu0 0
    %1289 = vmatpush1.bf16.msra.mxu0 0
    %1290 = vmatprep.subr.bf16.mxu0 0
    %1291 = vmatpush1.bf16.msra.mxu0 0
    %1292 = vmatprep.subr.bf16.mxu0 0
    %1293 = vmatpush1.bf16.msra.mxu0 0
    %1294 = vmatprep.subr.bf16.mxu0 0
    %1295 = vmatpush1.bf16.msra.mxu0 0
    %1296 = vmatprep.subr.bf16.mxu0 0
    %1297 = vmatpush1.bf16.msra.mxu0 0
    %1298 = vmatprep.subr.bf16.mxu0 0
    %1299 = vmatpush1.bf16.msra.mxu0 0
    %1300 = vmatprep.subr.bf16.mxu0 0
    %1301 = vmatpush1.bf16.msra.mxu0 0
    %1302 = vmatprep.mubr.bf16.mxu0 0
    %1303 = vmatmul.mubr.bf16.gmra.mrb[0].mxu0 %v1268
    %v1304 = vpop.f32.mrb[0].mxu0
    %v1305 = vadd.f32 0.0, %v1304
    %v1306 = vpop.f32.mrb[0].mxu0
    %v1307 = vpop.f32.mrb[0].mxu0
    %v1308 = vadd.f32 0.0, %v1307
    %v1309 = vpop.f32.mrb[0].mxu0
    %1310 = vdwg.mxu0
    %1311 = vrot.lane.b32.xlu0 %v552, 64
    %v1312 = vpop.permute.xlu0 %1311
    %v1315 = vsel %vm959, %v1138, 0
    %1317 = vmatprep.subr.bf16.mxu0 0
    %1318 = vmatpush1.bf16.msra.mxu0 %v1312
    %1319 = vmatprep.subr.bf16.mxu0 0
    %1320 = vmatpush1.bf16.msra.mxu0 0
    %1321 = vmatprep.subr.bf16.mxu0 0
    %1322 = vmatpush1.bf16.msra.mxu0 0
    %1323 = vmatprep.subr.bf16.mxu0 0
    %1324 = vmatpush1.bf16.msra.mxu0 0
    %1325 = vmatprep.subr.bf16.mxu0 0
    %1326 = vmatpush1.bf16.msra.mxu0 0
    %1327 = vmatprep.subr.bf16.mxu0 0
    %1328 = vmatpush1.bf16.msra.mxu0 0
    %1329 = vmatprep.subr.bf16.mxu0 0
    %1330 = vmatpush1.bf16.msra.mxu0 0
    %1331 = vmatprep.subr.bf16.mxu0 0
    %1332 = vmatpush1.bf16.msra.mxu0 0
    %1333 = vmatprep.subr.bf16.mxu0 0
    %1334 = vmatpush1.bf16.msra.mxu0 0
    %1335 = vmatprep.subr.bf16.mxu0 0
    %1336 = vmatpush1.bf16.msra.mxu0 0
    %1337 = vmatprep.subr.bf16.mxu0 0
    %1338 = vmatpush1.bf16.msra.mxu0 0
    %1339 = vmatprep.subr.bf16.mxu0 0
    %1340 = vmatpush1.bf16.msra.mxu0 0
    %1341 = vmatprep.subr.bf16.mxu0 0
    %1342 = vmatpush1.bf16.msra.mxu0 0
    %1343 = vmatprep.subr.bf16.mxu0 0
    %1344 = vmatpush1.bf16.msra.mxu0 0
    %1345 = vmatprep.subr.bf16.mxu0 0
    %1346 = vmatpush1.bf16.msra.mxu0 0
    %1347 = vmatprep.subr.bf16.mxu0 0
    %1348 = vmatpush1.bf16.msra.mxu0 0
    %1349 = vmatprep.mubr.bf16.mxu0 0
    %1350 = vmatmul.mubr.bf16.gmra.mrb[0].mxu0 %v1315
    %v1351 = vpop.f32.mrb[0].mxu0
    %v1352 = vadd.f32 0.0, %v1351
    %v1353 = vpop.f32.mrb[0].mxu0
    %v1354 = vpop.f32.mrb[0].mxu0
    %v1355 = vadd.f32 0.0, %v1354
    %v1356 = vpop.f32.mrb[0].mxu0
    %1357 = vdwg.mxu0
    %1358 = vrot.lane.b32.xlu0 %v553, 64
    %v1359 = vpop.permute.xlu0 %1358
    %v1362 = vsel %vm959, %v1139, 0
    %1364 = vmatprep.subr.bf16.mxu0 0
    %1365 = vmatpush1.bf16.msra.mxu0 %v1359
    %1366 = vmatprep.subr.bf16.mxu0 0
    %1367 = vmatpush1.bf16.msra.mxu0 0
    %1368 = vmatprep.subr.bf16.mxu0 0
    %1369 = vmatpush1.bf16.msra.mxu0 0
    %1370 = vmatprep.subr.bf16.mxu0 0
    %1371 = vmatpush1.bf16.msra.mxu0 0
    %1372 = vmatprep.subr.bf16.mxu0 0
    %1373 = vmatpush1.bf16.msra.mxu0 0
    %1374 = vmatprep.subr.bf16.mxu0 0
    %1375 = vmatpush1.bf16.msra.mxu0 0
    %1376 = vmatprep.subr.bf16.mxu0 0
    %1377 = vmatpush1.bf16.msra.mxu0 0
    %1378 = vmatprep.subr.bf16.mxu0 0
    %1379 = vmatpush1.bf16.msra.mxu0 0
    %1380 = vmatprep.subr.bf16.mxu0 0
    %1381 = vmatpush1.bf16.msra.mxu0 0
    %1382 = vmatprep.subr.bf16.mxu0 0
    %1383 = vmatpush1.bf16.msra.mxu0 0
    %1384 = vmatprep.subr.bf16.mxu0 0
    %1385 = vmatpush1.bf16.msra.mxu0 0
    %1386 = vmatprep.subr.bf16.mxu0 0
    %1387 = vmatpush1.bf16.msra.mxu0 0
    %1388 = vmatprep.subr.bf16.mxu0 0
    %1389 = vmatpush1.bf16.msra.mxu0 0
    %1390 = vmatprep.subr.bf16.mxu0 0
    %1391 = vmatpush1.bf16.msra.mxu0 0
    %1392 = vmatprep.subr.bf16.mxu0 0
    %1393 = vmatpush1.bf16.msra.mxu0 0
    %1394 = vmatprep.subr.bf16.mxu0 0
    %1395 = vmatpush1.bf16.msra.mxu0 0
    %1396 = vmatprep.mubr.bf16.mxu0 0
    %1397 = vmatmul.mubr.bf16.gmra.mrb[0].mxu0 %v1362
    %v1398 = vpop.f32.mrb[0].mxu0
    %v1399 = vadd.f32 0.0, %v1398
    %v1400 = vpop.f32.mrb[0].mxu0
    %v1401 = vpop.f32.mrb[0].mxu0
    %v1402 = vadd.f32 0.0, %v1401
    %v1403 = vpop.f32.mrb[0].mxu0
    %1404 = vdwg.mxu0
    %1405 = vrot.lane.b32.xlu0 %v554, 64
    %v1406 = vpop.permute.xlu0 %1405
    %v1409 = vsel %vm959, %v1140, 0
    %1411 = vmatprep.subr.bf16.mxu0 0
    %1412 = vmatpush1.bf16.msra.mxu0 %v1406
    %1413 = vmatprep.subr.bf16.mxu0 0
    %1414 = vmatpush1.bf16.msra.mxu0 0
    %1415 = vmatprep.subr.bf16.mxu0 0
    %1416 = vmatpush1.bf16.msra.mxu0 0
    %1417 = vmatprep.subr.bf16.mxu0 0
    %1418 = vmatpush1.bf16.msra.mxu0 0
    %1419 = vmatprep.subr.bf16.mxu0 0
    %1420 = vmatpush1.bf16.msra.mxu0 0
    %1421 = vmatprep.subr.bf16.mxu0 0
    %1422 = vmatpush1.bf16.msra.mxu0 0
    %1423 = vmatprep.subr.bf16.mxu0 0
    %1424 = vmatpush1.bf16.msra.mxu0 0
    %1425 = vmatprep.subr.bf16.mxu0 0
    %1426 = vmatpush1.bf16.msra.mxu0 0
    %1427 = vmatprep.subr.bf16.mxu0 0
    %1428 = vmatpush1.bf16.msra.mxu0 0
    %1429 = vmatprep.subr.bf16.mxu0 0
    %1430 = vmatpush1.bf16.msra.mxu0 0
    %1431 = vmatprep.subr.bf16.mxu0 0
    %1432 = vmatpush1.bf16.msra.mxu0 0
    %1433 = vmatprep.subr.bf16.mxu0 0
    %1434 = vmatpush1.bf16.msra.mxu0 0
    %1435 = vmatprep.subr.bf16.mxu0 0
    %1436 = vmatpush1.bf16.msra.mxu0 0
    %1437 = vmatprep.subr.bf16.mxu0 0
    %1438 = vmatpush1.bf16.msra.mxu0 0
    %1439 = vmatprep.subr.bf16.mxu0 0
    %1440 = vmatpush1.bf16.msra.mxu0 0
    %1441 = vmatprep.subr.bf16.mxu0 0
    %1442 = vmatpush1.bf16.msra.mxu0 0
    %1443 = vmatprep.mubr.bf16.mxu0 0
    %1444 = vmatmul.mubr.bf16.gmra.mrb[0].mxu0 %v1409
    %v1445 = vpop.f32.mrb[0].mxu0
    %v1446 = vadd.f32 0.0, %v1445
    %v1447 = vpop.f32.mrb[0].mxu0
    %v1448 = vpop.f32.mrb[0].mxu0
    %v1449 = vadd.f32 0.0, %v1448
    %v1450 = vpop.f32.mrb[0].mxu0
    %1451 = vdwg.mxu0
    %1452 = vrot.lane.b32.xlu0 %v555, 64
    %v1453 = vpop.permute.xlu0 %1452
    %v1456 = vsel %vm959, %v1141, 0
    %1458 = vmatprep.subr.bf16.mxu0 0
    %1459 = vmatpush1.bf16.msra.mxu0 %v1453
    %1460 = vmatprep.subr.bf16.mxu0 0
    %1461 = vmatpush1.bf16.msra.mxu0 0
    %1462 = vmatprep.subr.bf16.mxu0 0
    %1463 = vmatpush1.bf16.msra.mxu0 0
    %1464 = vmatprep.subr.bf16.mxu0 0
    %1465 = vmatpush1.bf16.msra.mxu0 0
    %1466 = vmatprep.subr.bf16.mxu0 0
    %1467 = vmatpush1.bf16.msra.mxu0 0
    %1468 = vmatprep.subr.bf16.mxu0 0
    %1469 = vmatpush1.bf16.msra.mxu0 0
    %1470 = vmatprep.subr.bf16.mxu0 0
    %1471 = vmatpush1.bf16.msra.mxu0 0
    %1472 = vmatprep.subr.bf16.mxu0 0
    %1473 = vmatpush1.bf16.msra.mxu0 0
    %1474 = vmatprep.subr.bf16.mxu0 0
    %1475 = vmatpush1.bf16.msra.mxu0 0
    %1476 = vmatprep.subr.bf16.mxu0 0
    %1477 = vmatpush1.bf16.msra.mxu0 0
    %1478 = vmatprep.subr.bf16.mxu0 0
    %1479 = vmatpush1.bf16.msra.mxu0 0
    %1480 = vmatprep.subr.bf16.mxu0 0
    %1481 = vmatpush1.bf16.msra.mxu0 0
    %1482 = vmatprep.subr.bf16.mxu0 0
    %1483 = vmatpush1.bf16.msra.mxu0 0
    %1484 = vmatprep.subr.bf16.mxu0 0
    %1485 = vmatpush1.bf16.msra.mxu0 0
    %1486 = vmatprep.subr.bf16.mxu0 0
    %1487 = vmatpush1.bf16.msra.mxu0 0
    %1488 = vmatprep.subr.bf16.mxu0 0
    %1489 = vmatpush1.bf16.msra.mxu0 0
    %1490 = vmatprep.mubr.bf16.mxu0 0
    %1491 = vmatmul.mubr.bf16.gmra.mrb[0].mxu0 %v1456
    %v1492 = vpop.f32.mrb[0].mxu0
    %v1493 = vadd.f32 0.0, %v1492
    %v1494 = vpop.f32.mrb[0].mxu0
    %v1495 = vpop.f32.mrb[0].mxu0
    %v1496 = vadd.f32 0.0, %v1495
    %v1497 = vpop.f32.mrb[0].mxu0
    %1498 = vdwg.mxu0
    %1499 = vrot.lane.b32.xlu0 %v556, 64
    %v1500 = vpop.permute.xlu0 %1499
    %v1503 = vsel %vm959, %v1142, 0
    %1505 = vmatprep.subr.bf16.mxu0 0
    %1506 = vmatpush1.bf16.msra.mxu0 %v1500
    %1507 = vmatprep.subr.bf16.mxu0 0
    %1508 = vmatpush1.bf16.msra.mxu0 0
    %1509 = vmatprep.subr.bf16.mxu0 0
    %1510 = vmatpush1.bf16.msra.mxu0 0
    %1511 = vmatprep.subr.bf16.mxu0 0
    %1512 = vmatpush1.bf16.msra.mxu0 0
    %1513 = vmatprep.subr.bf16.mxu0 0
    %1514 = vmatpush1.bf16.msra.mxu0 0
    %1515 = vmatprep.subr.bf16.mxu0 0
    %1516 = vmatpush1.bf16.msra.mxu0 0
    %1517 = vmatprep.subr.bf16.mxu0 0
    %1518 = vmatpush1.bf16.msra.mxu0 0
    %1519 = vmatprep.subr.bf16.mxu0 0
    %1520 = vmatpush1.bf16.msra.mxu0 0
    %1521 = vmatprep.subr.bf16.mxu0 0
    %1522 = vmatpush1.bf16.msra.mxu0 0
    %1523 = vmatprep.subr.bf16.mxu0 0
    %1524 = vmatpush1.bf16.msra.mxu0 0
    %1525 = vmatprep.subr.bf16.mxu0 0
    %1526 = vmatpush1.bf16.msra.mxu0 0
    %1527 = vmatprep.subr.bf16.mxu0 0
    %1528 = vmatpush1.bf16.msra.mxu0 0
    %1529 = vmatprep.subr.bf16.mxu0 0
    %1530 = vmatpush1.bf16.msra.mxu0 0
    %1531 = vmatprep.subr.bf16.mxu0 0
    %1532 = vmatpush1.bf16.msra.mxu0 0
    %1533 = vmatprep.subr.bf16.mxu0 0
    %1534 = vmatpush1.bf16.msra.mxu0 0
    %1535 = vmatprep.subr.bf16.mxu0 0
    %1536 = vmatpush1.bf16.msra.mxu0 0
    %1537 = vmatprep.mubr.bf16.mxu0 0
    %1538 = vmatmul.mubr.bf16.gmra.mrb[0].mxu0 %v1503
    %v1539 = vpop.f32.mrb[0].mxu0
    %v1540 = vadd.f32 0.0, %v1539
    %v1541 = vpop.f32.mrb[0].mxu0
    %v1542 = vpop.f32.mrb[0].mxu0
    %v1543 = vadd.f32 0.0, %v1542
    %v1544 = vpop.f32.mrb[0].mxu0
    %1545 = vdwg.mxu0
    %1546 = vrot.lane.b32.xlu0 %v557, 64
    %v1547 = vpop.permute.xlu0 %1546
    %v1550 = vsel %vm959, %v1143, 0
    %1552 = vmatprep.subr.bf16.mxu0 0
    %1553 = vmatpush1.bf16.msra.mxu0 %v1547
    %1554 = vmatprep.subr.bf16.mxu0 0
    %1555 = vmatpush1.bf16.msra.mxu0 0
    %1556 = vmatprep.subr.bf16.mxu0 0
    %1557 = vmatpush1.bf16.msra.mxu0 0
    %1558 = vmatprep.subr.bf16.mxu0 0
    %1559 = vmatpush1.bf16.msra.mxu0 0
    %1560 = vmatprep.subr.bf16.mxu0 0
    %1561 = vmatpush1.bf16.msra.mxu0 0
    %1562 = vmatprep.subr.bf16.mxu0 0
    %1563 = vmatpush1.bf16.msra.mxu0 0
    %1564 = vmatprep.subr.bf16.mxu0 0
    %1565 = vmatpush1.bf16.msra.mxu0 0
    %1566 = vmatprep.subr.bf16.mxu0 0
    %1567 = vmatpush1.bf16.msra.mxu0 0
    %1568 = vmatprep.subr.bf16.mxu0 0
    %1569 = vmatpush1.bf16.msra.mxu0 0
    %1570 = vmatprep.subr.bf16.mxu0 0
    %1571 = vmatpush1.bf16.msra.mxu0 0
    %1572 = vmatprep.subr.bf16.mxu0 0
    %1573 = vmatpush1.bf16.msra.mxu0 0
    %1574 = vmatprep.subr.bf16.mxu0 0
    %1575 = vmatpush1.bf16.msra.mxu0 0
    %1576 = vmatprep.subr.bf16.mxu0 0
    %1577 = vmatpush1.bf16.msra.mxu0 0
    %1578 = vmatprep.subr.bf16.mxu0 0
    %1579 = vmatpush1.bf16.msra.mxu0 0
    %1580 = vmatprep.subr.bf16.mxu0 0
    %1581 = vmatpush1.bf16.msra.mxu0 0
    %1582 = vmatprep.subr.bf16.mxu0 0
    %1583 = vmatpush1.bf16.msra.mxu0 0
    %1584 = vmatprep.mubr.bf16.mxu0 0
    %1585 = vmatmul.mubr.bf16.gmra.mrb[0].mxu0 %v1550
    %v1586 = vpop.f32.mrb[0].mxu0
    %v1587 = vadd.f32 0.0, %v1586
    %v1588 = vpop.f32.mrb[0].mxu0
    %v1589 = vpop.f32.mrb[0].mxu0
    %v1590 = vadd.f32 0.0, %v1589
    %v1591 = vpop.f32.mrb[0].mxu0
    %1592 = vdwg.mxu0
    %1595 = vrot.lane.b32.xlu0 %v1305, 8
    %v1596 = vpop.permute.xlu0 %1595
    %1597 = vrot.lane.b32.xlu0 %v1308, 8
    %v1598 = vpop.permute.xlu0 %1597
    %1603 = vrot.lane.b32.xlu0 %v1352, 16
    %v1604 = vpop.permute.xlu0 %1603
    %1605 = vrot.lane.b32.xlu0 %v1355, 16
    %v1606 = vpop.permute.xlu0 %1605
    %1611 = vrot.lane.b32.xlu0 %v1399, 24
    %v1612 = vpop.permute.xlu0 %1611
    %1613 = vrot.lane.b32.xlu0 %v1402, 24
    %v1614 = vpop.permute.xlu0 %1613
    %v1617 = vsel %vm561, %v1258, %v1596
    %v1618 = vsel %vm561, %v1261, %v1598
    %v1619 = vsel %vm959, %v1617, %v1604
    %v1620 = vsel %vm959, %v1618, %v1606
    %vm1621 = vcmask 195584
    %v1622 = vsel %vm1621, %v1619, %v1612
    %v1623 = vsel %vm1621, %v1620, %v1614
    %1626 = vrot.lane.b32.xlu0 %v1493, 8
    %v1627 = vpop.permute.xlu0 %1626
    %1628 = vrot.lane.b32.xlu0 %v1496, 8
    %v1629 = vpop.permute.xlu0 %1628
    %1634 = vrot.lane.b32.xlu0 %v1540, 16
    %v1635 = vpop.permute.xlu0 %1634
    %1636 = vrot.lane.b32.xlu0 %v1543, 16
    %v1637 = vpop.permute.xlu0 %1636
    %1642 = vrot.lane.b32.xlu0 %v1587, 24
    %v1643 = vpop.permute.xlu0 %1642
    %1644 = vrot.lane.b32.xlu0 %v1590, 24
    %v1645 = vpop.permute.xlu0 %1644
    %v1648 = vsel %vm561, %v1446, %v1627
    %v1649 = vsel %vm561, %v1449, %v1629
    %v1650 = vsel %vm959, %v1648, %v1635
    %v1651 = vsel %vm959, %v1649, %v1637
    %v1652 = vsel %vm1621, %v1650, %v1643
    %v1653 = vsel %vm1621, %v1651, %v1645
    %v1654 = vld [vmem:[%s6] sm:$0xf]
    %v1655 = vld [vmem:[%s6 + $0x4] sm:$0xf]
    %v1656 = vld [vmem:[%s6 + $0x8] sm:$0xf]
    %v1657 = vld [vmem:[%s6 + $0xc] sm:$0xf]
    %v1658 = vpack.c.bf16 %v1623, %v1622
    %v1659 = vpack.c.bf16 %v1653, %v1652
    %v1664 = vunpack.c.l.b16 %v1654
    %v1665 = vunpack.c.l.b16 %v1655
    %v1666 = vunpack.c.l.b16 %v1656
    %v1667 = vunpack.c.l.b16 %v1657
    %v1668 = vpack.c.b16 %v1665, %v1664
    %v1669 = vpack.c.b16 %v1667, %v1666
    %v1673 = vsel %vm83, %v1658, 0
    %v1676 = vsel %vm83, %v1659, 0
    %1678 = vmatprep.subr.bf16.mxu0 0
    %1679 = vmatpush1.bf16.msra.mxu0 %v1668
    %1680 = vmatprep.subr.bf16.mxu0 0
    %1681 = vmatpush1.bf16.msra.mxu0 %v1669
    %1682 = vmatprep.subr.bf16.mxu0 0
    %1683 = vmatpush1.bf16.msra.mxu0 0
    %1684 = vmatprep.subr.bf16.mxu0 0
    %1685 = vmatpush1.bf16.msra.mxu0 0
    %1686 = vmatprep.subr.bf16.mxu0 0
    %1687 = vmatpush1.bf16.msra.mxu0 0
    %1688 = vmatprep.subr.bf16.mxu0 0
    %1689 = vmatpush1.bf16.msra.mxu0 0
    %1690 = vmatprep.subr.bf16.mxu0 0
    %1691 = vmatpush1.bf16.msra.mxu0 0
    %1692 = vmatprep.subr.bf16.mxu0 0
    %1693 = vmatpush1.bf16.msra.mxu0 0
    %1694 = vmatprep.subr.bf16.mxu0 0
    %1695 = vmatpush1.bf16.msra.mxu0 0
    %1696 = vmatprep.subr.bf16.mxu0 0
    %1697 = vmatpush1.bf16.msra.mxu0 0
    %1698 = vmatprep.subr.bf16.mxu0 0
    %1699 = vmatpush1.bf16.msra.mxu0 0
    %1700 = vmatprep.subr.bf16.mxu0 0
    %1701 = vmatpush1.bf16.msra.mxu0 0
    %1702 = vmatprep.subr.bf16.mxu0 0
    %1703 = vmatpush1.bf16.msra.mxu0 0
    %1704 = vmatprep.subr.bf16.mxu0 0
    %1705 = vmatpush1.bf16.msra.mxu0 0
    %1706 = vmatprep.subr.bf16.mxu0 0
    %1707 = vmatpush1.bf16.msra.mxu0 0
    %1708 = vmatprep.subr.bf16.mxu0 0
    %1709 = vmatpush1.bf16.msra.mxu0 0
    %1710 = vmatprep.mubr.bf16.mxu0 0
    %1711 = vmatmul.mubr.bf16.gmra.mrb[0].mxu0 %v1673
    %v1712 = vpop.f32.mrb[0].mxu0
    %v1713 = vadd.f32 0.0, %v1712
    %v1714 = vpop.f32.mrb[0].mxu0
    %v1715 = vpop.f32.mrb[0].mxu0
    %v1716 = vadd.f32 0.0, %v1715
    %v1717 = vpop.f32.mrb[0].mxu0
    %1718 = vmatprep.mubr.bf16.mxu0 0
    %1719 = vmatmul.mubr.bf16.gmra.mrb[0].mxu0 %v1676
    %v1720 = vpop.f32.mrb[0].mxu0
    %v1721 = vadd.f32 0.0, %v1720
    %v1722 = vpop.f32.mrb[0].mxu0
    %v1723 = vpop.f32.mrb[0].mxu0
    %v1724 = vadd.f32 0.0, %v1723
    %v1725 = vpop.f32.mrb[0].mxu0
    %1726 = vdwg.mxu0
    %v1727 = vadd.f32 %v361, %v1713
    %v1728 = vadd.f32 %v362, %v1716
    %v1729 = vadd.f32 %v363, %v1721
    %v1730 = vadd.f32 %v364, %v1724
    %v1731 = vlaneseq
    %v1732 = vshrl.u32 %v1731, 7
    %v1733 = vsub.s32 5, %v1732
    %v1734 = vrot.slane %v55, %v1733
    %v1735 = vadd.f32 %v1727, %v1734
    %v1736 = vadd.f32 %v1728, %v1734
    %v1737 = vadd.f32 %v1729, %v1734
    %v1738 = vadd.f32 %v1730, %v1734
    %v1739 = vsel %vm83, %v1735, 0.0
    %1740 = vadd.xlane.f32.xlu0 %v1739
    %v1741 = vpop.xlane.xlu0 %1740
    %v1742 = vsel %vm83, %v1736, 0.0
    %1743 = vadd.xlane.f32.xlu0 %v1742
    %v1744 = vpop.xlane.xlu0 %1743
    %v1745 = vsel %vm83, %v1737, 0.0
    %1746 = vadd.xlane.f32.xlu0 %v1745
    %v1747 = vpop.xlane.xlu0 %1746
    %v1748 = vsel %vm83, %v1738, 0.0
    %1749 = vadd.xlane.f32.xlu0 %v1748
    %v1750 = vpop.xlane.xlu0 %1749
    %v1751 = vmul.f32 %v1741, %v96
    %v1752 = vmul.f32 %v1744, %v96
    %v1753 = vmul.f32 %v1747, %v96
    %v1754 = vmul.f32 %v1750, %v96
    %v1755 = vsub.f32 %v1735, %v1751
    %v1756 = vsub.f32 %v1736, %v1752
    %v1757 = vsub.f32 %v1737, %v1753
    %v1758 = vsub.f32 %v1738, %v1754
    %v1759 = vmul.f32 %v1755, %v1755
    %v1760 = vmul.f32 %v1756, %v1756
    %v1761 = vmul.f32 %v1757, %v1757
    %v1762 = vmul.f32 %v1758, %v1758
    %v1763 = vsel %vm83, %v1759, 0.0
    %1764 = vadd.xlane.f32.xlu0 %v1763
    %v1765 = vpop.xlane.xlu0 %1764
    %v1766 = vsel %vm83, %v1760, 0.0
    %1767 = vadd.xlane.f32.xlu0 %v1766
    %v1768 = vpop.xlane.xlu0 %1767
    %v1769 = vsel %vm83, %v1761, 0.0
    %1770 = vadd.xlane.f32.xlu0 %v1769
    %v1771 = vpop.xlane.xlu0 %1770
    %v1772 = vsel %vm83, %v1762, 0.0
    %1773 = vadd.xlane.f32.xlu0 %v1772
    %v1774 = vpop.xlane.xlu0 %1773
    %v1775 = vmul.f32 %v1765, %v96
    %v1776 = vmul.f32 %v1768, %v96
    %v1777 = vmul.f32 %v1771, %v96
    %v1778 = vmul.f32 %v1774, %v96
    %v1779 = vadd.f32 %v1775, 1e-05
    %v1780 = vadd.f32 %v1776, 1e-05
    %v1781 = vadd.f32 %v1777, 1e-05
    %v1782 = vadd.f32 %v1778, 1e-05
    %v1783 = vrsqrt.pop %v1779
    %v1784 = vrsqrt.pop %v1780
    %v1785 = vrsqrt.pop %v1781
    %v1786 = vrsqrt.pop %v1782
    %v1787 = vmul.f32 %v1755, %v1783
    %v1788 = vmul.f32 %v1756, %v1784
    %v1789 = vmul.f32 %v1757, %v1785
    %v1790 = vmul.f32 %v1758, %v1786
    %v1791 = vlaneseq
    %v1792 = vshrl.u32 %v1791, 7
    %v1793 = vsub.s32 6, %v1792
    %v1794 = vrot.slane %v55, %v1793
    %v1795 = vmul.f32 %v1787, %v1794
    %v1796 = vmul.f32 %v1788, %v1794
    %v1797 = vmul.f32 %v1789, %v1794
    %v1798 = vmul.f32 %v1790, %v1794
    %v1799 = vlaneseq
    %v1800 = vshrl.u32 %v1799, 7
    %v1801 = vsub.s32 7, %v1800
    %v1802 = vrot.slane %v55, %v1801
    %v1803 = vadd.f32 %v1795, %v1802
    %v1804 = vadd.f32 %v1796, %v1802
    %v1805 = vadd.f32 %v1797, %v1802
    %v1806 = vadd.f32 %v1798, %v1802
    %v1807 = vld [vmem:[%s7] sm:$0xf]
    %v1808 = vld [vmem:[%s7 + $0x4] sm:$0xf]
    %v1809 = vld [vmem:[%s7 + $0x8] sm:$0xf]
    %v1810 = vld [vmem:[%s7 + $0xc] sm:$0xf]
    %v1811 = vpack.c.bf16 %v1804, %v1803
    %v1812 = vpack.c.bf16 %v1806, %v1805
    %v1813 = vlaneseq
    %v1814 = vshrl.u32 %v1813, 7
    %v1815 = vsub.s32 2, %v1814
    %v1816 = vrot.slane %v58, %v1815
    %v1821 = vunpack.c.l.b16 %v1807
    %v1822 = vunpack.c.l.b16 %v1808
    %v1823 = vunpack.c.l.b16 %v1809
    %v1824 = vunpack.c.l.b16 %v1810
    %v1825 = vpack.c.b16 %v1822, %v1821
    %v1826 = vpack.c.b16 %v1824, %v1823
    %v1830 = vsel %vm83, %v1811, 0
    %v1833 = vsel %vm83, %v1812, 0
    %1835 = vmatprep.subr.bf16.mxu0 0
    %1836 = vmatpush1.bf16.msra.mxu0 %v1825
    %1837 = vmatprep.subr.bf16.mxu0 0
    %1838 = vmatpush1.bf16.msra.mxu0 %v1826
    %1839 = vmatprep.subr.bf16.mxu0 0
    %1840 = vmatpush1.bf16.msra.mxu0 0
    %1841 = vmatprep.subr.bf16.mxu0 0
    %1842 = vmatpush1.bf16.msra.mxu0 0
    %1843 = vmatprep.subr.bf16.mxu0 0
    %1844 = vmatpush1.bf16.msra.mxu0 0
    %1845 = vmatprep.subr.bf16.mxu0 0
    %1846 = vmatpush1.bf16.msra.mxu0 0
    %1847 = vmatprep.subr.bf16.mxu0 0
    %1848 = vmatpush1.bf16.msra.mxu0 0
    %1849 = vmatprep.subr.bf16.mxu0 0
    %1850 = vmatpush1.bf16.msra.mxu0 0
    %1851 = vmatprep.subr.bf16.mxu0 0
    %1852 = vmatpush1.bf16.msra.mxu0 0
    %1853 = vmatprep.subr.bf16.mxu0 0
    %1854 = vmatpush1.bf16.msra.mxu0 0
    %1855 = vmatprep.subr.bf16.mxu0 0
    %1856 = vmatpush1.bf16.msra.mxu0 0
    %1857 = vmatprep.subr.bf16.mxu0 0
    %1858 = vmatpush1.bf16.msra.mxu0 0
    %1859 = vmatprep.subr.bf16.mxu0 0
    %1860 = vmatpush1.bf16.msra.mxu0 0
    %1861 = vmatprep.subr.bf16.mxu0 0
    %1862 = vmatpush1.bf16.msra.mxu0 0
    %1863 = vmatprep.subr.bf16.mxu0 0
    %1864 = vmatpush1.bf16.msra.mxu0 0
    %1865 = vmatprep.subr.bf16.mxu0 0
    %1866 = vmatpush1.bf16.msra.mxu0 0
    %1867 = vmatprep.mubr.bf16.mxu0 0
    %1868 = vmatmul.mubr.bf16.gmra.mrb[0].mxu0 %v1830
    %v1869 = vpop.f32.mrb[0].mxu0
    %v1870 = vadd.f32 %v1816, %v1869
    %v1871 = vpop.f32.mrb[0].mxu0
    %v1872 = vpop.f32.mrb[0].mxu0
    %v1873 = vadd.f32 %v1816, %v1872
    %v1874 = vpop.f32.mrb[0].mxu0
    %1875 = vmatprep.mubr.bf16.mxu0 0
    %1876 = vmatmul.mubr.bf16.gmra.mrb[0].mxu0 %v1833
    %v1877 = vpop.f32.mrb[0].mxu0
    %v1878 = vadd.f32 %v1816, %v1877
    %v1879 = vpop.f32.mrb[0].mxu0
    %v1880 = vpop.f32.mrb[0].mxu0
    %v1881 = vadd.f32 %v1816, %v1880
    %v1882 = vpop.f32.mrb[0].mxu0
    %1883 = vdwg.mxu0
    %v1884 = vxor.u32 %v1870, 2147483648
    %v1885 = vxor.u32 %v1873, 2147483648
    %v1886 = vxor.u32 %v1878, 2147483648
    %v1887 = vxor.u32 %v1881, 2147483648
    %v1888 = vmul.f32 %v1884, 1.442695
    %v1889 = vpow.pop %v1888
    %v1890 = vmul.f32 %v1885, 1.442695
    %v1891 = vpow.pop %v1890
    %v1892 = vmul.f32 %v1886, 1.442695
    %v1893 = vpow.pop %v1892
    %v1894 = vmul.f32 %v1887, 1.442695
    %v1895 = vpow.pop %v1894
    %v1896 = vadd.f32 %v1889, 1.0
    %v1897 = vadd.f32 %v1891, 1.0
    %v1898 = vadd.f32 %v1893, 1.0
    %v1899 = vadd.f32 %v1895, 1.0
    %v1900 = vrcp.pop %v1896
    %v1901 = vmul.f32 1.0, %v1900
    %v1902 = vrcp.pop %v1897
    %v1903 = vmul.f32 1.0, %v1902
    %v1904 = vrcp.pop %v1898
    %v1905 = vmul.f32 1.0, %v1904
    %v1906 = vrcp.pop %v1899
    %v1907 = vmul.f32 1.0, %v1906
    %1912 = vrot.lane.b32.xlu0 %v1901, 96
    %v1913 = vpop.permute.xlu0 %1912
    %1914 = vrot.lane.b32.xlu0 %v1903, 96
    %v1915 = vpop.permute.xlu0 %1914
    %1916 = vrot.lane.b32.xlu0 %v1905, 96
    %v1917 = vpop.permute.xlu0 %1916
    %1918 = vrot.lane.b32.xlu0 %v1907, 96
    %v1919 = vpop.permute.xlu0 %1918
    %v1924 = vmul.f32 %v1870, %v1913
    %v1925 = vmul.f32 %v1873, %v1915
    %v1926 = vmul.f32 %v1878, %v1917
    %v1927 = vmul.f32 %v1881, %v1919
    %v1928 = vlaneseq
    %v1929 = vshrl.u32 %v1928, 7
    %v1930 = vadd.s32 %v1929, 8
    %v1931 = vadd.s32 %v1929, 16
    %v1932 = vadd.s32 %v1929, 24
    %vm1933 = vcmp.lt.s32.totalorder %v1929, 0
    %v1934 = vsub.s32 0, %v1929
    %v1935 = vsel %vm1933, %v1934, %v1929
    %v1936 = vshrl.u32 %v1935, 4
    %v1937 = vand.u32 %v1935, 15
    %v1938 = vsub.s32 0, %v1937
    %v1939 = vsel %vm1933, %v1938, %v1937
    %vm1940 = vcmp.lt.s32.totalorder %v1930, 0
    %v1941 = vsub.s32 0, %v1930
    %v1942 = vsel %vm1940, %v1941, %v1930
    %v1943 = vshrl.u32 %v1942, 4
    %v1944 = vand.u32 %v1942, 15
    %v1945 = vsub.s32 0, %v1944
    %v1946 = vsel %vm1940, %v1945, %v1944
    %vm1947 = vcmp.lt.s32.totalorder %v1931, 0
    %v1948 = vsub.s32 0, %v1931
    %v1949 = vsel %vm1947, %v1948, %v1931
    %v1950 = vshrl.u32 %v1949, 4
    %v1951 = vand.u32 %v1949, 15
    %v1952 = vsub.s32 0, %v1951
    %v1953 = vsel %vm1947, %v1952, %v1951
    %vm1954 = vcmp.lt.s32.totalorder %v1932, 0
    %v1955 = vsub.s32 0, %v1932
    %v1956 = vsel %vm1954, %v1955, %v1932
    %v1957 = vshrl.u32 %v1956, 4
    %v1958 = vand.u32 %v1956, 15
    %v1959 = vsub.s32 0, %v1958
    %v1960 = vsel %vm1954, %v1959, %v1958
    %vm1961 = vcmp.ne.s32.totalorder %v1939, 0
    %vm1962 = vcmp.ne.s32.totalorder %v1946, 0
    %vm1963 = vcmp.ne.s32.totalorder %v1953, 0
    %vm1964 = vcmp.ne.s32.totalorder %v1960, 0
    %vm1965 = vcmp.lt.s32.totalorder %v1939, 0
    %vm1966 = vcmp.lt.s32.totalorder %v1946, 0
    %vm1967 = vcmp.lt.s32.totalorder %v1953, 0
    %vm1968 = vcmp.lt.s32.totalorder %v1960, 0
    %vm1969 = vmand %vm1965, %vm1961
    %vm1970 = vmand %vm1966, %vm1962
    %vm1971 = vmand %vm1967, %vm1963
    %vm1972 = vmand %vm1968, %vm1964
    %v1973 = vadd.s32 %v1939, 16
    %v1974 = vadd.s32 %v1946, 16
    %v1975 = vadd.s32 %v1953, 16
    %v1976 = vadd.s32 %v1960, 16
    %v1977 = vsel %vm1969, %v1973, %v1939
    %v1978 = vsel %vm1970, %v1974, %v1946
    %v1979 = vsel %vm1971, %v1975, %v1953
    %v1980 = vsel %vm1972, %v1976, %v1960
    %vm1981 = vcmp.eq.s32.totalorder %v1977, 0
    %vm1982 = vcmp.eq.s32.totalorder %v1978, 0
    %vm1983 = vcmp.eq.s32.totalorder %v1979, 0
    %vm1984 = vcmp.eq.s32.totalorder %v1980, 0
    %v1985 = vrot.slane %v1924, 7
    %v1986 = vrot.slane %v1925, 7
    %v1987 = vrot.slane %v1926, 7
    %v1988 = vrot.slane %v1927, 7
    %vm1989 = vcmp.lt.s32.totalorder %v1929, 1
    %v1990 = vsel %vm1989, %v1987, %v1988
    %v1991 = vsel %vm1989, %v1986, %v1987
    %v1992 = vsel %vm1989, %v1985, %v1986
    %v1993 = vsel %vm1989, %v1988, %v1985
    %v1994 = vsel %vm1981, 0.0, %v1993
    %v1995 = vsel %vm1982, 0.0, %v1992
    %v1996 = vsel %vm1983, 0.0, %v1991
    %v1997 = vsel %vm1984, 0.0, %v1990
    %vm1998 = vcmp.eq.s32.totalorder %v1977, 15
    %vm1999 = vcmp.eq.s32.totalorder %v1978, 15
    %vm2000 = vcmp.eq.s32.totalorder %v1979, 15
    %vm2001 = vcmp.eq.s32.totalorder %v1980, 15
    %v2002 = vrot.slane %v1924, 1
    %v2003 = vrot.slane %v1925, 1
    %v2004 = vrot.slane %v1926, 1
    %v2005 = vrot.slane %v1927, 1
    %vm2006 = vcmp.lt.s32.totalorder %v1929, 7
    %v2007 = vsel %vm2006, %v2004, %v2005
    %v2008 = vsel %vm2006, %v2003, %v2004
    %v2009 = vsel %vm2006, %v2002, %v2003
    %v2010 = vsel %vm2006, %v2005, %v2002
    %v2011 = vsel %vm1998, 0.0, %v2009
    %v2012 = vsel %vm1999, 0.0, %v2008
    %v2013 = vsel %vm2000, 0.0, %v2007
    %v2014 = vsel %vm2001, 0.0, %v2010
    %v2015 = vlaneseq
    %v2016 = vshrl.u32 %v2015, 7
    %v2017 = vsub.s32 3, %v2016
    %v2018 = vrot.slane %v56, %v2017
    %v2019 = vmul.f32 %v1994, %v2018
    %v2020 = vmul.f32 %v1995, %v2018
    %v2021 = vmul.f32 %v1996, %v2018
    %v2022 = vmul.f32 %v1997, %v2018
    %v2023 = vlaneseq
    %v2024 = vshrl.u32 %v2023, 7
    %v2025 = vsub.s32 4, %v2024
    %v2026 = vrot.slane %v56, %v2025
    %v2027 = vmul.f32 %v1924, %v2026
    %v2028 = vmul.f32 %v1925, %v2026
    %v2029 = vmul.f32 %v1926, %v2026
    %v2030 = vmul.f32 %v1927, %v2026
    %v2031 = vadd.f32 %v2019, %v2027
    %v2032 = vadd.f32 %v2020, %v2028
    %v2033 = vadd.f32 %v2021, %v2029
    %v2034 = vadd.f32 %v2022, %v2030
    %v2035 = vlaneseq
    %v2036 = vshrl.u32 %v2035, 7
    %v2037 = vsub.s32 5, %v2036
    %v2038 = vrot.slane %v56, %v2037
    %v2039 = vmul.f32 %v2011, %v2038
    %v2040 = vmul.f32 %v2012, %v2038
    %v2041 = vmul.f32 %v2013, %v2038
    %v2042 = vmul.f32 %v2014, %v2038
    %v2043 = vadd.f32 %v2031, %v2039
    %v2044 = vadd.f32 %v2032, %v2040
    %v2045 = vadd.f32 %v2033, %v2041
    %v2046 = vadd.f32 %v2034, %v2042
    %v2047 = vlaneseq
    %v2048 = vshrl.u32 %v2047, 7
    %v2049 = vsub.s32 0, %v2048
    %v2050 = vrot.slane %v56, %v2049
    %v2051 = vmul.f32 %v2043, %v2050
    %v2052 = vmul.f32 %v2044, %v2050
    %v2053 = vmul.f32 %v2045, %v2050
    %v2054 = vmul.f32 %v2046, %v2050
    %v2055 = vlaneseq
    %v2056 = vshrl.u32 %v2055, 7
    %v2057 = vsub.s32 1, %v2056
    %v2058 = vrot.slane %v56, %v2057
    %v2059 = vadd.f32 %v2051, %v2058
    %v2060 = vadd.f32 %v2052, %v2058
    %v2061 = vadd.f32 %v2053, %v2058
    %v2062 = vadd.f32 %v2054, %v2058
    %v2063 = vxor.u32 %v2059, 2147483648
    %v2064 = vxor.u32 %v2060, 2147483648
    %v2065 = vxor.u32 %v2061, 2147483648
    %v2066 = vxor.u32 %v2062, 2147483648
    %v2067 = vmul.f32 %v2063, 1.442695
    %v2068 = vpow.pop %v2067
    %v2069 = vmul.f32 %v2064, 1.442695
    %v2070 = vpow.pop %v2069
    %v2071 = vmul.f32 %v2065, 1.442695
    %v2072 = vpow.pop %v2071
    %v2073 = vmul.f32 %v2066, 1.442695
    %v2074 = vpow.pop %v2073
    %v2075 = vadd.f32 %v2068, 1.0
    %v2076 = vadd.f32 %v2070, 1.0
    %v2077 = vadd.f32 %v2072, 1.0
    %v2078 = vadd.f32 %v2074, 1.0
    %v2079 = vrcp.pop %v2075
    %v2080 = vmul.f32 1.0, %v2079
    %v2081 = vrcp.pop %v2076
    %v2082 = vmul.f32 1.0, %v2081
    %v2083 = vrcp.pop %v2077
    %v2084 = vmul.f32 1.0, %v2083
    %v2085 = vrcp.pop %v2078
    %v2086 = vmul.f32 1.0, %v2085
    %v2087 = vmul.f32 %v2059, %v2080
    %v2088 = vmul.f32 %v2060, %v2082
    %v2089 = vmul.f32 %v2061, %v2084
    %v2090 = vmul.f32 %v2062, %v2086
    %v2091 = vld [vmem:[%s8] sm:$0xf]
    %v2092 = vld [vmem:[%s8 + $0x4] sm:$0xf]
    %v2093 = vld [vmem:[%s8 + $0x8] sm:$0xf]
    %v2094 = vld [vmem:[%s8 + $0xc] sm:$0xf]
    %v2095 = vpack.c.bf16 %v2088, %v2087
    %v2096 = vpack.c.bf16 %v2090, %v2089
    %v2101 = vunpack.c.l.b16 %v2091
    %v2102 = vunpack.c.l.b16 %v2092
    %v2103 = vunpack.c.l.b16 %v2093
    %v2104 = vunpack.c.l.b16 %v2094
    %v2105 = vpack.c.b16 %v2102, %v2101
    %v2106 = vpack.c.b16 %v2104, %v2103
    %v2110 = vsel %vm83, %v2095, 0
    %v2113 = vsel %vm83, %v2096, 0
    %2115 = vmatprep.subr.bf16.mxu0 0
    %2116 = vmatpush1.bf16.msra.mxu0 %v2105
    %2117 = vmatprep.subr.bf16.mxu0 0
    %2118 = vmatpush1.bf16.msra.mxu0 %v2106
    %2119 = vmatprep.subr.bf16.mxu0 0
    %2120 = vmatpush1.bf16.msra.mxu0 0
    %2121 = vmatprep.subr.bf16.mxu0 0
    %2122 = vmatpush1.bf16.msra.mxu0 0
    %2123 = vmatprep.subr.bf16.mxu0 0
    %2124 = vmatpush1.bf16.msra.mxu0 0
    %2125 = vmatprep.subr.bf16.mxu0 0
    %2126 = vmatpush1.bf16.msra.mxu0 0
    %2127 = vmatprep.subr.bf16.mxu0 0
    %2128 = vmatpush1.bf16.msra.mxu0 0
    %2129 = vmatprep.subr.bf16.mxu0 0
    %2130 = vmatpush1.bf16.msra.mxu0 0
    %2131 = vmatprep.subr.bf16.mxu0 0
    %2132 = vmatpush1.bf16.msra.mxu0 0
    %2133 = vmatprep.subr.bf16.mxu0 0
    %2134 = vmatpush1.bf16.msra.mxu0 0
    %2135 = vmatprep.subr.bf16.mxu0 0
    %2136 = vmatpush1.bf16.msra.mxu0 0
    %2137 = vmatprep.subr.bf16.mxu0 0
    %2138 = vmatpush1.bf16.msra.mxu0 0
    %2139 = vmatprep.subr.bf16.mxu0 0
    %2140 = vmatpush1.bf16.msra.mxu0 0
    %2141 = vmatprep.subr.bf16.mxu0 0
    %2142 = vmatpush1.bf16.msra.mxu0 0
    %2143 = vmatprep.subr.bf16.mxu0 0
    %2144 = vmatpush1.bf16.msra.mxu0 0
    %2145 = vmatprep.subr.bf16.mxu0 0
    %2146 = vmatpush1.bf16.msra.mxu0 0
    %2147 = vmatprep.mubr.bf16.mxu0 0
    %2148 = vmatmul.mubr.bf16.gmra.mrb[0].mxu0 %v2110
    %v2149 = vpop.f32.mrb[0].mxu0
    %v2150 = vadd.f32 0.0, %v2149
    %v2151 = vpop.f32.mrb[0].mxu0
    %v2152 = vpop.f32.mrb[0].mxu0
    %v2153 = vadd.f32 0.0, %v2152
    %v2154 = vpop.f32.mrb[0].mxu0
    %2155 = vmatprep.mubr.bf16.mxu0 0
    %2156 = vmatmul.mubr.bf16.gmra.mrb[0].mxu0 %v2113
    %v2157 = vpop.f32.mrb[0].mxu0
    %v2158 = vadd.f32 0.0, %v2157
    %v2159 = vpop.f32.mrb[0].mxu0
    %v2160 = vpop.f32.mrb[0].mxu0
    %v2161 = vadd.f32 0.0, %v2160
    %v2162 = vpop.f32.mrb[0].mxu0
    %2163 = vdwg.mxu0
    %v2164 = vadd.f32 %v1735, %v2150
    %v2165 = vadd.f32 %v1736, %v2153
    %v2166 = vadd.f32 %v1737, %v2158
    %v2167 = vadd.f32 %v1738, %v2161
    %v2168 = vlaneseq
    %v2169 = vshrl.u32 %v2168, 7
    %v2170 = vsub.s32 2, %v2169
    %v2171 = vrot.slane %v56, %v2170
    %v2172 = vadd.f32 %v2164, %v2171
    %v2173 = vadd.f32 %v2165, %v2171
    %v2174 = vadd.f32 %v2166, %v2171
    %v2175 = vadd.f32 %v2167, %v2171
    %v2176 = vld [vmem:[%s9] sm:$0xf]
    %v2177 = vld [vmem:[%s9 + $0x4] sm:$0xf]
    %v2178 = vld [vmem:[%s9 + $0x8] sm:$0xf]
    %v2179 = vld [vmem:[%s9 + $0xc] sm:$0xf]
    %v2180 = vld [vmem:[%s10] sm:$0xf]
    %v2181 = vld [vmem:[%s10 + $0x4] sm:$0xf]
    %v2182 = vld [vmem:[%s10 + $0x8] sm:$0xf]
    %v2183 = vld [vmem:[%s10 + $0xc] sm:$0xf]
    %v2184 = vld [vmem:[%s10 + $0x10] sm:$0xf]
    %v2185 = vld [vmem:[%s10 + $0x14] sm:$0xf]
    %v2186 = vld [vmem:[%s10 + $0x18] sm:$0xf]
    %v2187 = vld [vmem:[%s10 + $0x1c] sm:$0xf]
    %v2188 = vld [vmem:[%s10 + $0x20] sm:$0xf]
    %v2189 = vld [vmem:[%s10 + $0x24] sm:$0xf]
    %v2190 = vld [vmem:[%s10 + $0x28] sm:$0xf]
    %v2191 = vld [vmem:[%s10 + $0x2c] sm:$0xf]
    %v2192 = vld [vmem:[%s10 + $0x30] sm:$0xf]
    %v2193 = vld [vmem:[%s10 + $0x34] sm:$0xf]
    %v2194 = vld [vmem:[%s10 + $0x38] sm:$0xf]
    %v2195 = vld [vmem:[%s10 + $0x3c] sm:$0xf]
    %v2196 = vsel %vm83, %v2172, 0.0
    %2197 = vadd.xlane.f32.xlu0 %v2196
    %v2198 = vpop.xlane.xlu0 %2197
    %v2199 = vsel %vm83, %v2173, 0.0
    %2200 = vadd.xlane.f32.xlu0 %v2199
    %v2201 = vpop.xlane.xlu0 %2200
    %v2202 = vsel %vm83, %v2174, 0.0
    %2203 = vadd.xlane.f32.xlu0 %v2202
    %v2204 = vpop.xlane.xlu0 %2203
    %v2205 = vsel %vm83, %v2175, 0.0
    %2206 = vadd.xlane.f32.xlu0 %v2205
    %v2207 = vpop.xlane.xlu0 %2206
    %v2208 = vmul.f32 %v2198, %v96
    %v2209 = vmul.f32 %v2201, %v96
    %v2210 = vmul.f32 %v2204, %v96
    %v2211 = vmul.f32 %v2207, %v96
    %v2212 = vsub.f32 %v2172, %v2208
    %v2213 = vsub.f32 %v2173, %v2209
    %v2214 = vsub.f32 %v2174, %v2210
    %v2215 = vsub.f32 %v2175, %v2211
    %v2216 = vmul.f32 %v2212, %v2212
    %v2217 = vmul.f32 %v2213, %v2213
    %v2218 = vmul.f32 %v2214, %v2214
    %v2219 = vmul.f32 %v2215, %v2215
    %v2220 = vsel %vm83, %v2216, 0.0
    %2221 = vadd.xlane.f32.xlu0 %v2220
    %v2222 = vpop.xlane.xlu0 %2221
    %v2223 = vsel %vm83, %v2217, 0.0
    %2224 = vadd.xlane.f32.xlu0 %v2223
    %v2225 = vpop.xlane.xlu0 %2224
    %v2226 = vsel %vm83, %v2218, 0.0
    %2227 = vadd.xlane.f32.xlu0 %v2226
    %v2228 = vpop.xlane.xlu0 %2227
    %v2229 = vsel %vm83, %v2219, 0.0
    %2230 = vadd.xlane.f32.xlu0 %v2229
    %v2231 = vpop.xlane.xlu0 %2230
    %v2232 = vmul.f32 %v2222, %v96
    %v2233 = vmul.f32 %v2225, %v96
    %v2234 = vmul.f32 %v2228, %v96
    %v2235 = vmul.f32 %v2231, %v96
    %v2236 = vadd.f32 %v2232, 1e-05
    %v2237 = vadd.f32 %v2233, 1e-05
    %v2238 = vadd.f32 %v2234, 1e-05
    %v2239 = vadd.f32 %v2235, 1e-05
    %v2240 = vrsqrt.pop %v2236
    %v2241 = vrsqrt.pop %v2237
    %v2242 = vrsqrt.pop %v2238
    %v2243 = vrsqrt.pop %v2239
    %v2244 = vmul.f32 %v2212, %v2240
    %v2245 = vmul.f32 %v2213, %v2241
    %v2246 = vmul.f32 %v2214, %v2242
    %v2247 = vmul.f32 %v2215, %v2243
    %v2248 = vlaneseq
    %v2249 = vshrl.u32 %v2248, 7
    %v2250 = vsub.s32 6, %v2249
    %v2251 = vrot.slane %v56, %v2250
    %v2252 = vmul.f32 %v2244, %v2251
    %v2253 = vmul.f32 %v2245, %v2251
    %v2254 = vmul.f32 %v2246, %v2251
    %v2255 = vmul.f32 %v2247, %v2251
    %v2256 = vlaneseq
    %v2257 = vshrl.u32 %v2256, 7
    %v2258 = vsub.s32 7, %v2257
    %v2259 = vrot.slane %v56, %v2258
    %v2260 = vadd.f32 %v2252, %v2259
    %v2261 = vadd.f32 %v2253, %v2259
    %v2262 = vadd.f32 %v2254, %v2259
    %v2263 = vadd.f32 %v2255, %v2259
    %v2264 = vpack.c.bf16 %v2261, %v2260
    %v2265 = vpack.c.bf16 %v2263, %v2262
    %v2266 = vlaneseq
    %v2267 = vshrl.u32 %v2266, 7
    %v2268 = vsub.s32 1, %v2267
    %v2269 = vrot.slane %v58, %v2268
    %v2274 = vunpack.c.l.b16 %v2176
    %v2275 = vunpack.c.l.b16 %v2177
    %v2276 = vunpack.c.l.b16 %v2178
    %v2277 = vunpack.c.l.b16 %v2179
    %v2278 = vpack.c.b16 %v2275, %v2274
    %v2279 = vpack.c.b16 %v2277, %v2276
    %v2283 = vsel %vm83, %v2264, 0
    %v2286 = vsel %vm83, %v2265, 0
    %2288 = vmatprep.subr.bf16.mxu0 0
    %2289 = vmatpush1.bf16.msra.mxu0 %v2278
    %2290 = vmatprep.subr.bf16.mxu0 0
    %2291 = vmatpush1.bf16.msra.mxu0 %v2279
    %2292 = vmatprep.subr.bf16.mxu0 0
    %2293 = vmatpush1.bf16.msra.mxu0 0
    %2294 = vmatprep.subr.bf16.mxu0 0
    %2295 = vmatpush1.bf16.msra.mxu0 0
    %2296 = vmatprep.subr.bf16.mxu0 0
    %2297 = vmatpush1.bf16.msra.mxu0 0
    %2298 = vmatprep.subr.bf16.mxu0 0
    %2299 = vmatpush1.bf16.msra.mxu0 0
    %2300 = vmatprep.subr.bf16.mxu0 0
    %2301 = vmatpush1.bf16.msra.mxu0 0
    %2302 = vmatprep.subr.bf16.mxu0 0
    %2303 = vmatpush1.bf16.msra.mxu0 0
    %2304 = vmatprep.subr.bf16.mxu0 0
    %2305 = vmatpush1.bf16.msra.mxu0 0
    %2306 = vmatprep.subr.bf16.mxu0 0
    %2307 = vmatpush1.bf16.msra.mxu0 0
    %2308 = vmatprep.subr.bf16.mxu0 0
    %2309 = vmatpush1.bf16.msra.mxu0 0
    %2310 = vmatprep.subr.bf16.mxu0 0
    %2311 = vmatpush1.bf16.msra.mxu0 0
    %2312 = vmatprep.subr.bf16.mxu0 0
    %2313 = vmatpush1.bf16.msra.mxu0 0
    %2314 = vmatprep.subr.bf16.mxu0 0
    %2315 = vmatpush1.bf16.msra.mxu0 0
    %2316 = vmatprep.subr.bf16.mxu0 0
    %2317 = vmatpush1.bf16.msra.mxu0 0
    %2318 = vmatprep.subr.bf16.mxu0 0
    %2319 = vmatpush1.bf16.msra.mxu0 0
    %2320 = vmatprep.mubr.bf16.mxu0 0
    %2321 = vmatmul.mubr.bf16.gmra.mrb[0].mxu0 %v2283
    %v2322 = vpop.f32.mrb[0].mxu0
    %v2323 = vadd.f32 %v2269, %v2322
    %v2324 = vpop.f32.mrb[0].mxu0
    %v2325 = vpop.f32.mrb[0].mxu0
    %v2326 = vadd.f32 %v2269, %v2325
    %v2327 = vpop.f32.mrb[0].mxu0
    %2328 = vmatprep.mubr.bf16.mxu0 0
    %2329 = vmatmul.mubr.bf16.gmra.mrb[0].mxu0 %v2286
    %v2330 = vpop.f32.mrb[0].mxu0
    %v2331 = vadd.f32 %v2269, %v2330
    %v2332 = vpop.f32.mrb[0].mxu0
    %v2333 = vpop.f32.mrb[0].mxu0
    %v2334 = vadd.f32 %v2269, %v2333
    %v2335 = vpop.f32.mrb[0].mxu0
    %2336 = vdwg.mxu0
    %v2337 = vxor.u32 %v2323, 2147483648
    %v2338 = vxor.u32 %v2326, 2147483648
    %v2339 = vxor.u32 %v2331, 2147483648
    %v2340 = vxor.u32 %v2334, 2147483648
    %v2341 = vmul.f32 %v2337, 1.442695
    %v2342 = vpow.pop %v2341
    %v2343 = vmul.f32 %v2338, 1.442695
    %v2344 = vpow.pop %v2343
    %v2345 = vmul.f32 %v2339, 1.442695
    %v2346 = vpow.pop %v2345
    %v2347 = vmul.f32 %v2340, 1.442695
    %v2348 = vpow.pop %v2347
    %v2349 = vadd.f32 %v2342, 1.0
    %v2350 = vadd.f32 %v2344, 1.0
    %v2351 = vadd.f32 %v2346, 1.0
    %v2352 = vadd.f32 %v2348, 1.0
    %v2353 = vrcp.pop %v2349
    %v2354 = vmul.f32 1.0, %v2353
    %v2355 = vrcp.pop %v2350
    %v2356 = vmul.f32 1.0, %v2355
    %v2357 = vrcp.pop %v2351
    %v2358 = vmul.f32 1.0, %v2357
    %v2359 = vrcp.pop %v2352
    %v2360 = vmul.f32 1.0, %v2359
    %v2361 = vmul.f32 %v2323, %v2354
    %v2362 = vmul.f32 %v2326, %v2356
    %v2363 = vmul.f32 %v2331, %v2358
    %v2364 = vmul.f32 %v2334, %v2360
    %v2365 = vpack.c.bf16 %v2362, %v2361
    %v2366 = vpack.c.bf16 %v2364, %v2363
    %v2367 = vlaneseq
    %v2368 = vshrl.u32 %v2367, 7
    %v2369 = vsub.s32 0, %v2368
    %v2370 = vrot.slane %v57, %v2369
    %v2387 = vunpack.c.l.b16 %v2180
    %v2388 = vunpack.c.l.b16 %v2181
    %v2389 = vunpack.c.l.b16 %v2182
    %v2390 = vunpack.c.l.b16 %v2183
    %v2391 = vunpack.c.l.b16 %v2184
    %v2392 = vunpack.c.l.b16 %v2185
    %v2393 = vunpack.c.l.b16 %v2186
    %v2394 = vunpack.c.l.b16 %v2187
    %v2395 = vunpack.c.l.b16 %v2188
    %v2396 = vunpack.c.l.b16 %v2189
    %v2397 = vunpack.c.l.b16 %v2190
    %v2398 = vunpack.c.l.b16 %v2191
    %v2399 = vunpack.c.l.b16 %v2192
    %v2400 = vunpack.c.l.b16 %v2193
    %v2401 = vunpack.c.l.b16 %v2194
    %v2402 = vunpack.c.l.b16 %v2195
    %v2403 = vpack.c.b16 %v2388, %v2387
    %v2404 = vpack.c.b16 %v2390, %v2389
    %v2405 = vpack.c.b16 %v2392, %v2391
    %v2406 = vpack.c.b16 %v2394, %v2393
    %v2407 = vpack.c.b16 %v2396, %v2395
    %v2408 = vpack.c.b16 %v2398, %v2397
    %v2409 = vpack.c.b16 %v2400, %v2399
    %v2410 = vpack.c.b16 %v2402, %v2401
    %2419 = vmatprep.subr.bf16.mxu0 0
    %2420 = vmatpush1.bf16.msra.mxu0 %v2403
    %2421 = vmatprep.subr.bf16.mxu0 0
    %2422 = vmatpush1.bf16.msra.mxu0 %v2404
    %2423 = vmatprep.subr.bf16.mxu0 0
    %2424 = vmatpush1.bf16.msra.mxu0 %v2405
    %2425 = vmatprep.subr.bf16.mxu0 0
    %2426 = vmatpush1.bf16.msra.mxu0 %v2406
    %2427 = vmatprep.subr.bf16.mxu0 0
    %2428 = vmatpush1.bf16.msra.mxu0 %v2407
    %2429 = vmatprep.subr.bf16.mxu0 0
    %2430 = vmatpush1.bf16.msra.mxu0 %v2408
    %2431 = vmatprep.subr.bf16.mxu0 0
    %2432 = vmatpush1.bf16.msra.mxu0 %v2409
    %2433 = vmatprep.subr.bf16.mxu0 0
    %2434 = vmatpush1.bf16.msra.mxu0 %v2410
    %2435 = vmatprep.subr.bf16.mxu0 0
    %2436 = vmatpush1.bf16.msra.mxu0 0
    %2437 = vmatprep.subr.bf16.mxu0 0
    %2438 = vmatpush1.bf16.msra.mxu0 0
    %2439 = vmatprep.subr.bf16.mxu0 0
    %2440 = vmatpush1.bf16.msra.mxu0 0
    %2441 = vmatprep.subr.bf16.mxu0 0
    %2442 = vmatpush1.bf16.msra.mxu0 0
    %2443 = vmatprep.subr.bf16.mxu0 0
    %2444 = vmatpush1.bf16.msra.mxu0 0
    %2445 = vmatprep.subr.bf16.mxu0 0
    %2446 = vmatpush1.bf16.msra.mxu0 0
    %2447 = vmatprep.subr.bf16.mxu0 0
    %2448 = vmatpush1.bf16.msra.mxu0 0
    %2449 = vmatprep.subr.bf16.mxu0 0
    %2450 = vmatpush1.bf16.msra.mxu0 0
    %2451 = vmatprep.mubr.bf16.mxu0 0
    %2452 = vmatmul.mubr.bf16.gmra.mrb[0].mxu0 %v2365
    %v2453 = vpop.f32.mrb[0].mxu0
    %v2454 = vadd.f32 %v2370, %v2453
    %v2455 = vpop.f32.mrb[0].mxu0
    %v2456 = vpop.f32.mrb[0].mxu0
    %v2457 = vadd.f32 %v2370, %v2456
    %v2458 = vpop.f32.mrb[0].mxu0
    %2459 = vmatprep.mubr.bf16.mxu0 0
    %2460 = vmatmul.mubr.bf16.gmra.mrb[0].mxu0 %v2366
    %v2461 = vpop.f32.mrb[0].mxu0
    %v2462 = vadd.f32 %v2370, %v2461
    %v2463 = vpop.f32.mrb[0].mxu0
    %v2464 = vpop.f32.mrb[0].mxu0
    %v2465 = vadd.f32 %v2370, %v2464
    %v2466 = vpop.f32.mrb[0].mxu0
    %2467 = vdwg.mxu0
    %v2468 = vmul.f32 %v2454, 0.5
    %v2469 = vmul.f32 %v2457, 0.5
    %v2470 = vmul.f32 %v2462, 0.5
    %v2471 = vmul.f32 %v2465, 0.5
    %v2472 = vadd.f32 %v2172, %v2468
    %v2473 = vadd.f32 %v2173, %v2469
    %v2474 = vadd.f32 %v2174, %v2470
    %v2475 = vadd.f32 %v2175, %v2471
    %v2476 = vsel %vm83, %v2472, 0.0
    %2477 = vadd.xlane.f32.xlu0 %v2476
    %v2478 = vpop.xlane.xlu0 %2477
    %v2479 = vsel %vm83, %v2473, 0.0
    %2480 = vadd.xlane.f32.xlu0 %v2479
    %v2481 = vpop.xlane.xlu0 %2480
    %v2482 = vsel %vm83, %v2474, 0.0
    %2483 = vadd.xlane.f32.xlu0 %v2482
    %v2484 = vpop.xlane.xlu0 %2483
    %v2485 = vsel %vm83, %v2475, 0.0
    %2486 = vadd.xlane.f32.xlu0 %v2485
    %v2487 = vpop.xlane.xlu0 %2486
    %v2488 = vmul.f32 %v2478, %v96
    %v2489 = vmul.f32 %v2481, %v96
    %v2490 = vmul.f32 %v2484, %v96
    %v2491 = vmul.f32 %v2487, %v96
    %v2492 = vsub.f32 %v2472, %v2488
    %v2493 = vsub.f32 %v2473, %v2489
    %v2494 = vsub.f32 %v2474, %v2490
    %v2495 = vsub.f32 %v2475, %v2491
    %v2496 = vmul.f32 %v2492, %v2492
    %v2497 = vmul.f32 %v2493, %v2493
    %v2498 = vmul.f32 %v2494, %v2494
    %v2499 = vmul.f32 %v2495, %v2495
    %v2500 = vsel %vm83, %v2496, 0.0
    %2501 = vadd.xlane.f32.xlu0 %v2500
    %v2502 = vpop.xlane.xlu0 %2501
    %v2503 = vsel %vm83, %v2497, 0.0
    %2504 = vadd.xlane.f32.xlu0 %v2503
    %v2505 = vpop.xlane.xlu0 %2504
    %v2506 = vsel %vm83, %v2498, 0.0
    %2507 = vadd.xlane.f32.xlu0 %v2506
    %v2508 = vpop.xlane.xlu0 %2507
    %v2509 = vsel %vm83, %v2499, 0.0
    %2510 = vadd.xlane.f32.xlu0 %v2509
    %v2511 = vpop.xlane.xlu0 %2510
    %v2512 = vmul.f32 %v2502, %v96
    %v2513 = vmul.f32 %v2505, %v96
    %v2514 = vmul.f32 %v2508, %v96
    %v2515 = vmul.f32 %v2511, %v96
    %v2516 = vadd.f32 %v2512, 1e-05
    %v2517 = vadd.f32 %v2513, 1e-05
    %v2518 = vadd.f32 %v2514, 1e-05
    %v2519 = vadd.f32 %v2515, 1e-05
    %v2520 = vrsqrt.pop %v2516
    %v2521 = vrsqrt.pop %v2517
    %v2522 = vrsqrt.pop %v2518
    %v2523 = vrsqrt.pop %v2519
    %v2524 = vmul.f32 %v2492, %v2520
    %v2525 = vmul.f32 %v2493, %v2521
    %v2526 = vmul.f32 %v2494, %v2522
    %v2527 = vmul.f32 %v2495, %v2523
    %v2528 = vlaneseq
    %v2529 = vshrl.u32 %v2528, 7
    %v2530 = vsub.s32 1, %v2529
    %v2531 = vrot.slane %v57, %v2530
    %v2532 = vmul.f32 %v2524, %v2531
    %v2533 = vmul.f32 %v2525, %v2531
    %v2534 = vmul.f32 %v2526, %v2531
    %v2535 = vmul.f32 %v2527, %v2531
    %v2536 = vlaneseq
    %v2537 = vshrl.u32 %v2536, 7
    %v2538 = vsub.s32 2, %v2537
    %v2539 = vrot.slane %v57, %v2538
    %v2540 = vadd.f32 %v2532, %v2539
    %v2541 = vadd.f32 %v2533, %v2539
    %v2542 = vadd.f32 %v2534, %v2539
    %v2543 = vadd.f32 %v2535, %v2539
    %2544 = vst.msk [vmem:[#allocation5] sm:$0xff] %vm83, %v2540
    %2545 = vst.msk [vmem:[#allocation5 + $0x8] sm:$0xff] %vm83, %v2541
    %2546 = vst.msk [vmem:[#allocation5 + $0x10] sm:$0xff] %vm83, %v2542
    %2547 = vst.msk [vmem:[#allocation5 + $0x18] sm:$0xff] %vm83, %v2543
    // Predicated region
    $region50: #{tpu_custom_call.1} parent=1 // pred_check
      _
    $region51: #{tpu_custom_call.1} parent=1 // pred_check_branch
      %2549 = sbr.rel (0) target = $region53
    $region52: #{tpu_custom_call.1} parent=1 // pred_region
      %s2551 = ssub.s32 512, 512
      %2552 = vsyncadd [#allocation4], %s2551
      %s2553 = sshll.u32 [#allocation5], 4
      %s2554 = int_to_ptr.vmem [resolvable:$true] %s2553
      %2559 = dma.vmem_to_hbm [thread:$0]  %s2554, 512, %s11, [#allocation4], 128, 128, 8
    $region53: #{tpu_custom_call.1} parent=1 // pred_fallthru
      _
    // Predicated region
    $region54: #{tpu_custom_call.1} parent=1 // pred_check
      _
    $region55: #{tpu_custom_call.1} parent=1 // pred_check_branch
      %2561 = sbr.rel (0) target = $region57
    $region56: #{tpu_custom_call.1} parent=1 // pred_region
      %s2563 = ssub.s32 1024, 1024
      %2564 = vsyncadd [#allocation7], %s2563
      %s2565 = sshll.u32 [#allocation6], 4
      %s2566 = int_to_ptr.vmem [resolvable:$true] %s2565
      %2571 = dma.vmem_to_hbm [thread:$0]  %s2566, 1024, %s12, [#allocation7], 64, 64, 4
    $region57: #{tpu_custom_call.1} parent=1 // pred_fallthru
      _
    // Predicated region
    $region58: #{tpu_custom_call.1} parent=1 // pred_check
      _
    $region59: #{tpu_custom_call.1} parent=1 // pred_check_branch
      %2573 = sbr.rel (0) target = $region61
    $region60: #{tpu_custom_call.1} parent=1 // pred_region
      %2574 = dma.done [#allocation4], 512
    $region61: #{tpu_custom_call.1} parent=1 // pred_fallthru
      _
    // Predicated region
    $region62: #{tpu_custom_call.1} parent=1 // pred_check
      _
    $region63: #{tpu_custom_call.1} parent=1 // pred_check_branch
      %2576 = sbr.rel (0) target = $region65
    $region64: #{tpu_custom_call.1} parent=1 // pred_region
      %2577 = dma.done [#allocation7], 1024
    $region65: #{tpu_custom_call.1} parent=1 // pred_fallthru
      _
    %2578 = vsyncpa [#allocation3], 1
    %2579 = vsyncpa [#allocation4], 1
    %2580 = vsyncpa [#allocation7], 1

</llo_original>
